<compile_context>
chip_gen: v7x
topology: tpu7x:2x2x1
jax: 0.10.0
libtpu: 0.0.40
codegen_flags: <defaults>
</compile_context>

<pallas_src>
import functools

import jax
import jax.numpy as jnp
from jax.experimental import pallas as pl
from jax.experimental.pallas import tpu as pltpu  # noqa: F401  (TPU backend)


BN_EPS = 0.8   # nn.BatchNorm1d(out_feat, 0.8) -> eps=0.8 (positional)
PAD = 256      # uniform padded feature width (largest real feature dim is 130)
VROWS = 8      # sublane-padded rows per layer in the vector slab (bias/gamma/beta)


# ----------------------------------------------------------------------------
# Fused kernel: whole network in one pallas_call
# ----------------------------------------------------------------------------
def _fused_ae_kernel(x_ref, w_ref, v_ref, o_ref, *, layer_specs, b_actual, eps):
    """x_ref: (Bp, PAD); w_ref: (L, PAD, PAD); v_ref: (L, VROWS, PAD); o_ref: (Bp, PAD).

    layer_specs: tuple of (act, has_bn) with act in {"lrelu", "tanh"}.
    Vector slab rows per layer: 0 = bias, 1 = gamma, 2 = beta (unused rows are 0).
    """
    h = x_ref[...]
    b_pad = h.shape[0]
    need_mask = b_pad != b_actual
    if need_mask:
        # mask padded batch rows out of the BN statistics
        row_ids = jax.lax.broadcasted_iota(jnp.int32, (b_pad, 1), 0)
        row_mask = (row_ids < b_actual).astype(jnp.float32)
        inv_b = jnp.float32(1.0 / b_actual)

    for l, (act, has_bn) in enumerate(layer_specs):
        w = w_ref[l]            # (PAD, PAD), static slab index
        vl = v_ref[l]           # (VROWS, PAD)
        bias = vl[0:1, :]       # (1, PAD)

        y = jnp.dot(h, w, preferred_element_type=jnp.float32) + bias

        if has_bn:
            g = vl[1:2, :]
            beta = vl[2:3, :]
            if need_mask:
                mean = jnp.sum(y * row_mask, axis=0, keepdims=True) * inv_b
                meansq = jnp.sum((y * y) * row_mask, axis=0, keepdims=True) * inv_b
            else:
                mean = jnp.mean(y, axis=0, keepdims=True)
                meansq = jnp.mean(y * y, axis=0, keepdims=True)
            var = meansq - mean * mean          # biased batch variance
            scale = g * jax.lax.rsqrt(var + eps)
            shift = beta - mean * scale
            y = y * scale + shift

        if act == "lrelu":
            y = jnp.where(y > 0, y, 0.2 * y)
        else:  # "tanh"
            y = jnp.tanh(y)
        h = y

    o_ref[...] = h.astype(o_ref.dtype)


def _full_spec(shape):
    # Whole array is one block (full-extent dims are always legal).
    return pl.BlockSpec(shape, lambda: tuple(0 for _ in shape))


def _round_up(n, m):
    return ((n + m - 1) // m) * m


def autoencoder_forward(layer_specs, w_stack, v_stack, x, out_dim):
    """Run the fused autoencoder kernel. Returns [B, out_dim]."""
    B, d_in = x.shape
    b_pad = _round_up(B, 8)

    x_pad = jnp.zeros((b_pad, PAD), jnp.float32)
    x_pad = x_pad.at[:B, :d_in].set(x.astype(jnp.float32))

    kernel = functools.partial(
        _fused_ae_kernel, layer_specs=layer_specs, b_actual=B, eps=BN_EPS
    )
    out = pl.pallas_call(
        kernel,
        out_shape=jax.ShapeDtypeStruct((b_pad, PAD), jnp.float32),
        grid=(),
        in_specs=[
            _full_spec(x_pad.shape),
            _full_spec(w_stack.shape),
            _full_spec(v_stack.shape),
        ],
        out_specs=_full_spec((b_pad, PAD)),
        compiler_params=pltpu.CompilerParams(vmem_limit_bytes=64 << 20),
    )(x_pad, w_stack, v_stack)
    return out[:B, :out_dim]


# ----------------------------------------------------------------------------
# Parameter setup (deterministic, PyTorch-style uniform init for Linear)
# ----------------------------------------------------------------------------
def _init_linear(key, d_in, d_out):
    kw, kb = jax.random.split(key)
    bound = 1.0 / jnp.sqrt(jnp.float32(d_in))
    # stored pre-transposed: [d_in, d_out]
    w = jax.random.uniform(kw, (d_in, d_out), jnp.float32, -bound, bound)
    b = jax.random.uniform(kb, (1, d_out), jnp.float32, -bound, bound)
    return w, b


def build_autoencoder_params(key, input_dim=20, hidden_dim=10):
    enc_dims = [input_dim, 130, 120, 110, 100, 90, 80, 70, hidden_dim]
    dec_dims = [hidden_dim, 70, 80, 90, 100, 110, 120, 130, input_dim]

    params = {"encoder": [], "decoder": []}
    keys = jax.random.split(key, len(enc_dims) - 1 + len(dec_dims) - 1)
    ki = 0
    for i in range(len(enc_dims) - 1):
        params["encoder"].append(_init_linear(keys[ki], enc_dims[i], enc_dims[i + 1]))
        ki += 1
    for i in range(len(dec_dims) - 1):
        w, b = _init_linear(keys[ki], dec_dims[i], dec_dims[i + 1])
        ki += 1
        d_out = dec_dims[i + 1]
        gamma = jnp.ones((1, d_out), jnp.float32)
        beta = jnp.zeros((1, d_out), jnp.float32)
        params["decoder"].append((w, b, gamma, beta))
    return params


def stack_and_pad(params):
    """Build (layer_specs, weight slab (L,PAD,PAD), vector slab (L,VROWS,PAD))
    in nn.Sequential order. Padding is zero everywhere (gamma pad = 0 too)."""
    layers = []  # (act, has_bn, w, b, gamma_or_None, beta_or_None)

    enc = params["encoder"]
    for (w, b) in enc[:-1]:
        layers.append(("lrelu", False, w, b, None, None))
    w, b = enc[-1]
    layers.append(("tanh", False, w, b, None, None))

    dec = params["decoder"]
    w, b, _, _ = dec[0]                      # block(hidden, 70, normalize=False)
    layers.append(("lrelu", False, w, b, None, None))
    for (w, b, g, bt) in dec[1:-1]:          # 6x block(..., normalize=True)
        layers.append(("lrelu", True, w, b, g, bt))
    w, b, _, _ = dec[-1]                     # final Linear(130, input_dim) + Tanh
    layers.append(("tanh", False, w, b, None, None))

    L = len(layers)
    w_stack = jnp.zeros((L, PAD, PAD), jnp.float32)
    v_stack = jnp.zeros((L, VROWS, PAD), jnp.float32)
    specs = []
    for l, (act, has_bn, w, b, g, bt) in enumerate(layers):
        d_in, d_out = w.shape
        w_stack = w_stack.at[l, :d_in, :d_out].set(w)
        v_stack = v_stack.at[l, 0, :d_out].set(b[0])
        if has_bn:
            v_stack = v_stack.at[l, 1, :d_out].set(g[0])
            v_stack = v_stack.at[l, 2, :d_out].set(bt[0])
        specs.append((act, has_bn))
    return tuple(specs), w_stack, v_stack


# ----------------------------------------------------------------------------
# Pure-JAX reference for verification (unpadded, PyTorch training-mode BN)
# ----------------------------------------------------------------------------
def reference_forward(params, x):
    def lrelu(v):
        return jnp.where(v > 0, v, 0.2 * v)

    h = x
    enc = params["encoder"]
    for (w, b) in enc[:-1]:
        h = lrelu(h @ w + b)
    w, b = enc[-1]
    h = jnp.tanh(h @ w + b)

    dec = params["decoder"]
    w, b, _, _ = dec[0]
    h = lrelu(h @ w + b)
    for (w, b, g, bt) in dec[1:-1]:
        y = h @ w + b
        mean = jnp.mean(y, axis=0, keepdims=True)
        var = jnp.mean((y - mean) ** 2, axis=0, keepdims=True)
        y = (y - mean) / jnp.sqrt(var + BN_EPS) * g + bt
        h = lrelu(y)
    w, b, _, _ = dec[-1]
    return jnp.tanh(h @ w + b)


if __name__ == "__main__":
    key = jax.random.PRNGKey(0)
    kp, kx = jax.random.split(key)

    batch, input_dim, hidden_dim = 8, 20, 10
    params = build_autoencoder_params(kp, input_dim=input_dim, hidden_dim=hidden_dim)
    layer_specs, w_stack, v_stack = stack_and_pad(params)

    x = jax.random.normal(kx, (batch, input_dim), jnp.float32)

    out = autoencoder_forward(layer_specs, w_stack, v_stack, x, out_dim=input_dim)
    out = jax.block_until_ready(out)

    ref = reference_forward(params, x)
    assert out.shape == (batch, input_dim), out.shape
    assert jnp.allclose(out, ref, atol=1e-3, rtol=1e-3), float(
        jnp.max(jnp.abs(out - ref))
    )
    print("KERNEL_OK")
</pallas_src>

<mosaic_0001>
module attributes {stable_mosaic.version = 11 : i64} {
  func.func @_fused_ae_kernel(%arg0: memref<8x256xf32, #tpu.memory_space<vmem>>, %arg1: memref<16x256x256xf32, #tpu.memory_space<vmem>>, %arg2: memref<16x8x256xf32, #tpu.memory_space<vmem>>, %arg3: memref<8x256xf32, #tpu.memory_space<vmem>>) attributes {dimension_semantics = [], scalar_prefetch = 0 : i64, scratch_operands = 0 : i64, tpu.core_type = #tpu.core_type<tc>} {
    %c0 = arith.constant 0 : index
    %c0_0 = arith.constant 0 : index
    %0 = vector.load %arg0[%c0, %c0_0] : memref<8x256xf32, #tpu.memory_space<vmem>>, vector<8x256xf32>
    %c0_1 = arith.constant 0 : index
    %c0_2 = arith.constant 0 : index
    %c0_3 = arith.constant 0 : index
    %1 = vector.load %arg1[%c0_1, %c0_2, %c0_3] : memref<16x256x256xf32, #tpu.memory_space<vmem>>, vector<1x256x256xf32>
    %2 = vector.shape_cast %1 : vector<1x256x256xf32> to vector<256x256xf32>
    %c0_4 = arith.constant 0 : index
    %c0_5 = arith.constant 0 : index
    %c0_6 = arith.constant 0 : index
    %3 = vector.load %arg2[%c0_4, %c0_5, %c0_6] : memref<16x8x256xf32, #tpu.memory_space<vmem>>, vector<1x8x256xf32>
    %4 = vector.shape_cast %3 : vector<1x8x256xf32> to vector<8x256xf32>
    %5 = vector.extract_strided_slice %4 {offsets = [0, 0], sizes = [1, 256], strides = [1, 1]} : vector<8x256xf32> to vector<1x256xf32>
    %cst = arith.constant dense<0.000000e+00> : vector<8x256xf32>
    %6 = tpu.matmul %0, %2, %cst {dimension_numbers = #tpu.dot_dimension_numbers<[1], [0], [0], [1], [0, 0, 1, 1], [], []>} : vector<8x256xf32>, vector<256x256xf32>, vector<8x256xf32> -> vector<8x256xf32>
    %7 = vector.broadcast %5 : vector<1x256xf32> to vector<8x256xf32>
    %8 = arith.addf %6, %7 : vector<8x256xf32>
    %cst_7 = arith.constant 0.000000e+00 : f32
    %9 = vector.broadcast %cst_7 : f32 to vector<8x256xf32>
    %10 = arith.cmpf ogt, %8, %9 : vector<8x256xf32>
    %cst_8 = arith.constant 2.000000e-01 : f32
    %11 = vector.broadcast %cst_8 : f32 to vector<8x256xf32>
    %12 = arith.mulf %11, %8 : vector<8x256xf32>
    %13 = arith.select %10, %8, %12 : vector<8x256xi1>, vector<8x256xf32>
    %c1 = arith.constant 1 : index
    %c0_9 = arith.constant 0 : index
    %c0_10 = arith.constant 0 : index
    %14 = vector.load %arg1[%c1, %c0_9, %c0_10] : memref<16x256x256xf32, #tpu.memory_space<vmem>>, vector<1x256x256xf32>
    %15 = vector.shape_cast %14 : vector<1x256x256xf32> to vector<256x256xf32>
    %c1_11 = arith.constant 1 : index
    %c0_12 = arith.constant 0 : index
    %c0_13 = arith.constant 0 : index
    %16 = vector.load %arg2[%c1_11, %c0_12, %c0_13] : memref<16x8x256xf32, #tpu.memory_space<vmem>>, vector<1x8x256xf32>
    %17 = vector.shape_cast %16 : vector<1x8x256xf32> to vector<8x256xf32>
    %18 = vector.extract_strided_slice %17 {offsets = [0, 0], sizes = [1, 256], strides = [1, 1]} : vector<8x256xf32> to vector<1x256xf32>
    %cst_14 = arith.constant dense<0.000000e+00> : vector<8x256xf32>
    %19 = tpu.matmul %13, %15, %cst_14 {dimension_numbers = #tpu.dot_dimension_numbers<[1], [0], [0], [1], [0, 0, 1, 1], [], []>} : vector<8x256xf32>, vector<256x256xf32>, vector<8x256xf32> -> vector<8x256xf32>
    %20 = vector.broadcast %18 : vector<1x256xf32> to vector<8x256xf32>
    %21 = arith.addf %19, %20 : vector<8x256xf32>
    %cst_15 = arith.constant 0.000000e+00 : f32
    %22 = vector.broadcast %cst_15 : f32 to vector<8x256xf32>
    %23 = arith.cmpf ogt, %21, %22 : vector<8x256xf32>
    %cst_16 = arith.constant 2.000000e-01 : f32
    %24 = vector.broadcast %cst_16 : f32 to vector<8x256xf32>
    %25 = arith.mulf %24, %21 : vector<8x256xf32>
    %26 = arith.select %23, %21, %25 : vector<8x256xi1>, vector<8x256xf32>
    %c2 = arith.constant 2 : index
    %c0_17 = arith.constant 0 : index
    %c0_18 = arith.constant 0 : index
    %27 = vector.load %arg1[%c2, %c0_17, %c0_18] : memref<16x256x256xf32, #tpu.memory_space<vmem>>, vector<1x256x256xf32>
    %28 = vector.shape_cast %27 : vector<1x256x256xf32> to vector<256x256xf32>
    %c2_19 = arith.constant 2 : index
    %c0_20 = arith.constant 0 : index
    %c0_21 = arith.constant 0 : index
    %29 = vector.load %arg2[%c2_19, %c0_20, %c0_21] : memref<16x8x256xf32, #tpu.memory_space<vmem>>, vector<1x8x256xf32>
    %30 = vector.shape_cast %29 : vector<1x8x256xf32> to vector<8x256xf32>
    %31 = vector.extract_strided_slice %30 {offsets = [0, 0], sizes = [1, 256], strides = [1, 1]} : vector<8x256xf32> to vector<1x256xf32>
    %cst_22 = arith.constant dense<0.000000e+00> : vector<8x256xf32>
    %32 = tpu.matmul %26, %28, %cst_22 {dimension_numbers = #tpu.dot_dimension_numbers<[1], [0], [0], [1], [0, 0, 1, 1], [], []>} : vector<8x256xf32>, vector<256x256xf32>, vector<8x256xf32> -> vector<8x256xf32>
    %33 = vector.broadcast %31 : vector<1x256xf32> to vector<8x256xf32>
    %34 = arith.addf %32, %33 : vector<8x256xf32>
    %cst_23 = arith.constant 0.000000e+00 : f32
    %35 = vector.broadcast %cst_23 : f32 to vector<8x256xf32>
    %36 = arith.cmpf ogt, %34, %35 : vector<8x256xf32>
    %cst_24 = arith.constant 2.000000e-01 : f32
    %37 = vector.broadcast %cst_24 : f32 to vector<8x256xf32>
    %38 = arith.mulf %37, %34 : vector<8x256xf32>
    %39 = arith.select %36, %34, %38 : vector<8x256xi1>, vector<8x256xf32>
    %c3 = arith.constant 3 : index
    %c0_25 = arith.constant 0 : index
    %c0_26 = arith.constant 0 : index
    %40 = vector.load %arg1[%c3, %c0_25, %c0_26] : memref<16x256x256xf32, #tpu.memory_space<vmem>>, vector<1x256x256xf32>
    %41 = vector.shape_cast %40 : vector<1x256x256xf32> to vector<256x256xf32>
    %c3_27 = arith.constant 3 : index
    %c0_28 = arith.constant 0 : index
    %c0_29 = arith.constant 0 : index
    %42 = vector.load %arg2[%c3_27, %c0_28, %c0_29] : memref<16x8x256xf32, #tpu.memory_space<vmem>>, vector<1x8x256xf32>
    %43 = vector.shape_cast %42 : vector<1x8x256xf32> to vector<8x256xf32>
    %44 = vector.extract_strided_slice %43 {offsets = [0, 0], sizes = [1, 256], strides = [1, 1]} : vector<8x256xf32> to vector<1x256xf32>
    %cst_30 = arith.constant dense<0.000000e+00> : vector<8x256xf32>
    %45 = tpu.matmul %39, %41, %cst_30 {dimension_numbers = #tpu.dot_dimension_numbers<[1], [0], [0], [1], [0, 0, 1, 1], [], []>} : vector<8x256xf32>, vector<256x256xf32>, vector<8x256xf32> -> vector<8x256xf32>
    %46 = vector.broadcast %44 : vector<1x256xf32> to vector<8x256xf32>
    %47 = arith.addf %45, %46 : vector<8x256xf32>
    %cst_31 = arith.constant 0.000000e+00 : f32
    %48 = vector.broadcast %cst_31 : f32 to vector<8x256xf32>
    %49 = arith.cmpf ogt, %47, %48 : vector<8x256xf32>
    %cst_32 = arith.constant 2.000000e-01 : f32
    %50 = vector.broadcast %cst_32 : f32 to vector<8x256xf32>
    %51 = arith.mulf %50, %47 : vector<8x256xf32>
    %52 = arith.select %49, %47, %51 : vector<8x256xi1>, vector<8x256xf32>
    %c4 = arith.constant 4 : index
    %c0_33 = arith.constant 0 : index
    %c0_34 = arith.constant 0 : index
    %53 = vector.load %arg1[%c4, %c0_33, %c0_34] : memref<16x256x256xf32, #tpu.memory_space<vmem>>, vector<1x256x256xf32>
    %54 = vector.shape_cast %53 : vector<1x256x256xf32> to vector<256x256xf32>
    %c4_35 = arith.constant 4 : index
    %c0_36 = arith.constant 0 : index
    %c0_37 = arith.constant 0 : index
    %55 = vector.load %arg2[%c4_35, %c0_36, %c0_37] : memref<16x8x256xf32, #tpu.memory_space<vmem>>, vector<1x8x256xf32>
    %56 = vector.shape_cast %55 : vector<1x8x256xf32> to vector<8x256xf32>
    %57 = vector.extract_strided_slice %56 {offsets = [0, 0], sizes = [1, 256], strides = [1, 1]} : vector<8x256xf32> to vector<1x256xf32>
    %cst_38 = arith.constant dense<0.000000e+00> : vector<8x256xf32>
    %58 = tpu.matmul %52, %54, %cst_38 {dimension_numbers = #tpu.dot_dimension_numbers<[1], [0], [0], [1], [0, 0, 1, 1], [], []>} : vector<8x256xf32>, vector<256x256xf32>, vector<8x256xf32> -> vector<8x256xf32>
    %59 = vector.broadcast %57 : vector<1x256xf32> to vector<8x256xf32>
    %60 = arith.addf %58, %59 : vector<8x256xf32>
    %cst_39 = arith.constant 0.000000e+00 : f32
    %61 = vector.broadcast %cst_39 : f32 to vector<8x256xf32>
    %62 = arith.cmpf ogt, %60, %61 : vector<8x256xf32>
    %cst_40 = arith.constant 2.000000e-01 : f32
    %63 = vector.broadcast %cst_40 : f32 to vector<8x256xf32>
    %64 = arith.mulf %63, %60 : vector<8x256xf32>
    %65 = arith.select %62, %60, %64 : vector<8x256xi1>, vector<8x256xf32>
    %c5 = arith.constant 5 : index
    %c0_41 = arith.constant 0 : index
    %c0_42 = arith.constant 0 : index
    %66 = vector.load %arg1[%c5, %c0_41, %c0_42] : memref<16x256x256xf32, #tpu.memory_space<vmem>>, vector<1x256x256xf32>
    %67 = vector.shape_cast %66 : vector<1x256x256xf32> to vector<256x256xf32>
    %c5_43 = arith.constant 5 : index
    %c0_44 = arith.constant 0 : index
    %c0_45 = arith.constant 0 : index
    %68 = vector.load %arg2[%c5_43, %c0_44, %c0_45] : memref<16x8x256xf32, #tpu.memory_space<vmem>>, vector<1x8x256xf32>
    %69 = vector.shape_cast %68 : vector<1x8x256xf32> to vector<8x256xf32>
    %70 = vector.extract_strided_slice %69 {offsets = [0, 0], sizes = [1, 256], strides = [1, 1]} : vector<8x256xf32> to vector<1x256xf32>
    %cst_46 = arith.constant dense<0.000000e+00> : vector<8x256xf32>
    %71 = tpu.matmul %65, %67, %cst_46 {dimension_numbers = #tpu.dot_dimension_numbers<[1], [0], [0], [1], [0, 0, 1, 1], [], []>} : vector<8x256xf32>, vector<256x256xf32>, vector<8x256xf32> -> vector<8x256xf32>
    %72 = vector.broadcast %70 : vector<1x256xf32> to vector<8x256xf32>
    %73 = arith.addf %71, %72 : vector<8x256xf32>
    %cst_47 = arith.constant 0.000000e+00 : f32
    %74 = vector.broadcast %cst_47 : f32 to vector<8x256xf32>
    %75 = arith.cmpf ogt, %73, %74 : vector<8x256xf32>
    %cst_48 = arith.constant 2.000000e-01 : f32
    %76 = vector.broadcast %cst_48 : f32 to vector<8x256xf32>
    %77 = arith.mulf %76, %73 : vector<8x256xf32>
    %78 = arith.select %75, %73, %77 : vector<8x256xi1>, vector<8x256xf32>
    %c6 = arith.constant 6 : index
    %c0_49 = arith.constant 0 : index
    %c0_50 = arith.constant 0 : index
    %79 = vector.load %arg1[%c6, %c0_49, %c0_50] : memref<16x256x256xf32, #tpu.memory_space<vmem>>, vector<1x256x256xf32>
    %80 = vector.shape_cast %79 : vector<1x256x256xf32> to vector<256x256xf32>
    %c6_51 = arith.constant 6 : index
    %c0_52 = arith.constant 0 : index
    %c0_53 = arith.constant 0 : index
    %81 = vector.load %arg2[%c6_51, %c0_52, %c0_53] : memref<16x8x256xf32, #tpu.memory_space<vmem>>, vector<1x8x256xf32>
    %82 = vector.shape_cast %81 : vector<1x8x256xf32> to vector<8x256xf32>
    %83 = vector.extract_strided_slice %82 {offsets = [0, 0], sizes = [1, 256], strides = [1, 1]} : vector<8x256xf32> to vector<1x256xf32>
    %cst_54 = arith.constant dense<0.000000e+00> : vector<8x256xf32>
    %84 = tpu.matmul %78, %80, %cst_54 {dimension_numbers = #tpu.dot_dimension_numbers<[1], [0], [0], [1], [0, 0, 1, 1], [], []>} : vector<8x256xf32>, vector<256x256xf32>, vector<8x256xf32> -> vector<8x256xf32>
    %85 = vector.broadcast %83 : vector<1x256xf32> to vector<8x256xf32>
    %86 = arith.addf %84, %85 : vector<8x256xf32>
    %cst_55 = arith.constant 0.000000e+00 : f32
    %87 = vector.broadcast %cst_55 : f32 to vector<8x256xf32>
    %88 = arith.cmpf ogt, %86, %87 : vector<8x256xf32>
    %cst_56 = arith.constant 2.000000e-01 : f32
    %89 = vector.broadcast %cst_56 : f32 to vector<8x256xf32>
    %90 = arith.mulf %89, %86 : vector<8x256xf32>
    %91 = arith.select %88, %86, %90 : vector<8x256xi1>, vector<8x256xf32>
    %c7 = arith.constant 7 : index
    %c0_57 = arith.constant 0 : index
    %c0_58 = arith.constant 0 : index
    %92 = vector.load %arg1[%c7, %c0_57, %c0_58] : memref<16x256x256xf32, #tpu.memory_space<vmem>>, vector<1x256x256xf32>
    %93 = vector.shape_cast %92 : vector<1x256x256xf32> to vector<256x256xf32>
    %c7_59 = arith.constant 7 : index
    %c0_60 = arith.constant 0 : index
    %c0_61 = arith.constant 0 : index
    %94 = vector.load %arg2[%c7_59, %c0_60, %c0_61] : memref<16x8x256xf32, #tpu.memory_space<vmem>>, vector<1x8x256xf32>
    %95 = vector.shape_cast %94 : vector<1x8x256xf32> to vector<8x256xf32>
    %96 = vector.extract_strided_slice %95 {offsets = [0, 0], sizes = [1, 256], strides = [1, 1]} : vector<8x256xf32> to vector<1x256xf32>
    %cst_62 = arith.constant dense<0.000000e+00> : vector<8x256xf32>
    %97 = tpu.matmul %91, %93, %cst_62 {dimension_numbers = #tpu.dot_dimension_numbers<[1], [0], [0], [1], [0, 0, 1, 1], [], []>} : vector<8x256xf32>, vector<256x256xf32>, vector<8x256xf32> -> vector<8x256xf32>
    %98 = vector.broadcast %96 : vector<1x256xf32> to vector<8x256xf32>
    %99 = arith.addf %97, %98 : vector<8x256xf32>
    %100 = math.tanh %99 : vector<8x256xf32>
    %c8 = arith.constant 8 : index
    %c0_63 = arith.constant 0 : index
    %c0_64 = arith.constant 0 : index
    %101 = vector.load %arg1[%c8, %c0_63, %c0_64] : memref<16x256x256xf32, #tpu.memory_space<vmem>>, vector<1x256x256xf32>
    %102 = vector.shape_cast %101 : vector<1x256x256xf32> to vector<256x256xf32>
    %c8_65 = arith.constant 8 : index
    %c0_66 = arith.constant 0 : index
    %c0_67 = arith.constant 0 : index
    %103 = vector.load %arg2[%c8_65, %c0_66, %c0_67] : memref<16x8x256xf32, #tpu.memory_space<vmem>>, vector<1x8x256xf32>
    %104 = vector.shape_cast %103 : vector<1x8x256xf32> to vector<8x256xf32>
    %105 = vector.extract_strided_slice %104 {offsets = [0, 0], sizes = [1, 256], strides = [1, 1]} : vector<8x256xf32> to vector<1x256xf32>
    %cst_68 = arith.constant dense<0.000000e+00> : vector<8x256xf32>
    %106 = tpu.matmul %100, %102, %cst_68 {dimension_numbers = #tpu.dot_dimension_numbers<[1], [0], [0], [1], [0, 0, 1, 1], [], []>} : vector<8x256xf32>, vector<256x256xf32>, vector<8x256xf32> -> vector<8x256xf32>
    %107 = vector.broadcast %105 : vector<1x256xf32> to vector<8x256xf32>
    %108 = arith.addf %106, %107 : vector<8x256xf32>
    %cst_69 = arith.constant 0.000000e+00 : f32
    %109 = vector.broadcast %cst_69 : f32 to vector<8x256xf32>
    %110 = arith.cmpf ogt, %108, %109 : vector<8x256xf32>
    %cst_70 = arith.constant 2.000000e-01 : f32
    %111 = vector.broadcast %cst_70 : f32 to vector<8x256xf32>
    %112 = arith.mulf %111, %108 : vector<8x256xf32>
    %113 = arith.select %110, %108, %112 : vector<8x256xi1>, vector<8x256xf32>
    %c9 = arith.constant 9 : index
    %c0_71 = arith.constant 0 : index
    %c0_72 = arith.constant 0 : index
    %114 = vector.load %arg1[%c9, %c0_71, %c0_72] : memref<16x256x256xf32, #tpu.memory_space<vmem>>, vector<1x256x256xf32>
    %115 = vector.shape_cast %114 : vector<1x256x256xf32> to vector<256x256xf32>
    %c9_73 = arith.constant 9 : index
    %c0_74 = arith.constant 0 : index
    %c0_75 = arith.constant 0 : index
    %116 = vector.load %arg2[%c9_73, %c0_74, %c0_75] : memref<16x8x256xf32, #tpu.memory_space<vmem>>, vector<1x8x256xf32>
    %117 = vector.shape_cast %116 : vector<1x8x256xf32> to vector<8x256xf32>
    %118 = vector.extract_strided_slice %117 {offsets = [0, 0], sizes = [1, 256], strides = [1, 1]} : vector<8x256xf32> to vector<1x256xf32>
    %cst_76 = arith.constant dense<0.000000e+00> : vector<8x256xf32>
    %119 = tpu.matmul %113, %115, %cst_76 {dimension_numbers = #tpu.dot_dimension_numbers<[1], [0], [0], [1], [0, 0, 1, 1], [], []>} : vector<8x256xf32>, vector<256x256xf32>, vector<8x256xf32> -> vector<8x256xf32>
    %120 = vector.broadcast %118 : vector<1x256xf32> to vector<8x256xf32>
    %121 = arith.addf %119, %120 : vector<8x256xf32>
    %122 = vector.extract_strided_slice %117 {offsets = [1, 0], sizes = [1, 256], strides = [1, 1]} : vector<8x256xf32> to vector<1x256xf32>
    %123 = vector.extract_strided_slice %117 {offsets = [2, 0], sizes = [1, 256], strides = [1, 1]} : vector<8x256xf32> to vector<1x256xf32>
    %cst_77 = arith.constant dense<0.000000e+00> : vector<256xf32>
    %124 = vector.multi_reduction <add>, %121, %cst_77 [0] : vector<8x256xf32> to vector<256xf32>
    %125 = vector.shape_cast %124 : vector<256xf32> to vector<1x256xf32>
    %cst_78 = arith.constant 8.000000e+00 : f32
    %126 = vector.broadcast %cst_78 : f32 to vector<1x256xf32>
    %127 = arith.divf %125, %126 : vector<1x256xf32>
    %128 = arith.mulf %121, %121 : vector<8x256xf32>
    %cst_79 = arith.constant dense<0.000000e+00> : vector<256xf32>
    %129 = vector.multi_reduction <add>, %128, %cst_79 [0] : vector<8x256xf32> to vector<256xf32>
    %130 = vector.shape_cast %129 : vector<256xf32> to vector<1x256xf32>
    %cst_80 = arith.constant 8.000000e+00 : f32
    %131 = vector.broadcast %cst_80 : f32 to vector<1x256xf32>
    %132 = arith.divf %130, %131 : vector<1x256xf32>
    %133 = arith.mulf %127, %127 : vector<1x256xf32>
    %134 = arith.subf %132, %133 : vector<1x256xf32>
    %cst_81 = arith.constant 8.000000e-01 : f32
    %135 = vector.broadcast %cst_81 : f32 to vector<1x256xf32>
    %136 = arith.addf %134, %135 : vector<1x256xf32>
    %137 = math.rsqrt %136 : vector<1x256xf32>
    %138 = arith.mulf %122, %137 : vector<1x256xf32>
    %139 = arith.mulf %127, %138 : vector<1x256xf32>
    %140 = arith.subf %123, %139 : vector<1x256xf32>
    %141 = vector.broadcast %138 : vector<1x256xf32> to vector<8x256xf32>
    %142 = arith.mulf %121, %141 : vector<8x256xf32>
    %143 = vector.broadcast %140 : vector<1x256xf32> to vector<8x256xf32>
    %144 = arith.addf %142, %143 : vector<8x256xf32>
    %cst_82 = arith.constant 0.000000e+00 : f32
    %145 = vector.broadcast %cst_82 : f32 to vector<8x256xf32>
    %146 = arith.cmpf ogt, %144, %145 : vector<8x256xf32>
    %cst_83 = arith.constant 2.000000e-01 : f32
    %147 = vector.broadcast %cst_83 : f32 to vector<8x256xf32>
    %148 = arith.mulf %147, %144 : vector<8x256xf32>
    %149 = arith.select %146, %144, %148 : vector<8x256xi1>, vector<8x256xf32>
    %c10 = arith.constant 10 : index
    %c0_84 = arith.constant 0 : index
    %c0_85 = arith.constant 0 : index
    %150 = vector.load %arg1[%c10, %c0_84, %c0_85] : memref<16x256x256xf32, #tpu.memory_space<vmem>>, vector<1x256x256xf32>
    %151 = vector.shape_cast %150 : vector<1x256x256xf32> to vector<256x256xf32>
    %c10_86 = arith.constant 10 : index
    %c0_87 = arith.constant 0 : index
    %c0_88 = arith.constant 0 : index
    %152 = vector.load %arg2[%c10_86, %c0_87, %c0_88] : memref<16x8x256xf32, #tpu.memory_space<vmem>>, vector<1x8x256xf32>
    %153 = vector.shape_cast %152 : vector<1x8x256xf32> to vector<8x256xf32>
    %154 = vector.extract_strided_slice %153 {offsets = [0, 0], sizes = [1, 256], strides = [1, 1]} : vector<8x256xf32> to vector<1x256xf32>
    %cst_89 = arith.constant dense<0.000000e+00> : vector<8x256xf32>
    %155 = tpu.matmul %149, %151, %cst_89 {dimension_numbers = #tpu.dot_dimension_numbers<[1], [0], [0], [1], [0, 0, 1, 1], [], []>} : vector<8x256xf32>, vector<256x256xf32>, vector<8x256xf32> -> vector<8x256xf32>
    %156 = vector.broadcast %154 : vector<1x256xf32> to vector<8x256xf32>
    %157 = arith.addf %155, %156 : vector<8x256xf32>
    %158 = vector.extract_strided_slice %153 {offsets = [1, 0], sizes = [1, 256], strides = [1, 1]} : vector<8x256xf32> to vector<1x256xf32>
    %159 = vector.extract_strided_slice %153 {offsets = [2, 0], sizes = [1, 256], strides = [1, 1]} : vector<8x256xf32> to vector<1x256xf32>
    %cst_90 = arith.constant dense<0.000000e+00> : vector<256xf32>
    %160 = vector.multi_reduction <add>, %157, %cst_90 [0] : vector<8x256xf32> to vector<256xf32>
    %161 = vector.shape_cast %160 : vector<256xf32> to vector<1x256xf32>
    %cst_91 = arith.constant 8.000000e+00 : f32
    %162 = vector.broadcast %cst_91 : f32 to vector<1x256xf32>
    %163 = arith.divf %161, %162 : vector<1x256xf32>
    %164 = arith.mulf %157, %157 : vector<8x256xf32>
    %cst_92 = arith.constant dense<0.000000e+00> : vector<256xf32>
    %165 = vector.multi_reduction <add>, %164, %cst_92 [0] : vector<8x256xf32> to vector<256xf32>
    %166 = vector.shape_cast %165 : vector<256xf32> to vector<1x256xf32>
    %cst_93 = arith.constant 8.000000e+00 : f32
    %167 = vector.broadcast %cst_93 : f32 to vector<1x256xf32>
    %168 = arith.divf %166, %167 : vector<1x256xf32>
    %169 = arith.mulf %163, %163 : vector<1x256xf32>
    %170 = arith.subf %168, %169 : vector<1x256xf32>
    %cst_94 = arith.constant 8.000000e-01 : f32
    %171 = vector.broadcast %cst_94 : f32 to vector<1x256xf32>
    %172 = arith.addf %170, %171 : vector<1x256xf32>
    %173 = math.rsqrt %172 : vector<1x256xf32>
    %174 = arith.mulf %158, %173 : vector<1x256xf32>
    %175 = arith.mulf %163, %174 : vector<1x256xf32>
    %176 = arith.subf %159, %175 : vector<1x256xf32>
    %177 = vector.broadcast %174 : vector<1x256xf32> to vector<8x256xf32>
    %178 = arith.mulf %157, %177 : vector<8x256xf32>
    %179 = vector.broadcast %176 : vector<1x256xf32> to vector<8x256xf32>
    %180 = arith.addf %178, %179 : vector<8x256xf32>
    %cst_95 = arith.constant 0.000000e+00 : f32
    %181 = vector.broadcast %cst_95 : f32 to vector<8x256xf32>
    %182 = arith.cmpf ogt, %180, %181 : vector<8x256xf32>
    %cst_96 = arith.constant 2.000000e-01 : f32
    %183 = vector.broadcast %cst_96 : f32 to vector<8x256xf32>
    %184 = arith.mulf %183, %180 : vector<8x256xf32>
    %185 = arith.select %182, %180, %184 : vector<8x256xi1>, vector<8x256xf32>
    %c11 = arith.constant 11 : index
    %c0_97 = arith.constant 0 : index
    %c0_98 = arith.constant 0 : index
    %186 = vector.load %arg1[%c11, %c0_97, %c0_98] : memref<16x256x256xf32, #tpu.memory_space<vmem>>, vector<1x256x256xf32>
    %187 = vector.shape_cast %186 : vector<1x256x256xf32> to vector<256x256xf32>
    %c11_99 = arith.constant 11 : index
    %c0_100 = arith.constant 0 : index
    %c0_101 = arith.constant 0 : index
    %188 = vector.load %arg2[%c11_99, %c0_100, %c0_101] : memref<16x8x256xf32, #tpu.memory_space<vmem>>, vector<1x8x256xf32>
    %189 = vector.shape_cast %188 : vector<1x8x256xf32> to vector<8x256xf32>
    %190 = vector.extract_strided_slice %189 {offsets = [0, 0], sizes = [1, 256], strides = [1, 1]} : vector<8x256xf32> to vector<1x256xf32>
    %cst_102 = arith.constant dense<0.000000e+00> : vector<8x256xf32>
    %191 = tpu.matmul %185, %187, %cst_102 {dimension_numbers = #tpu.dot_dimension_numbers<[1], [0], [0], [1], [0, 0, 1, 1], [], []>} : vector<8x256xf32>, vector<256x256xf32>, vector<8x256xf32> -> vector<8x256xf32>
    %192 = vector.broadcast %190 : vector<1x256xf32> to vector<8x256xf32>
    %193 = arith.addf %191, %192 : vector<8x256xf32>
    %194 = vector.extract_strided_slice %189 {offsets = [1, 0], sizes = [1, 256], strides = [1, 1]} : vector<8x256xf32> to vector<1x256xf32>
    %195 = vector.extract_strided_slice %189 {offsets = [2, 0], sizes = [1, 256], strides = [1, 1]} : vector<8x256xf32> to vector<1x256xf32>
    %cst_103 = arith.constant dense<0.000000e+00> : vector<256xf32>
    %196 = vector.multi_reduction <add>, %193, %cst_103 [0] : vector<8x256xf32> to vector<256xf32>
    %197 = vector.shape_cast %196 : vector<256xf32> to vector<1x256xf32>
    %cst_104 = arith.constant 8.000000e+00 : f32
    %198 = vector.broadcast %cst_104 : f32 to vector<1x256xf32>
    %199 = arith.divf %197, %198 : vector<1x256xf32>
    %200 = arith.mulf %193, %193 : vector<8x256xf32>
    %cst_105 = arith.constant dense<0.000000e+00> : vector<256xf32>
    %201 = vector.multi_reduction <add>, %200, %cst_105 [0] : vector<8x256xf32> to vector<256xf32>
    %202 = vector.shape_cast %201 : vector<256xf32> to vector<1x256xf32>
    %cst_106 = arith.constant 8.000000e+00 : f32
    %203 = vector.broadcast %cst_106 : f32 to vector<1x256xf32>
    %204 = arith.divf %202, %203 : vector<1x256xf32>
    %205 = arith.mulf %199, %199 : vector<1x256xf32>
    %206 = arith.subf %204, %205 : vector<1x256xf32>
    %cst_107 = arith.constant 8.000000e-01 : f32
    %207 = vector.broadcast %cst_107 : f32 to vector<1x256xf32>
    %208 = arith.addf %206, %207 : vector<1x256xf32>
    %209 = math.rsqrt %208 : vector<1x256xf32>
    %210 = arith.mulf %194, %209 : vector<1x256xf32>
    %211 = arith.mulf %199, %210 : vector<1x256xf32>
    %212 = arith.subf %195, %211 : vector<1x256xf32>
    %213 = vector.broadcast %210 : vector<1x256xf32> to vector<8x256xf32>
    %214 = arith.mulf %193, %213 : vector<8x256xf32>
    %215 = vector.broadcast %212 : vector<1x256xf32> to vector<8x256xf32>
    %216 = arith.addf %214, %215 : vector<8x256xf32>
    %cst_108 = arith.constant 0.000000e+00 : f32
    %217 = vector.broadcast %cst_108 : f32 to vector<8x256xf32>
    %218 = arith.cmpf ogt, %216, %217 : vector<8x256xf32>
    %cst_109 = arith.constant 2.000000e-01 : f32
    %219 = vector.broadcast %cst_109 : f32 to vector<8x256xf32>
    %220 = arith.mulf %219, %216 : vector<8x256xf32>
    %221 = arith.select %218, %216, %220 : vector<8x256xi1>, vector<8x256xf32>
    %c12 = arith.constant 12 : index
    %c0_110 = arith.constant 0 : index
    %c0_111 = arith.constant 0 : index
    %222 = vector.load %arg1[%c12, %c0_110, %c0_111] : memref<16x256x256xf32, #tpu.memory_space<vmem>>, vector<1x256x256xf32>
    %223 = vector.shape_cast %222 : vector<1x256x256xf32> to vector<256x256xf32>
    %c12_112 = arith.constant 12 : index
    %c0_113 = arith.constant 0 : index
    %c0_114 = arith.constant 0 : index
    %224 = vector.load %arg2[%c12_112, %c0_113, %c0_114] : memref<16x8x256xf32, #tpu.memory_space<vmem>>, vector<1x8x256xf32>
    %225 = vector.shape_cast %224 : vector<1x8x256xf32> to vector<8x256xf32>
    %226 = vector.extract_strided_slice %225 {offsets = [0, 0], sizes = [1, 256], strides = [1, 1]} : vector<8x256xf32> to vector<1x256xf32>
    %cst_115 = arith.constant dense<0.000000e+00> : vector<8x256xf32>
    %227 = tpu.matmul %221, %223, %cst_115 {dimension_numbers = #tpu.dot_dimension_numbers<[1], [0], [0], [1], [0, 0, 1, 1], [], []>} : vector<8x256xf32>, vector<256x256xf32>, vector<8x256xf32> -> vector<8x256xf32>
    %228 = vector.broadcast %226 : vector<1x256xf32> to vector<8x256xf32>
    %229 = arith.addf %227, %228 : vector<8x256xf32>
    %230 = vector.extract_strided_slice %225 {offsets = [1, 0], sizes = [1, 256], strides = [1, 1]} : vector<8x256xf32> to vector<1x256xf32>
    %231 = vector.extract_strided_slice %225 {offsets = [2, 0], sizes = [1, 256], strides = [1, 1]} : vector<8x256xf32> to vector<1x256xf32>
    %cst_116 = arith.constant dense<0.000000e+00> : vector<256xf32>
    %232 = vector.multi_reduction <add>, %229, %cst_116 [0] : vector<8x256xf32> to vector<256xf32>
    %233 = vector.shape_cast %232 : vector<256xf32> to vector<1x256xf32>
    %cst_117 = arith.constant 8.000000e+00 : f32
    %234 = vector.broadcast %cst_117 : f32 to vector<1x256xf32>
    %235 = arith.divf %233, %234 : vector<1x256xf32>
    %236 = arith.mulf %229, %229 : vector<8x256xf32>
    %cst_118 = arith.constant dense<0.000000e+00> : vector<256xf32>
    %237 = vector.multi_reduction <add>, %236, %cst_118 [0] : vector<8x256xf32> to vector<256xf32>
    %238 = vector.shape_cast %237 : vector<256xf32> to vector<1x256xf32>
    %cst_119 = arith.constant 8.000000e+00 : f32
    %239 = vector.broadcast %cst_119 : f32 to vector<1x256xf32>
    %240 = arith.divf %238, %239 : vector<1x256xf32>
    %241 = arith.mulf %235, %235 : vector<1x256xf32>
    %242 = arith.subf %240, %241 : vector<1x256xf32>
    %cst_120 = arith.constant 8.000000e-01 : f32
    %243 = vector.broadcast %cst_120 : f32 to vector<1x256xf32>
    %244 = arith.addf %242, %243 : vector<1x256xf32>
    %245 = math.rsqrt %244 : vector<1x256xf32>
    %246 = arith.mulf %230, %245 : vector<1x256xf32>
    %247 = arith.mulf %235, %246 : vector<1x256xf32>
    %248 = arith.subf %231, %247 : vector<1x256xf32>
    %249 = vector.broadcast %246 : vector<1x256xf32> to vector<8x256xf32>
    %250 = arith.mulf %229, %249 : vector<8x256xf32>
    %251 = vector.broadcast %248 : vector<1x256xf32> to vector<8x256xf32>
    %252 = arith.addf %250, %251 : vector<8x256xf32>
    %cst_121 = arith.constant 0.000000e+00 : f32
    %253 = vector.broadcast %cst_121 : f32 to vector<8x256xf32>
    %254 = arith.cmpf ogt, %252, %253 : vector<8x256xf32>
    %cst_122 = arith.constant 2.000000e-01 : f32
    %255 = vector.broadcast %cst_122 : f32 to vector<8x256xf32>
    %256 = arith.mulf %255, %252 : vector<8x256xf32>
    %257 = arith.select %254, %252, %256 : vector<8x256xi1>, vector<8x256xf32>
    %c13 = arith.constant 13 : index
    %c0_123 = arith.constant 0 : index
    %c0_124 = arith.constant 0 : index
    %258 = vector.load %arg1[%c13, %c0_123, %c0_124] : memref<16x256x256xf32, #tpu.memory_space<vmem>>, vector<1x256x256xf32>
    %259 = vector.shape_cast %258 : vector<1x256x256xf32> to vector<256x256xf32>
    %c13_125 = arith.constant 13 : index
    %c0_126 = arith.constant 0 : index
    %c0_127 = arith.constant 0 : index
    %260 = vector.load %arg2[%c13_125, %c0_126, %c0_127] : memref<16x8x256xf32, #tpu.memory_space<vmem>>, vector<1x8x256xf32>
    %261 = vector.shape_cast %260 : vector<1x8x256xf32> to vector<8x256xf32>
    %262 = vector.extract_strided_slice %261 {offsets = [0, 0], sizes = [1, 256], strides = [1, 1]} : vector<8x256xf32> to vector<1x256xf32>
    %cst_128 = arith.constant dense<0.000000e+00> : vector<8x256xf32>
    %263 = tpu.matmul %257, %259, %cst_128 {dimension_numbers = #tpu.dot_dimension_numbers<[1], [0], [0], [1], [0, 0, 1, 1], [], []>} : vector<8x256xf32>, vector<256x256xf32>, vector<8x256xf32> -> vector<8x256xf32>
    %264 = vector.broadcast %262 : vector<1x256xf32> to vector<8x256xf32>
    %265 = arith.addf %263, %264 : vector<8x256xf32>
    %266 = vector.extract_strided_slice %261 {offsets = [1, 0], sizes = [1, 256], strides = [1, 1]} : vector<8x256xf32> to vector<1x256xf32>
    %267 = vector.extract_strided_slice %261 {offsets = [2, 0], sizes = [1, 256], strides = [1, 1]} : vector<8x256xf32> to vector<1x256xf32>
    %cst_129 = arith.constant dense<0.000000e+00> : vector<256xf32>
    %268 = vector.multi_reduction <add>, %265, %cst_129 [0] : vector<8x256xf32> to vector<256xf32>
    %269 = vector.shape_cast %268 : vector<256xf32> to vector<1x256xf32>
    %cst_130 = arith.constant 8.000000e+00 : f32
    %270 = vector.broadcast %cst_130 : f32 to vector<1x256xf32>
    %271 = arith.divf %269, %270 : vector<1x256xf32>
    %272 = arith.mulf %265, %265 : vector<8x256xf32>
    %cst_131 = arith.constant dense<0.000000e+00> : vector<256xf32>
    %273 = vector.multi_reduction <add>, %272, %cst_131 [0] : vector<8x256xf32> to vector<256xf32>
    %274 = vector.shape_cast %273 : vector<256xf32> to vector<1x256xf32>
    %cst_132 = arith.constant 8.000000e+00 : f32
    %275 = vector.broadcast %cst_132 : f32 to vector<1x256xf32>
    %276 = arith.divf %274, %275 : vector<1x256xf32>
    %277 = arith.mulf %271, %271 : vector<1x256xf32>
    %278 = arith.subf %276, %277 : vector<1x256xf32>
    %cst_133 = arith.constant 8.000000e-01 : f32
    %279 = vector.broadcast %cst_133 : f32 to vector<1x256xf32>
    %280 = arith.addf %278, %279 : vector<1x256xf32>
    %281 = math.rsqrt %280 : vector<1x256xf32>
    %282 = arith.mulf %266, %281 : vector<1x256xf32>
    %283 = arith.mulf %271, %282 : vector<1x256xf32>
    %284 = arith.subf %267, %283 : vector<1x256xf32>
    %285 = vector.broadcast %282 : vector<1x256xf32> to vector<8x256xf32>
    %286 = arith.mulf %265, %285 : vector<8x256xf32>
    %287 = vector.broadcast %284 : vector<1x256xf32> to vector<8x256xf32>
    %288 = arith.addf %286, %287 : vector<8x256xf32>
    %cst_134 = arith.constant 0.000000e+00 : f32
    %289 = vector.broadcast %cst_134 : f32 to vector<8x256xf32>
    %290 = arith.cmpf ogt, %288, %289 : vector<8x256xf32>
    %cst_135 = arith.constant 2.000000e-01 : f32
    %291 = vector.broadcast %cst_135 : f32 to vector<8x256xf32>
    %292 = arith.mulf %291, %288 : vector<8x256xf32>
    %293 = arith.select %290, %288, %292 : vector<8x256xi1>, vector<8x256xf32>
    %c14 = arith.constant 14 : index
    %c0_136 = arith.constant 0 : index
    %c0_137 = arith.constant 0 : index
    %294 = vector.load %arg1[%c14, %c0_136, %c0_137] : memref<16x256x256xf32, #tpu.memory_space<vmem>>, vector<1x256x256xf32>
    %295 = vector.shape_cast %294 : vector<1x256x256xf32> to vector<256x256xf32>
    %c14_138 = arith.constant 14 : index
    %c0_139 = arith.constant 0 : index
    %c0_140 = arith.constant 0 : index
    %296 = vector.load %arg2[%c14_138, %c0_139, %c0_140] : memref<16x8x256xf32, #tpu.memory_space<vmem>>, vector<1x8x256xf32>
    %297 = vector.shape_cast %296 : vector<1x8x256xf32> to vector<8x256xf32>
    %298 = vector.extract_strided_slice %297 {offsets = [0, 0], sizes = [1, 256], strides = [1, 1]} : vector<8x256xf32> to vector<1x256xf32>
    %cst_141 = arith.constant dense<0.000000e+00> : vector<8x256xf32>
    %299 = tpu.matmul %293, %295, %cst_141 {dimension_numbers = #tpu.dot_dimension_numbers<[1], [0], [0], [1], [0, 0, 1, 1], [], []>} : vector<8x256xf32>, vector<256x256xf32>, vector<8x256xf32> -> vector<8x256xf32>
    %300 = vector.broadcast %298 : vector<1x256xf32> to vector<8x256xf32>
    %301 = arith.addf %299, %300 : vector<8x256xf32>
    %302 = vector.extract_strided_slice %297 {offsets = [1, 0], sizes = [1, 256], strides = [1, 1]} : vector<8x256xf32> to vector<1x256xf32>
    %303 = vector.extract_strided_slice %297 {offsets = [2, 0], sizes = [1, 256], strides = [1, 1]} : vector<8x256xf32> to vector<1x256xf32>
    %cst_142 = arith.constant dense<0.000000e+00> : vector<256xf32>
    %304 = vector.multi_reduction <add>, %301, %cst_142 [0] : vector<8x256xf32> to vector<256xf32>
    %305 = vector.shape_cast %304 : vector<256xf32> to vector<1x256xf32>
    %cst_143 = arith.constant 8.000000e+00 : f32
    %306 = vector.broadcast %cst_143 : f32 to vector<1x256xf32>
    %307 = arith.divf %305, %306 : vector<1x256xf32>
    %308 = arith.mulf %301, %301 : vector<8x256xf32>
    %cst_144 = arith.constant dense<0.000000e+00> : vector<256xf32>
    %309 = vector.multi_reduction <add>, %308, %cst_144 [0] : vector<8x256xf32> to vector<256xf32>
    %310 = vector.shape_cast %309 : vector<256xf32> to vector<1x256xf32>
    %cst_145 = arith.constant 8.000000e+00 : f32
    %311 = vector.broadcast %cst_145 : f32 to vector<1x256xf32>
    %312 = arith.divf %310, %311 : vector<1x256xf32>
    %313 = arith.mulf %307, %307 : vector<1x256xf32>
    %314 = arith.subf %312, %313 : vector<1x256xf32>
    %cst_146 = arith.constant 8.000000e-01 : f32
    %315 = vector.broadcast %cst_146 : f32 to vector<1x256xf32>
    %316 = arith.addf %314, %315 : vector<1x256xf32>
    %317 = math.rsqrt %316 : vector<1x256xf32>
    %318 = arith.mulf %302, %317 : vector<1x256xf32>
    %319 = arith.mulf %307, %318 : vector<1x256xf32>
    %320 = arith.subf %303, %319 : vector<1x256xf32>
    %321 = vector.broadcast %318 : vector<1x256xf32> to vector<8x256xf32>
    %322 = arith.mulf %301, %321 : vector<8x256xf32>
    %323 = vector.broadcast %320 : vector<1x256xf32> to vector<8x256xf32>
    %324 = arith.addf %322, %323 : vector<8x256xf32>
    %cst_147 = arith.constant 0.000000e+00 : f32
    %325 = vector.broadcast %cst_147 : f32 to vector<8x256xf32>
    %326 = arith.cmpf ogt, %324, %325 : vector<8x256xf32>
    %cst_148 = arith.constant 2.000000e-01 : f32
    %327 = vector.broadcast %cst_148 : f32 to vector<8x256xf32>
    %328 = arith.mulf %327, %324 : vector<8x256xf32>
    %329 = arith.select %326, %324, %328 : vector<8x256xi1>, vector<8x256xf32>
    %c15 = arith.constant 15 : index
    %c0_149 = arith.constant 0 : index
    %c0_150 = arith.constant 0 : index
    %330 = vector.load %arg1[%c15, %c0_149, %c0_150] : memref<16x256x256xf32, #tpu.memory_space<vmem>>, vector<1x256x256xf32>
    %331 = vector.shape_cast %330 : vector<1x256x256xf32> to vector<256x256xf32>
    %c15_151 = arith.constant 15 : index
    %c0_152 = arith.constant 0 : index
    %c0_153 = arith.constant 0 : index
    %332 = vector.load %arg2[%c15_151, %c0_152, %c0_153] : memref<16x8x256xf32, #tpu.memory_space<vmem>>, vector<1x8x256xf32>
    %333 = vector.shape_cast %332 : vector<1x8x256xf32> to vector<8x256xf32>
    %334 = vector.extract_strided_slice %333 {offsets = [0, 0], sizes = [1, 256], strides = [1, 1]} : vector<8x256xf32> to vector<1x256xf32>
    %cst_154 = arith.constant dense<0.000000e+00> : vector<8x256xf32>
    %335 = tpu.matmul %329, %331, %cst_154 {dimension_numbers = #tpu.dot_dimension_numbers<[1], [0], [0], [1], [0, 0, 1, 1], [], []>} : vector<8x256xf32>, vector<256x256xf32>, vector<8x256xf32> -> vector<8x256xf32>
    %336 = vector.broadcast %334 : vector<1x256xf32> to vector<8x256xf32>
    %337 = arith.addf %335, %336 : vector<8x256xf32>
    %338 = math.tanh %337 : vector<8x256xf32>
    %c0_155 = arith.constant 0 : index
    %c0_156 = arith.constant 0 : index
    %339 = vector.load %arg3[%c0_155, %c0_156] : memref<8x256xf32, #tpu.memory_space<vmem>>, vector<8x256xf32>
    tpu.vector_store %arg3[%c0_155, %c0_156], %338 {strides = array<i32>} : memref<8x256xf32, #tpu.memory_space<vmem>>, vector<8x256xf32>,
    return
  }
}

</mosaic_0001>

<llo_original>
// kernel: tpu_custom_call.1
$region0: #{tpu_custom_call.1}
  #allocation0 [shape = 'u32[]', space=smem, size = 0x4, offset = 0x4, fixed_abs, tag = 'smem constant byte address 0x4 - core index']
  #allocation1 [shape = 'u32[144,128]{1,0:T(1,128)}', space=vmem, size = 0x12000, scoped, tag = 'internal scratch']
  %s0 = inlined_call_operand.hbm [shape: f32[8,256], index: 0, kind: input, shape index: {}]
  %s1 = inlined_call_operand.hbm [shape: f32[16,256,256], index: 1, kind: input, shape index: {}]
  %s2 = inlined_call_operand.hbm [shape: f32[16,8,256], index: 2, kind: input, shape index: {}]
  %s3 = inlined_call_operand.hbm [shape: f32[8,256], index: 3, kind: output, shape index: {}]
  %s4 = sld [smem:[#allocation0]]
  $region34: #{tpu_custom_call.1} parent=0
    _
  %s6 = ssub.s32 1, %s4
  %s7 = scalar_select 0, %s6, %s4
  $region1: #{tpu_custom_call.1} parent=0
    #allocation2 [shape = 'u8[8192]{0}', space=vmem, size = 0x2000, scoped, tag = 'input window, operand 0, single buffered']
    #allocation3 [shape = 's32[1]{0}', space=sflag, size = 0x4, scoped, tag = 'scoped memory for tpu_custom_call.1']
    #allocation4 [shape = 's32[1]{0}', space=sflag, size = 0x4, scoped, tag = 'scoped memory for tpu_custom_call.1']
    #allocation5 [shape = 'u8[4194304]{0}', space=vmem, size = 0x400000, scoped, tag = 'input window, operand 1, single buffered']
    #allocation6 [shape = 's32[1]{0}', space=sflag, size = 0x4, scoped, tag = 'scoped memory for tpu_custom_call.1']
    #allocation7 [shape = 'u8[131072]{0}', space=vmem, size = 0x20000, scoped, tag = 'input window, operand 2, single buffered']
    #allocation8 [shape = 'u8[8192]{0}', space=vmem, size = 0x2000, scoped, tag = 'output window, operand 0, single buffered']
    %8 = vsyncpa [#allocation3], 0
    %9 = vsyncpa [#allocation6], 0
    %10 = vsyncpa [#allocation4], 0
    // Predicated region
    $region2: #{tpu_custom_call.1} parent=1 // pred_check
      _
    $region3: #{tpu_custom_call.1} parent=1 // pred_check_branch
      %12 = sbr.rel (0) target = $region5
    $region4: #{tpu_custom_call.1} parent=1 // pred_region
      %s14 = ssub.s32 256, 256
      %15 = vsyncadd [#allocation3], %s14
      %s17 = sshll.u32 [#allocation2], 4
      %s18 = int_to_ptr.vmem [resolvable:$true] %s17
      %20 = dma.hbm_to_vmem [thread:$0]  %s0, 256, %s18, [#allocation3]
    $region5: #{tpu_custom_call.1} parent=1 // pred_fallthru
      _
    // Predicated region
    $region6: #{tpu_custom_call.1} parent=1 // pred_check
      _
    $region7: #{tpu_custom_call.1} parent=1 // pred_check_branch
      %22 = sbr.rel (0) target = $region9
    $region8: #{tpu_custom_call.1} parent=1 // pred_region
      %s24 = ssub.s32 131072, 131072
      %25 = vsyncadd [#allocation6], %s24
      %s26 = sshll.u32 [#allocation5], 4
      %s27 = int_to_ptr.vmem [resolvable:$true] %s26
      %32 = dma.hbm_to_vmem [thread:$0]  %s1, 131072, %s27, [#allocation6], 256, 256, 16
    $region9: #{tpu_custom_call.1} parent=1 // pred_fallthru
      _
    // Predicated region
    $region10: #{tpu_custom_call.1} parent=1 // pred_check
      _
    $region11: #{tpu_custom_call.1} parent=1 // pred_check_branch
      %34 = sbr.rel (0) target = $region13
    $region12: #{tpu_custom_call.1} parent=1 // pred_region
      %s36 = ssub.s32 4096, 4096
      %37 = vsyncadd [#allocation6], %s36
      %s38 = sshll.u32 [#allocation7], 4
      %s39 = int_to_ptr.vmem [resolvable:$true] %s38
      %44 = dma.hbm_to_vmem [thread:$0]  %s2, 4096, %s39, [#allocation6], 256, 256, 16
    $region13: #{tpu_custom_call.1} parent=1 // pred_fallthru
      _
    // Predicated region
    $region14: #{tpu_custom_call.1} parent=1 // pred_check
      _
    $region15: #{tpu_custom_call.1} parent=1 // pred_check_branch
      %46 = sbr.rel (0) target = $region17
    $region16: #{tpu_custom_call.1} parent=1 // pred_region
      %47 = dma.done [#allocation3], 256
    $region17: #{tpu_custom_call.1} parent=1 // pred_fallthru
      _
    // Predicated region
    $region18: #{tpu_custom_call.1} parent=1 // pred_check
      _
    $region19: #{tpu_custom_call.1} parent=1 // pred_check_branch
      %49 = sbr.rel (0) target = $region21
    $region20: #{tpu_custom_call.1} parent=1 // pred_region
      %50 = dma.done [#allocation6], 131072
    $region21: #{tpu_custom_call.1} parent=1 // pred_fallthru
      _
    // Predicated region
    $region22: #{tpu_custom_call.1} parent=1 // pred_check
      _
    $region23: #{tpu_custom_call.1} parent=1 // pred_check_branch
      %52 = sbr.rel (0) target = $region25
    $region24: #{tpu_custom_call.1} parent=1 // pred_region
      %53 = dma.done [#allocation6], 4096
    $region25: #{tpu_custom_call.1} parent=1 // pred_fallthru
      _
    %v54 = vld [vmem:[#allocation2] sm:$0xff]
    %v55 = vld [vmem:[#allocation2 + $0x8] sm:$0xff]
    %v56 = vld [vmem:[#allocation5] sm:$0xff]
    %v57 = vld [vmem:[#allocation5 + $0x8] sm:$0xff]
    %v58 = vld [vmem:[#allocation5 + $0x10] sm:$0xff]
    %v59 = vld [vmem:[#allocation5 + $0x18] sm:$0xff]
    %v60 = vld [vmem:[#allocation5 + $0x20] sm:$0xff]
    %v61 = vld [vmem:[#allocation5 + $0x28] sm:$0xff]
    %v62 = vld [vmem:[#allocation5 + $0x30] sm:$0xff]
    %v63 = vld [vmem:[#allocation5 + $0x38] sm:$0xff]
    %v64 = vld [vmem:[#allocation5 + $0x40] sm:$0xff]
    %v65 = vld [vmem:[#allocation5 + $0x48] sm:$0xff]
    %v66 = vld [vmem:[#allocation5 + $0x50] sm:$0xff]
    %v67 = vld [vmem:[#allocation5 + $0x58] sm:$0xff]
    %v68 = vld [vmem:[#allocation5 + $0x60] sm:$0xff]
    %v69 = vld [vmem:[#allocation5 + $0x68] sm:$0xff]
    %v70 = vld [vmem:[#allocation5 + $0x70] sm:$0xff]
    %v71 = vld [vmem:[#allocation5 + $0x78] sm:$0xff]
    %v72 = vld [vmem:[#allocation5 + $0x80] sm:$0xff]
    %v73 = vld [vmem:[#allocation5 + $0x88] sm:$0xff]
    %v74 = vld [vmem:[#allocation5 + $0x90] sm:$0xff]
    %v75 = vld [vmem:[#allocation5 + $0x98] sm:$0xff]
    %v76 = vld [vmem:[#allocation5 + $0xa0] sm:$0xff]
    %v77 = vld [vmem:[#allocation5 + $0xa8] sm:$0xff]
    %v78 = vld [vmem:[#allocation5 + $0xb0] sm:$0xff]
    %v79 = vld [vmem:[#allocation5 + $0xb8] sm:$0xff]
    %v80 = vld [vmem:[#allocation5 + $0xc0] sm:$0xff]
    %v81 = vld [vmem:[#allocation5 + $0xc8] sm:$0xff]
    %v82 = vld [vmem:[#allocation5 + $0xd0] sm:$0xff]
    %v83 = vld [vmem:[#allocation5 + $0xd8] sm:$0xff]
    %v84 = vld [vmem:[#allocation5 + $0xe0] sm:$0xff]
    %v85 = vld [vmem:[#allocation5 + $0xe8] sm:$0xff]
    %v86 = vld [vmem:[#allocation5 + $0xf0] sm:$0xff]
    %v87 = vld [vmem:[#allocation5 + $0xf8] sm:$0xff]
    %v88 = vld [vmem:[#allocation5 + $0x100] sm:$0xff]
    %v89 = vld [vmem:[#allocation5 + $0x108] sm:$0xff]
    %v90 = vld [vmem:[#allocation5 + $0x110] sm:$0xff]
    %v91 = vld [vmem:[#allocation5 + $0x118] sm:$0xff]
    %v92 = vld [vmem:[#allocation5 + $0x120] sm:$0xff]
    %v93 = vld [vmem:[#allocation5 + $0x128] sm:$0xff]
    %v94 = vld [vmem:[#allocation5 + $0x130] sm:$0xff]
    %v95 = vld [vmem:[#allocation5 + $0x138] sm:$0xff]
    %v96 = vld [vmem:[#allocation5 + $0x140] sm:$0xff]
    %v97 = vld [vmem:[#allocation5 + $0x148] sm:$0xff]
    %v98 = vld [vmem:[#allocation5 + $0x150] sm:$0xff]
    %v99 = vld [vmem:[#allocation5 + $0x158] sm:$0xff]
    %v100 = vld [vmem:[#allocation5 + $0x160] sm:$0xff]
    %v101 = vld [vmem:[#allocation5 + $0x168] sm:$0xff]
    %v102 = vld [vmem:[#allocation5 + $0x170] sm:$0xff]
    %v103 = vld [vmem:[#allocation5 + $0x178] sm:$0xff]
    %v104 = vld [vmem:[#allocation5 + $0x180] sm:$0xff]
    %v105 = vld [vmem:[#allocation5 + $0x188] sm:$0xff]
    %v106 = vld [vmem:[#allocation5 + $0x190] sm:$0xff]
    %v107 = vld [vmem:[#allocation5 + $0x198] sm:$0xff]
    %v108 = vld [vmem:[#allocation5 + $0x1a0] sm:$0xff]
    %v109 = vld [vmem:[#allocation5 + $0x1a8] sm:$0xff]
    %v110 = vld [vmem:[#allocation5 + $0x1b0] sm:$0xff]
    %v111 = vld [vmem:[#allocation5 + $0x1b8] sm:$0xff]
    %v112 = vld [vmem:[#allocation5 + $0x1c0] sm:$0xff]
    %v113 = vld [vmem:[#allocation5 + $0x1c8] sm:$0xff]
    %v114 = vld [vmem:[#allocation5 + $0x1d0] sm:$0xff]
    %v115 = vld [vmem:[#allocation5 + $0x1d8] sm:$0xff]
    %v116 = vld [vmem:[#allocation5 + $0x1e0] sm:$0xff]
    %v117 = vld [vmem:[#allocation5 + $0x1e8] sm:$0xff]
    %v118 = vld [vmem:[#allocation5 + $0x1f0] sm:$0xff]
    %v119 = vld [vmem:[#allocation5 + $0x1f8] sm:$0xff]
    %v120 = vld [vmem:[#allocation7] sm:$0xff]
    %v121 = vld [vmem:[#allocation7 + $0x8] sm:$0xff]
    %v122 = vlaneseq
    %v123 = vshrl.u32 %v122, 7
    %v124 = vsub.s32 0, %v123
    %v125 = vrot.slane %v120, %v124
    %v126 = vlaneseq
    %v127 = vshrl.u32 %v126, 7
    %v128 = vsub.s32 0, %v127
    %v129 = vrot.slane %v121, %v128
    %130 = vmatprep.subr.mxu0 %v57
    %131 = vmatpush1.msra.mxu0 %v56
    %132 = vmatprep.subr.mxu0 %v59
    %133 = vmatpush1.msra.mxu0 %v58
    %134 = vmatprep.subr.mxu0 %v61
    %135 = vmatpush1.msra.mxu0 %v60
    %136 = vmatprep.subr.mxu0 %v63
    %137 = vmatpush1.msra.mxu0 %v62
    %138 = vmatprep.subr.mxu0 %v65
    %139 = vmatpush1.msra.mxu0 %v64
    %140 = vmatprep.subr.mxu0 %v67
    %141 = vmatpush1.msra.mxu0 %v66
    %142 = vmatprep.subr.mxu0 %v69
    %143 = vmatpush1.msra.mxu0 %v68
    %144 = vmatprep.subr.mxu0 %v71
    %145 = vmatpush1.msra.mxu0 %v70
    %146 = vmatprep.subr.mxu0 %v73
    %147 = vmatpush1.msra.mxu0 %v72
    %148 = vmatprep.subr.mxu0 %v75
    %149 = vmatpush1.msra.mxu0 %v74
    %150 = vmatprep.subr.mxu0 %v77
    %151 = vmatpush1.msra.mxu0 %v76
    %152 = vmatprep.subr.mxu0 %v79
    %153 = vmatpush1.msra.mxu0 %v78
    %154 = vmatprep.subr.mxu0 %v81
    %155 = vmatpush1.msra.mxu0 %v80
    %156 = vmatprep.subr.mxu0 %v83
    %157 = vmatpush1.msra.mxu0 %v82
    %158 = vmatprep.subr.mxu0 %v85
    %159 = vmatpush1.msra.mxu0 %v84
    %160 = vmatprep.subr.mxu0 %v87
    %161 = vmatpush1.msra.mxu0 %v86
    %162 = vmatprep.subr.mxu0 %v89
    %163 = vmatpush1.msra.mxu0 %v88
    %164 = vmatprep.subr.mxu0 %v91
    %165 = vmatpush1.msra.mxu0 %v90
    %166 = vmatprep.subr.mxu0 %v93
    %167 = vmatpush1.msra.mxu0 %v92
    %168 = vmatprep.subr.mxu0 %v95
    %169 = vmatpush1.msra.mxu0 %v94
    %170 = vmatprep.subr.mxu0 %v97
    %171 = vmatpush1.msra.mxu0 %v96
    %172 = vmatprep.subr.mxu0 %v99
    %173 = vmatpush1.msra.mxu0 %v98
    %174 = vmatprep.subr.mxu0 %v101
    %175 = vmatpush1.msra.mxu0 %v100
    %176 = vmatprep.subr.mxu0 %v103
    %177 = vmatpush1.msra.mxu0 %v102
    %178 = vmatprep.subr.mxu0 %v105
    %179 = vmatpush1.msra.mxu0 %v104
    %180 = vmatprep.subr.mxu0 %v107
    %181 = vmatpush1.msra.mxu0 %v106
    %182 = vmatprep.subr.mxu0 %v109
    %183 = vmatpush1.msra.mxu0 %v108
    %184 = vmatprep.subr.mxu0 %v111
    %185 = vmatpush1.msra.mxu0 %v110
    %186 = vmatprep.subr.mxu0 %v113
    %187 = vmatpush1.msra.mxu0 %v112
    %188 = vmatprep.subr.mxu0 %v115
    %189 = vmatpush1.msra.mxu0 %v114
    %190 = vmatprep.subr.mxu0 %v117
    %191 = vmatpush1.msra.mxu0 %v116
    %192 = vmatprep.subr.mxu0 %v119
    %193 = vmatpush1.msra.mxu0 %v118
    %194 = vmatprep.mubr.f32.mxu0 %v55
    %195 = vmatmul.mubr.f32.gmra.mrb[0].mxu0 %v54
    %v196 = vpop.f32.mrb[0].mxu0
    %v197 = vadd.f32 %v125, %v196
    %v198 = vpop.f32.mrb[0].mxu0
    %v199 = vadd.f32 %v129, %v198
    %200 = vdwg.mxu0
    %vm201 = vcmp.gt.f32.partialorder %v197, 0.0
    %vm202 = vcmp.gt.f32.partialorder %v199, 0.0
    %v203 = vmul.f32 %v197, 0.2
    %v204 = vmul.f32 %v199, 0.2
    %v205 = vsel %vm201, %v197, %v203
    %v206 = vsel %vm202, %v199, %v204
    %s207 = scalar_lea.vmem [#allocation5], 512
    %v208 = vld [vmem:[%s207] sm:$0xff]
    %v209 = vld [vmem:[%s207 + $0x8] sm:$0xff]
    %v210 = vld [vmem:[%s207 + $0x10] sm:$0xff]
    %v211 = vld [vmem:[%s207 + $0x18] sm:$0xff]
    %v212 = vld [vmem:[%s207 + $0x20] sm:$0xff]
    %v213 = vld [vmem:[%s207 + $0x28] sm:$0xff]
    %v214 = vld [vmem:[%s207 + $0x30] sm:$0xff]
    %v215 = vld [vmem:[%s207 + $0x38] sm:$0xff]
    %v216 = vld [vmem:[%s207 + $0x40] sm:$0xff]
    %v217 = vld [vmem:[%s207 + $0x48] sm:$0xff]
    %v218 = vld [vmem:[%s207 + $0x50] sm:$0xff]
    %v219 = vld [vmem:[%s207 + $0x58] sm:$0xff]
    %v220 = vld [vmem:[%s207 + $0x60] sm:$0xff]
    %v221 = vld [vmem:[%s207 + $0x68] sm:$0xff]
    %v222 = vld [vmem:[%s207 + $0x70] sm:$0xff]
    %v223 = vld [vmem:[%s207 + $0x78] sm:$0xff]
    %v224 = vld [vmem:[%s207 + $0x80] sm:$0xff]
    %v225 = vld [vmem:[%s207 + $0x88] sm:$0xff]
    %v226 = vld [vmem:[%s207 + $0x90] sm:$0xff]
    %v227 = vld [vmem:[%s207 + $0x98] sm:$0xff]
    %v228 = vld [vmem:[%s207 + $0xa0] sm:$0xff]
    %v229 = vld [vmem:[%s207 + $0xa8] sm:$0xff]
    %v230 = vld [vmem:[%s207 + $0xb0] sm:$0xff]
    %v231 = vld [vmem:[%s207 + $0xb8] sm:$0xff]
    %v232 = vld [vmem:[%s207 + $0xc0] sm:$0xff]
    %v233 = vld [vmem:[%s207 + $0xc8] sm:$0xff]
    %v234 = vld [vmem:[%s207 + $0xd0] sm:$0xff]
    %v235 = vld [vmem:[%s207 + $0xd8] sm:$0xff]
    %v236 = vld [vmem:[%s207 + $0xe0] sm:$0xff]
    %v237 = vld [vmem:[%s207 + $0xe8] sm:$0xff]
    %v238 = vld [vmem:[%s207 + $0xf0] sm:$0xff]
    %v239 = vld [vmem:[%s207 + $0xf8] sm:$0xff]
    %v240 = vld [vmem:[%s207 + $0x100] sm:$0xff]
    %v241 = vld [vmem:[%s207 + $0x108] sm:$0xff]
    %v242 = vld [vmem:[%s207 + $0x110] sm:$0xff]
    %v243 = vld [vmem:[%s207 + $0x118] sm:$0xff]
    %v244 = vld [vmem:[%s207 + $0x120] sm:$0xff]
    %v245 = vld [vmem:[%s207 + $0x128] sm:$0xff]
    %v246 = vld [vmem:[%s207 + $0x130] sm:$0xff]
    %v247 = vld [vmem:[%s207 + $0x138] sm:$0xff]
    %v248 = vld [vmem:[%s207 + $0x140] sm:$0xff]
    %v249 = vld [vmem:[%s207 + $0x148] sm:$0xff]
    %v250 = vld [vmem:[%s207 + $0x150] sm:$0xff]
    %v251 = vld [vmem:[%s207 + $0x158] sm:$0xff]
    %v252 = vld [vmem:[%s207 + $0x160] sm:$0xff]
    %v253 = vld [vmem:[%s207 + $0x168] sm:$0xff]
    %v254 = vld [vmem:[%s207 + $0x170] sm:$0xff]
    %v255 = vld [vmem:[%s207 + $0x178] sm:$0xff]
    %v256 = vld [vmem:[%s207 + $0x180] sm:$0xff]
    %v257 = vld [vmem:[%s207 + $0x188] sm:$0xff]
    %v258 = vld [vmem:[%s207 + $0x190] sm:$0xff]
    %v259 = vld [vmem:[%s207 + $0x198] sm:$0xff]
    %v260 = vld [vmem:[%s207 + $0x1a0] sm:$0xff]
    %v261 = vld [vmem:[%s207 + $0x1a8] sm:$0xff]
    %v262 = vld [vmem:[%s207 + $0x1b0] sm:$0xff]
    %v263 = vld [vmem:[%s207 + $0x1b8] sm:$0xff]
    %v264 = vld [vmem:[%s207 + $0x1c0] sm:$0xff]
    %v265 = vld [vmem:[%s207 + $0x1c8] sm:$0xff]
    %v266 = vld [vmem:[%s207 + $0x1d0] sm:$0xff]
    %v267 = vld [vmem:[%s207 + $0x1d8] sm:$0xff]
    %v268 = vld [vmem:[%s207 + $0x1e0] sm:$0xff]
    %v269 = vld [vmem:[%s207 + $0x1e8] sm:$0xff]
    %v270 = vld [vmem:[%s207 + $0x1f0] sm:$0xff]
    %v271 = vld [vmem:[%s207 + $0x1f8] sm:$0xff]
    %s272 = scalar_lea.vmem [#allocation7], 16
    %v273 = vld [vmem:[%s272] sm:$0xff]
    %v274 = vld [vmem:[%s272 + $0x8] sm:$0xff]
    %v275 = vlaneseq
    %v276 = vshrl.u32 %v275, 7
    %v277 = vsub.s32 0, %v276
    %v278 = vrot.slane %v273, %v277
    %v279 = vlaneseq
    %v280 = vshrl.u32 %v279, 7
    %v281 = vsub.s32 0, %v280
    %v282 = vrot.slane %v274, %v281
    %283 = vmatprep.subr.mxu0 %v209
    %284 = vmatpush1.msra.mxu0 %v208
    %285 = vmatprep.subr.mxu0 %v211
    %286 = vmatpush1.msra.mxu0 %v210
    %287 = vmatprep.subr.mxu0 %v213
    %288 = vmatpush1.msra.mxu0 %v212
    %289 = vmatprep.subr.mxu0 %v215
    %290 = vmatpush1.msra.mxu0 %v214
    %291 = vmatprep.subr.mxu0 %v217
    %292 = vmatpush1.msra.mxu0 %v216
    %293 = vmatprep.subr.mxu0 %v219
    %294 = vmatpush1.msra.mxu0 %v218
    %295 = vmatprep.subr.mxu0 %v221
    %296 = vmatpush1.msra.mxu0 %v220
    %297 = vmatprep.subr.mxu0 %v223
    %298 = vmatpush1.msra.mxu0 %v222
    %299 = vmatprep.subr.mxu0 %v225
    %300 = vmatpush1.msra.mxu0 %v224
    %301 = vmatprep.subr.mxu0 %v227
    %302 = vmatpush1.msra.mxu0 %v226
    %303 = vmatprep.subr.mxu0 %v229
    %304 = vmatpush1.msra.mxu0 %v228
    %305 = vmatprep.subr.mxu0 %v231
    %306 = vmatpush1.msra.mxu0 %v230
    %307 = vmatprep.subr.mxu0 %v233
    %308 = vmatpush1.msra.mxu0 %v232
    %309 = vmatprep.subr.mxu0 %v235
    %310 = vmatpush1.msra.mxu0 %v234
    %311 = vmatprep.subr.mxu0 %v237
    %312 = vmatpush1.msra.mxu0 %v236
    %313 = vmatprep.subr.mxu0 %v239
    %314 = vmatpush1.msra.mxu0 %v238
    %315 = vmatprep.subr.mxu0 %v241
    %316 = vmatpush1.msra.mxu0 %v240
    %317 = vmatprep.subr.mxu0 %v243
    %318 = vmatpush1.msra.mxu0 %v242
    %319 = vmatprep.subr.mxu0 %v245
    %320 = vmatpush1.msra.mxu0 %v244
    %321 = vmatprep.subr.mxu0 %v247
    %322 = vmatpush1.msra.mxu0 %v246
    %323 = vmatprep.subr.mxu0 %v249
    %324 = vmatpush1.msra.mxu0 %v248
    %325 = vmatprep.subr.mxu0 %v251
    %326 = vmatpush1.msra.mxu0 %v250
    %327 = vmatprep.subr.mxu0 %v253
    %328 = vmatpush1.msra.mxu0 %v252
    %329 = vmatprep.subr.mxu0 %v255
    %330 = vmatpush1.msra.mxu0 %v254
    %331 = vmatprep.subr.mxu0 %v257
    %332 = vmatpush1.msra.mxu0 %v256
    %333 = vmatprep.subr.mxu0 %v259
    %334 = vmatpush1.msra.mxu0 %v258
    %335 = vmatprep.subr.mxu0 %v261
    %336 = vmatpush1.msra.mxu0 %v260
    %337 = vmatprep.subr.mxu0 %v263
    %338 = vmatpush1.msra.mxu0 %v262
    %339 = vmatprep.subr.mxu0 %v265
    %340 = vmatpush1.msra.mxu0 %v264
    %341 = vmatprep.subr.mxu0 %v267
    %342 = vmatpush1.msra.mxu0 %v266
    %343 = vmatprep.subr.mxu0 %v269
    %344 = vmatpush1.msra.mxu0 %v268
    %345 = vmatprep.subr.mxu0 %v271
    %346 = vmatpush1.msra.mxu0 %v270
    %347 = vmatprep.mubr.f32.mxu0 %v206
    %348 = vmatmul.mubr.f32.gmra.mrb[0].mxu0 %v205
    %v349 = vpop.f32.mrb[0].mxu0
    %v350 = vadd.f32 %v278, %v349
    %v351 = vpop.f32.mrb[0].mxu0
    %v352 = vadd.f32 %v282, %v351
    %353 = vdwg.mxu0
    %vm354 = vcmp.gt.f32.partialorder %v350, 0.0
    %vm355 = vcmp.gt.f32.partialorder %v352, 0.0
    %v356 = vmul.f32 %v350, 0.2
    %v357 = vmul.f32 %v352, 0.2
    %v358 = vsel %vm354, %v350, %v356
    %v359 = vsel %vm355, %v352, %v357
    %s360 = scalar_lea.vmem [#allocation5], 1024
    %v361 = vld [vmem:[%s360] sm:$0xff]
    %v362 = vld [vmem:[%s360 + $0x8] sm:$0xff]
    %v363 = vld [vmem:[%s360 + $0x10] sm:$0xff]
    %v364 = vld [vmem:[%s360 + $0x18] sm:$0xff]
    %v365 = vld [vmem:[%s360 + $0x20] sm:$0xff]
    %v366 = vld [vmem:[%s360 + $0x28] sm:$0xff]
    %v367 = vld [vmem:[%s360 + $0x30] sm:$0xff]
    %v368 = vld [vmem:[%s360 + $0x38] sm:$0xff]
    %v369 = vld [vmem:[%s360 + $0x40] sm:$0xff]
    %v370 = vld [vmem:[%s360 + $0x48] sm:$0xff]
    %v371 = vld [vmem:[%s360 + $0x50] sm:$0xff]
    %v372 = vld [vmem:[%s360 + $0x58] sm:$0xff]
    %v373 = vld [vmem:[%s360 + $0x60] sm:$0xff]
    %v374 = vld [vmem:[%s360 + $0x68] sm:$0xff]
    %v375 = vld [vmem:[%s360 + $0x70] sm:$0xff]
    %v376 = vld [vmem:[%s360 + $0x78] sm:$0xff]
    %v377 = vld [vmem:[%s360 + $0x80] sm:$0xff]
    %v378 = vld [vmem:[%s360 + $0x88] sm:$0xff]
    %v379 = vld [vmem:[%s360 + $0x90] sm:$0xff]
    %v380 = vld [vmem:[%s360 + $0x98] sm:$0xff]
    %v381 = vld [vmem:[%s360 + $0xa0] sm:$0xff]
    %v382 = vld [vmem:[%s360 + $0xa8] sm:$0xff]
    %v383 = vld [vmem:[%s360 + $0xb0] sm:$0xff]
    %v384 = vld [vmem:[%s360 + $0xb8] sm:$0xff]
    %v385 = vld [vmem:[%s360 + $0xc0] sm:$0xff]
    %v386 = vld [vmem:[%s360 + $0xc8] sm:$0xff]
    %v387 = vld [vmem:[%s360 + $0xd0] sm:$0xff]
    %v388 = vld [vmem:[%s360 + $0xd8] sm:$0xff]
    %v389 = vld [vmem:[%s360 + $0xe0] sm:$0xff]
    %v390 = vld [vmem:[%s360 + $0xe8] sm:$0xff]
    %v391 = vld [vmem:[%s360 + $0xf0] sm:$0xff]
    %v392 = vld [vmem:[%s360 + $0xf8] sm:$0xff]
    %v393 = vld [vmem:[%s360 + $0x100] sm:$0xff]
    %v394 = vld [vmem:[%s360 + $0x108] sm:$0xff]
    %v395 = vld [vmem:[%s360 + $0x110] sm:$0xff]
    %v396 = vld [vmem:[%s360 + $0x118] sm:$0xff]
    %v397 = vld [vmem:[%s360 + $0x120] sm:$0xff]
    %v398 = vld [vmem:[%s360 + $0x128] sm:$0xff]
    %v399 = vld [vmem:[%s360 + $0x130] sm:$0xff]
    %v400 = vld [vmem:[%s360 + $0x138] sm:$0xff]
    %v401 = vld [vmem:[%s360 + $0x140] sm:$0xff]
    %v402 = vld [vmem:[%s360 + $0x148] sm:$0xff]
    %v403 = vld [vmem:[%s360 + $0x150] sm:$0xff]
    %v404 = vld [vmem:[%s360 + $0x158] sm:$0xff]
    %v405 = vld [vmem:[%s360 + $0x160] sm:$0xff]
    %v406 = vld [vmem:[%s360 + $0x168] sm:$0xff]
    %v407 = vld [vmem:[%s360 + $0x170] sm:$0xff]
    %v408 = vld [vmem:[%s360 + $0x178] sm:$0xff]
    %v409 = vld [vmem:[%s360 + $0x180] sm:$0xff]
    %v410 = vld [vmem:[%s360 + $0x188] sm:$0xff]
    %v411 = vld [vmem:[%s360 + $0x190] sm:$0xff]
    %v412 = vld [vmem:[%s360 + $0x198] sm:$0xff]
    %v413 = vld [vmem:[%s360 + $0x1a0] sm:$0xff]
    %v414 = vld [vmem:[%s360 + $0x1a8] sm:$0xff]
    %v415 = vld [vmem:[%s360 + $0x1b0] sm:$0xff]
    %v416 = vld [vmem:[%s360 + $0x1b8] sm:$0xff]
    %v417 = vld [vmem:[%s360 + $0x1c0] sm:$0xff]
    %v418 = vld [vmem:[%s360 + $0x1c8] sm:$0xff]
    %v419 = vld [vmem:[%s360 + $0x1d0] sm:$0xff]
    %v420 = vld [vmem:[%s360 + $0x1d8] sm:$0xff]
    %v421 = vld [vmem:[%s360 + $0x1e0] sm:$0xff]
    %v422 = vld [vmem:[%s360 + $0x1e8] sm:$0xff]
    %v423 = vld [vmem:[%s360 + $0x1f0] sm:$0xff]
    %v424 = vld [vmem:[%s360 + $0x1f8] sm:$0xff]
    %s425 = scalar_lea.vmem [#allocation7], 32
    %v426 = vld [vmem:[%s425] sm:$0xff]
    %v427 = vld [vmem:[%s425 + $0x8] sm:$0xff]
    %v428 = vlaneseq
    %v429 = vshrl.u32 %v428, 7
    %v430 = vsub.s32 0, %v429
    %v431 = vrot.slane %v426, %v430
    %v432 = vlaneseq
    %v433 = vshrl.u32 %v432, 7
    %v434 = vsub.s32 0, %v433
    %v435 = vrot.slane %v427, %v434
    %436 = vmatprep.subr.mxu0 %v362
    %437 = vmatpush1.msra.mxu0 %v361
    %438 = vmatprep.subr.mxu0 %v364
    %439 = vmatpush1.msra.mxu0 %v363
    %440 = vmatprep.subr.mxu0 %v366
    %441 = vmatpush1.msra.mxu0 %v365
    %442 = vmatprep.subr.mxu0 %v368
    %443 = vmatpush1.msra.mxu0 %v367
    %444 = vmatprep.subr.mxu0 %v370
    %445 = vmatpush1.msra.mxu0 %v369
    %446 = vmatprep.subr.mxu0 %v372
    %447 = vmatpush1.msra.mxu0 %v371
    %448 = vmatprep.subr.mxu0 %v374
    %449 = vmatpush1.msra.mxu0 %v373
    %450 = vmatprep.subr.mxu0 %v376
    %451 = vmatpush1.msra.mxu0 %v375
    %452 = vmatprep.subr.mxu0 %v378
    %453 = vmatpush1.msra.mxu0 %v377
    %454 = vmatprep.subr.mxu0 %v380
    %455 = vmatpush1.msra.mxu0 %v379
    %456 = vmatprep.subr.mxu0 %v382
    %457 = vmatpush1.msra.mxu0 %v381
    %458 = vmatprep.subr.mxu0 %v384
    %459 = vmatpush1.msra.mxu0 %v383
    %460 = vmatprep.subr.mxu0 %v386
    %461 = vmatpush1.msra.mxu0 %v385
    %462 = vmatprep.subr.mxu0 %v388
    %463 = vmatpush1.msra.mxu0 %v387
    %464 = vmatprep.subr.mxu0 %v390
    %465 = vmatpush1.msra.mxu0 %v389
    %466 = vmatprep.subr.mxu0 %v392
    %467 = vmatpush1.msra.mxu0 %v391
    %468 = vmatprep.subr.mxu0 %v394
    %469 = vmatpush1.msra.mxu0 %v393
    %470 = vmatprep.subr.mxu0 %v396
    %471 = vmatpush1.msra.mxu0 %v395
    %472 = vmatprep.subr.mxu0 %v398
    %473 = vmatpush1.msra.mxu0 %v397
    %474 = vmatprep.subr.mxu0 %v400
    %475 = vmatpush1.msra.mxu0 %v399
    %476 = vmatprep.subr.mxu0 %v402
    %477 = vmatpush1.msra.mxu0 %v401
    %478 = vmatprep.subr.mxu0 %v404
    %479 = vmatpush1.msra.mxu0 %v403
    %480 = vmatprep.subr.mxu0 %v406
    %481 = vmatpush1.msra.mxu0 %v405
    %482 = vmatprep.subr.mxu0 %v408
    %483 = vmatpush1.msra.mxu0 %v407
    %484 = vmatprep.subr.mxu0 %v410
    %485 = vmatpush1.msra.mxu0 %v409
    %486 = vmatprep.subr.mxu0 %v412
    %487 = vmatpush1.msra.mxu0 %v411
    %488 = vmatprep.subr.mxu0 %v414
    %489 = vmatpush1.msra.mxu0 %v413
    %490 = vmatprep.subr.mxu0 %v416
    %491 = vmatpush1.msra.mxu0 %v415
    %492 = vmatprep.subr.mxu0 %v418
    %493 = vmatpush1.msra.mxu0 %v417
    %494 = vmatprep.subr.mxu0 %v420
    %495 = vmatpush1.msra.mxu0 %v419
    %496 = vmatprep.subr.mxu0 %v422
    %497 = vmatpush1.msra.mxu0 %v421
    %498 = vmatprep.subr.mxu0 %v424
    %499 = vmatpush1.msra.mxu0 %v423
    %500 = vmatprep.mubr.f32.mxu0 %v359
    %501 = vmatmul.mubr.f32.gmra.mrb[0].mxu0 %v358
    %v502 = vpop.f32.mrb[0].mxu0
    %v503 = vadd.f32 %v431, %v502
    %v504 = vpop.f32.mrb[0].mxu0
    %v505 = vadd.f32 %v435, %v504
    %506 = vdwg.mxu0
    %vm507 = vcmp.gt.f32.partialorder %v503, 0.0
    %vm508 = vcmp.gt.f32.partialorder %v505, 0.0
    %v509 = vmul.f32 %v503, 0.2
    %v510 = vmul.f32 %v505, 0.2
    %v511 = vsel %vm507, %v503, %v509
    %v512 = vsel %vm508, %v505, %v510
    %s513 = scalar_lea.vmem [#allocation5], 1536
    %v514 = vld [vmem:[%s513] sm:$0xff]
    %v515 = vld [vmem:[%s513 + $0x8] sm:$0xff]
    %v516 = vld [vmem:[%s513 + $0x10] sm:$0xff]
    %v517 = vld [vmem:[%s513 + $0x18] sm:$0xff]
    %v518 = vld [vmem:[%s513 + $0x20] sm:$0xff]
    %v519 = vld [vmem:[%s513 + $0x28] sm:$0xff]
    %v520 = vld [vmem:[%s513 + $0x30] sm:$0xff]
    %v521 = vld [vmem:[%s513 + $0x38] sm:$0xff]
    %v522 = vld [vmem:[%s513 + $0x40] sm:$0xff]
    %v523 = vld [vmem:[%s513 + $0x48] sm:$0xff]
    %v524 = vld [vmem:[%s513 + $0x50] sm:$0xff]
    %v525 = vld [vmem:[%s513 + $0x58] sm:$0xff]
    %v526 = vld [vmem:[%s513 + $0x60] sm:$0xff]
    %v527 = vld [vmem:[%s513 + $0x68] sm:$0xff]
    %v528 = vld [vmem:[%s513 + $0x70] sm:$0xff]
    %v529 = vld [vmem:[%s513 + $0x78] sm:$0xff]
    %v530 = vld [vmem:[%s513 + $0x80] sm:$0xff]
    %v531 = vld [vmem:[%s513 + $0x88] sm:$0xff]
    %v532 = vld [vmem:[%s513 + $0x90] sm:$0xff]
    %v533 = vld [vmem:[%s513 + $0x98] sm:$0xff]
    %v534 = vld [vmem:[%s513 + $0xa0] sm:$0xff]
    %v535 = vld [vmem:[%s513 + $0xa8] sm:$0xff]
    %v536 = vld [vmem:[%s513 + $0xb0] sm:$0xff]
    %v537 = vld [vmem:[%s513 + $0xb8] sm:$0xff]
    %v538 = vld [vmem:[%s513 + $0xc0] sm:$0xff]
    %v539 = vld [vmem:[%s513 + $0xc8] sm:$0xff]
    %v540 = vld [vmem:[%s513 + $0xd0] sm:$0xff]
    %v541 = vld [vmem:[%s513 + $0xd8] sm:$0xff]
    %v542 = vld [vmem:[%s513 + $0xe0] sm:$0xff]
    %v543 = vld [vmem:[%s513 + $0xe8] sm:$0xff]
    %v544 = vld [vmem:[%s513 + $0xf0] sm:$0xff]
    %v545 = vld [vmem:[%s513 + $0xf8] sm:$0xff]
    %v546 = vld [vmem:[%s513 + $0x100] sm:$0xff]
    %v547 = vld [vmem:[%s513 + $0x108] sm:$0xff]
    %v548 = vld [vmem:[%s513 + $0x110] sm:$0xff]
    %v549 = vld [vmem:[%s513 + $0x118] sm:$0xff]
    %v550 = vld [vmem:[%s513 + $0x120] sm:$0xff]
    %v551 = vld [vmem:[%s513 + $0x128] sm:$0xff]
    %v552 = vld [vmem:[%s513 + $0x130] sm:$0xff]
    %v553 = vld [vmem:[%s513 + $0x138] sm:$0xff]
    %v554 = vld [vmem:[%s513 + $0x140] sm:$0xff]
    %v555 = vld [vmem:[%s513 + $0x148] sm:$0xff]
    %v556 = vld [vmem:[%s513 + $0x150] sm:$0xff]
    %v557 = vld [vmem:[%s513 + $0x158] sm:$0xff]
    %v558 = vld [vmem:[%s513 + $0x160] sm:$0xff]
    %v559 = vld [vmem:[%s513 + $0x168] sm:$0xff]
    %v560 = vld [vmem:[%s513 + $0x170] sm:$0xff]
    %v561 = vld [vmem:[%s513 + $0x178] sm:$0xff]
    %v562 = vld [vmem:[%s513 + $0x180] sm:$0xff]
    %v563 = vld [vmem:[%s513 + $0x188] sm:$0xff]
    %v564 = vld [vmem:[%s513 + $0x190] sm:$0xff]
    %v565 = vld [vmem:[%s513 + $0x198] sm:$0xff]
    %v566 = vld [vmem:[%s513 + $0x1a0] sm:$0xff]
    %v567 = vld [vmem:[%s513 + $0x1a8] sm:$0xff]
    %v568 = vld [vmem:[%s513 + $0x1b0] sm:$0xff]
    %v569 = vld [vmem:[%s513 + $0x1b8] sm:$0xff]
    %v570 = vld [vmem:[%s513 + $0x1c0] sm:$0xff]
    %v571 = vld [vmem:[%s513 + $0x1c8] sm:$0xff]
    %v572 = vld [vmem:[%s513 + $0x1d0] sm:$0xff]
    %v573 = vld [vmem:[%s513 + $0x1d8] sm:$0xff]
    %v574 = vld [vmem:[%s513 + $0x1e0] sm:$0xff]
    %v575 = vld [vmem:[%s513 + $0x1e8] sm:$0xff]
    %v576 = vld [vmem:[%s513 + $0x1f0] sm:$0xff]
    %v577 = vld [vmem:[%s513 + $0x1f8] sm:$0xff]
    %s578 = scalar_lea.vmem [#allocation7], 48
    %v579 = vld [vmem:[%s578] sm:$0xff]
    %v580 = vld [vmem:[%s578 + $0x8] sm:$0xff]
    %v581 = vlaneseq
    %v582 = vshrl.u32 %v581, 7
    %v583 = vsub.s32 0, %v582
    %v584 = vrot.slane %v579, %v583
    %v585 = vlaneseq
    %v586 = vshrl.u32 %v585, 7
    %v587 = vsub.s32 0, %v586
    %v588 = vrot.slane %v580, %v587
    %589 = vmatprep.subr.mxu0 %v515
    %590 = vmatpush1.msra.mxu0 %v514
    %591 = vmatprep.subr.mxu0 %v517
    %592 = vmatpush1.msra.mxu0 %v516
    %593 = vmatprep.subr.mxu0 %v519
    %594 = vmatpush1.msra.mxu0 %v518
    %595 = vmatprep.subr.mxu0 %v521
    %596 = vmatpush1.msra.mxu0 %v520
    %597 = vmatprep.subr.mxu0 %v523
    %598 = vmatpush1.msra.mxu0 %v522
    %599 = vmatprep.subr.mxu0 %v525
    %600 = vmatpush1.msra.mxu0 %v524
    %601 = vmatprep.subr.mxu0 %v527
    %602 = vmatpush1.msra.mxu0 %v526
    %603 = vmatprep.subr.mxu0 %v529
    %604 = vmatpush1.msra.mxu0 %v528
    %605 = vmatprep.subr.mxu0 %v531
    %606 = vmatpush1.msra.mxu0 %v530
    %607 = vmatprep.subr.mxu0 %v533
    %608 = vmatpush1.msra.mxu0 %v532
    %609 = vmatprep.subr.mxu0 %v535
    %610 = vmatpush1.msra.mxu0 %v534
    %611 = vmatprep.subr.mxu0 %v537
    %612 = vmatpush1.msra.mxu0 %v536
    %613 = vmatprep.subr.mxu0 %v539
    %614 = vmatpush1.msra.mxu0 %v538
    %615 = vmatprep.subr.mxu0 %v541
    %616 = vmatpush1.msra.mxu0 %v540
    %617 = vmatprep.subr.mxu0 %v543
    %618 = vmatpush1.msra.mxu0 %v542
    %619 = vmatprep.subr.mxu0 %v545
    %620 = vmatpush1.msra.mxu0 %v544
    %621 = vmatprep.subr.mxu0 %v547
    %622 = vmatpush1.msra.mxu0 %v546
    %623 = vmatprep.subr.mxu0 %v549
    %624 = vmatpush1.msra.mxu0 %v548
    %625 = vmatprep.subr.mxu0 %v551
    %626 = vmatpush1.msra.mxu0 %v550
    %627 = vmatprep.subr.mxu0 %v553
    %628 = vmatpush1.msra.mxu0 %v552
    %629 = vmatprep.subr.mxu0 %v555
    %630 = vmatpush1.msra.mxu0 %v554
    %631 = vmatprep.subr.mxu0 %v557
    %632 = vmatpush1.msra.mxu0 %v556
    %633 = vmatprep.subr.mxu0 %v559
    %634 = vmatpush1.msra.mxu0 %v558
    %635 = vmatprep.subr.mxu0 %v561
    %636 = vmatpush1.msra.mxu0 %v560
    %637 = vmatprep.subr.mxu0 %v563
    %638 = vmatpush1.msra.mxu0 %v562
    %639 = vmatprep.subr.mxu0 %v565
    %640 = vmatpush1.msra.mxu0 %v564
    %641 = vmatprep.subr.mxu0 %v567
    %642 = vmatpush1.msra.mxu0 %v566
    %643 = vmatprep.subr.mxu0 %v569
    %644 = vmatpush1.msra.mxu0 %v568
    %645 = vmatprep.subr.mxu0 %v571
    %646 = vmatpush1.msra.mxu0 %v570
    %647 = vmatprep.subr.mxu0 %v573
    %648 = vmatpush1.msra.mxu0 %v572
    %649 = vmatprep.subr.mxu0 %v575
    %650 = vmatpush1.msra.mxu0 %v574
    %651 = vmatprep.subr.mxu0 %v577
    %652 = vmatpush1.msra.mxu0 %v576
    %653 = vmatprep.mubr.f32.mxu0 %v512
    %654 = vmatmul.mubr.f32.gmra.mrb[0].mxu0 %v511
    %v655 = vpop.f32.mrb[0].mxu0
    %v656 = vadd.f32 %v584, %v655
    %v657 = vpop.f32.mrb[0].mxu0
    %v658 = vadd.f32 %v588, %v657
    %659 = vdwg.mxu0
    %vm660 = vcmp.gt.f32.partialorder %v656, 0.0
    %vm661 = vcmp.gt.f32.partialorder %v658, 0.0
    %v662 = vmul.f32 %v656, 0.2
    %v663 = vmul.f32 %v658, 0.2
    %v664 = vsel %vm660, %v656, %v662
    %v665 = vsel %vm661, %v658, %v663
    %s666 = scalar_lea.vmem [#allocation5], 2048
    %v667 = vld [vmem:[%s666] sm:$0xff]
    %v668 = vld [vmem:[%s666 + $0x8] sm:$0xff]
    %v669 = vld [vmem:[%s666 + $0x10] sm:$0xff]
    %v670 = vld [vmem:[%s666 + $0x18] sm:$0xff]
    %v671 = vld [vmem:[%s666 + $0x20] sm:$0xff]
    %v672 = vld [vmem:[%s666 + $0x28] sm:$0xff]
    %v673 = vld [vmem:[%s666 + $0x30] sm:$0xff]
    %v674 = vld [vmem:[%s666 + $0x38] sm:$0xff]
    %v675 = vld [vmem:[%s666 + $0x40] sm:$0xff]
    %v676 = vld [vmem:[%s666 + $0x48] sm:$0xff]
    %v677 = vld [vmem:[%s666 + $0x50] sm:$0xff]
    %v678 = vld [vmem:[%s666 + $0x58] sm:$0xff]
    %v679 = vld [vmem:[%s666 + $0x60] sm:$0xff]
    %v680 = vld [vmem:[%s666 + $0x68] sm:$0xff]
    %v681 = vld [vmem:[%s666 + $0x70] sm:$0xff]
    %v682 = vld [vmem:[%s666 + $0x78] sm:$0xff]
    %v683 = vld [vmem:[%s666 + $0x80] sm:$0xff]
    %v684 = vld [vmem:[%s666 + $0x88] sm:$0xff]
    %v685 = vld [vmem:[%s666 + $0x90] sm:$0xff]
    %v686 = vld [vmem:[%s666 + $0x98] sm:$0xff]
    %v687 = vld [vmem:[%s666 + $0xa0] sm:$0xff]
    %v688 = vld [vmem:[%s666 + $0xa8] sm:$0xff]
    %v689 = vld [vmem:[%s666 + $0xb0] sm:$0xff]
    %v690 = vld [vmem:[%s666 + $0xb8] sm:$0xff]
    %v691 = vld [vmem:[%s666 + $0xc0] sm:$0xff]
    %v692 = vld [vmem:[%s666 + $0xc8] sm:$0xff]
    %v693 = vld [vmem:[%s666 + $0xd0] sm:$0xff]
    %v694 = vld [vmem:[%s666 + $0xd8] sm:$0xff]
    %v695 = vld [vmem:[%s666 + $0xe0] sm:$0xff]
    %v696 = vld [vmem:[%s666 + $0xe8] sm:$0xff]
    %v697 = vld [vmem:[%s666 + $0xf0] sm:$0xff]
    %v698 = vld [vmem:[%s666 + $0xf8] sm:$0xff]
    %v699 = vld [vmem:[%s666 + $0x100] sm:$0xff]
    %v700 = vld [vmem:[%s666 + $0x108] sm:$0xff]
    %v701 = vld [vmem:[%s666 + $0x110] sm:$0xff]
    %v702 = vld [vmem:[%s666 + $0x118] sm:$0xff]
    %v703 = vld [vmem:[%s666 + $0x120] sm:$0xff]
    %v704 = vld [vmem:[%s666 + $0x128] sm:$0xff]
    %v705 = vld [vmem:[%s666 + $0x130] sm:$0xff]
    %v706 = vld [vmem:[%s666 + $0x138] sm:$0xff]
    %v707 = vld [vmem:[%s666 + $0x140] sm:$0xff]
    %v708 = vld [vmem:[%s666 + $0x148] sm:$0xff]
    %v709 = vld [vmem:[%s666 + $0x150] sm:$0xff]
    %v710 = vld [vmem:[%s666 + $0x158] sm:$0xff]
    %v711 = vld [vmem:[%s666 + $0x160] sm:$0xff]
    %v712 = vld [vmem:[%s666 + $0x168] sm:$0xff]
    %v713 = vld [vmem:[%s666 + $0x170] sm:$0xff]
    %v714 = vld [vmem:[%s666 + $0x178] sm:$0xff]
    %v715 = vld [vmem:[%s666 + $0x180] sm:$0xff]
    %v716 = vld [vmem:[%s666 + $0x188] sm:$0xff]
    %v717 = vld [vmem:[%s666 + $0x190] sm:$0xff]
    %v718 = vld [vmem:[%s666 + $0x198] sm:$0xff]
    %v719 = vld [vmem:[%s666 + $0x1a0] sm:$0xff]
    %v720 = vld [vmem:[%s666 + $0x1a8] sm:$0xff]
    %v721 = vld [vmem:[%s666 + $0x1b0] sm:$0xff]
    %v722 = vld [vmem:[%s666 + $0x1b8] sm:$0xff]
    %v723 = vld [vmem:[%s666 + $0x1c0] sm:$0xff]
    %v724 = vld [vmem:[%s666 + $0x1c8] sm:$0xff]
    %v725 = vld [vmem:[%s666 + $0x1d0] sm:$0xff]
    %v726 = vld [vmem:[%s666 + $0x1d8] sm:$0xff]
    %v727 = vld [vmem:[%s666 + $0x1e0] sm:$0xff]
    %v728 = vld [vmem:[%s666 + $0x1e8] sm:$0xff]
    %v729 = vld [vmem:[%s666 + $0x1f0] sm:$0xff]
    %v730 = vld [vmem:[%s666 + $0x1f8] sm:$0xff]
    %s731 = scalar_lea.vmem [#allocation7], 64
    %v732 = vld [vmem:[%s731] sm:$0xff]
    %v733 = vld [vmem:[%s731 + $0x8] sm:$0xff]
    %v734 = vlaneseq
    %v735 = vshrl.u32 %v734, 7
    %v736 = vsub.s32 0, %v735
    %v737 = vrot.slane %v732, %v736
    %v738 = vlaneseq
    %v739 = vshrl.u32 %v738, 7
    %v740 = vsub.s32 0, %v739
    %v741 = vrot.slane %v733, %v740
    %742 = vmatprep.subr.mxu0 %v668
    %743 = vmatpush1.msra.mxu0 %v667
    %744 = vmatprep.subr.mxu0 %v670
    %745 = vmatpush1.msra.mxu0 %v669
    %746 = vmatprep.subr.mxu0 %v672
    %747 = vmatpush1.msra.mxu0 %v671
    %748 = vmatprep.subr.mxu0 %v674
    %749 = vmatpush1.msra.mxu0 %v673
    %750 = vmatprep.subr.mxu0 %v676
    %751 = vmatpush1.msra.mxu0 %v675
    %752 = vmatprep.subr.mxu0 %v678
    %753 = vmatpush1.msra.mxu0 %v677
    %754 = vmatprep.subr.mxu0 %v680
    %755 = vmatpush1.msra.mxu0 %v679
    %756 = vmatprep.subr.mxu0 %v682
    %757 = vmatpush1.msra.mxu0 %v681
    %758 = vmatprep.subr.mxu0 %v684
    %759 = vmatpush1.msra.mxu0 %v683
    %760 = vmatprep.subr.mxu0 %v686
    %761 = vmatpush1.msra.mxu0 %v685
    %762 = vmatprep.subr.mxu0 %v688
    %763 = vmatpush1.msra.mxu0 %v687
    %764 = vmatprep.subr.mxu0 %v690
    %765 = vmatpush1.msra.mxu0 %v689
    %766 = vmatprep.subr.mxu0 %v692
    %767 = vmatpush1.msra.mxu0 %v691
    %768 = vmatprep.subr.mxu0 %v694
    %769 = vmatpush1.msra.mxu0 %v693
    %770 = vmatprep.subr.mxu0 %v696
    %771 = vmatpush1.msra.mxu0 %v695
    %772 = vmatprep.subr.mxu0 %v698
    %773 = vmatpush1.msra.mxu0 %v697
    %774 = vmatprep.subr.mxu0 %v700
    %775 = vmatpush1.msra.mxu0 %v699
    %776 = vmatprep.subr.mxu0 %v702
    %777 = vmatpush1.msra.mxu0 %v701
    %778 = vmatprep.subr.mxu0 %v704
    %779 = vmatpush1.msra.mxu0 %v703
    %780 = vmatprep.subr.mxu0 %v706
    %781 = vmatpush1.msra.mxu0 %v705
    %782 = vmatprep.subr.mxu0 %v708
    %783 = vmatpush1.msra.mxu0 %v707
    %784 = vmatprep.subr.mxu0 %v710
    %785 = vmatpush1.msra.mxu0 %v709
    %786 = vmatprep.subr.mxu0 %v712
    %787 = vmatpush1.msra.mxu0 %v711
    %788 = vmatprep.subr.mxu0 %v714
    %789 = vmatpush1.msra.mxu0 %v713
    %790 = vmatprep.subr.mxu0 %v716
    %791 = vmatpush1.msra.mxu0 %v715
    %792 = vmatprep.subr.mxu0 %v718
    %793 = vmatpush1.msra.mxu0 %v717
    %794 = vmatprep.subr.mxu0 %v720
    %795 = vmatpush1.msra.mxu0 %v719
    %796 = vmatprep.subr.mxu0 %v722
    %797 = vmatpush1.msra.mxu0 %v721
    %798 = vmatprep.subr.mxu0 %v724
    %799 = vmatpush1.msra.mxu0 %v723
    %800 = vmatprep.subr.mxu0 %v726
    %801 = vmatpush1.msra.mxu0 %v725
    %802 = vmatprep.subr.mxu0 %v728
    %803 = vmatpush1.msra.mxu0 %v727
    %804 = vmatprep.subr.mxu0 %v730
    %805 = vmatpush1.msra.mxu0 %v729
    %806 = vmatprep.mubr.f32.mxu0 %v665
    %807 = vmatmul.mubr.f32.gmra.mrb[0].mxu0 %v664
    %v808 = vpop.f32.mrb[0].mxu0
    %v809 = vadd.f32 %v737, %v808
    %v810 = vpop.f32.mrb[0].mxu0
    %v811 = vadd.f32 %v741, %v810
    %812 = vdwg.mxu0
    %vm813 = vcmp.gt.f32.partialorder %v809, 0.0
    %vm814 = vcmp.gt.f32.partialorder %v811, 0.0
    %v815 = vmul.f32 %v809, 0.2
    %v816 = vmul.f32 %v811, 0.2
    %v817 = vsel %vm813, %v809, %v815
    %v818 = vsel %vm814, %v811, %v816
    %s819 = scalar_lea.vmem [#allocation5], 2560
    %v820 = vld [vmem:[%s819] sm:$0xff]
    %v821 = vld [vmem:[%s819 + $0x8] sm:$0xff]
    %v822 = vld [vmem:[%s819 + $0x10] sm:$0xff]
    %v823 = vld [vmem:[%s819 + $0x18] sm:$0xff]
    %v824 = vld [vmem:[%s819 + $0x20] sm:$0xff]
    %v825 = vld [vmem:[%s819 + $0x28] sm:$0xff]
    %v826 = vld [vmem:[%s819 + $0x30] sm:$0xff]
    %v827 = vld [vmem:[%s819 + $0x38] sm:$0xff]
    %v828 = vld [vmem:[%s819 + $0x40] sm:$0xff]
    %v829 = vld [vmem:[%s819 + $0x48] sm:$0xff]
    %v830 = vld [vmem:[%s819 + $0x50] sm:$0xff]
    %v831 = vld [vmem:[%s819 + $0x58] sm:$0xff]
    %v832 = vld [vmem:[%s819 + $0x60] sm:$0xff]
    %v833 = vld [vmem:[%s819 + $0x68] sm:$0xff]
    %v834 = vld [vmem:[%s819 + $0x70] sm:$0xff]
    %v835 = vld [vmem:[%s819 + $0x78] sm:$0xff]
    %v836 = vld [vmem:[%s819 + $0x80] sm:$0xff]
    %v837 = vld [vmem:[%s819 + $0x88] sm:$0xff]
    %v838 = vld [vmem:[%s819 + $0x90] sm:$0xff]
    %v839 = vld [vmem:[%s819 + $0x98] sm:$0xff]
    %v840 = vld [vmem:[%s819 + $0xa0] sm:$0xff]
    %v841 = vld [vmem:[%s819 + $0xa8] sm:$0xff]
    %v842 = vld [vmem:[%s819 + $0xb0] sm:$0xff]
    %v843 = vld [vmem:[%s819 + $0xb8] sm:$0xff]
    %v844 = vld [vmem:[%s819 + $0xc0] sm:$0xff]
    %v845 = vld [vmem:[%s819 + $0xc8] sm:$0xff]
    %v846 = vld [vmem:[%s819 + $0xd0] sm:$0xff]
    %v847 = vld [vmem:[%s819 + $0xd8] sm:$0xff]
    %v848 = vld [vmem:[%s819 + $0xe0] sm:$0xff]
    %v849 = vld [vmem:[%s819 + $0xe8] sm:$0xff]
    %v850 = vld [vmem:[%s819 + $0xf0] sm:$0xff]
    %v851 = vld [vmem:[%s819 + $0xf8] sm:$0xff]
    %v852 = vld [vmem:[%s819 + $0x100] sm:$0xff]
    %v853 = vld [vmem:[%s819 + $0x108] sm:$0xff]
    %v854 = vld [vmem:[%s819 + $0x110] sm:$0xff]
    %v855 = vld [vmem:[%s819 + $0x118] sm:$0xff]
    %v856 = vld [vmem:[%s819 + $0x120] sm:$0xff]
    %v857 = vld [vmem:[%s819 + $0x128] sm:$0xff]
    %v858 = vld [vmem:[%s819 + $0x130] sm:$0xff]
    %v859 = vld [vmem:[%s819 + $0x138] sm:$0xff]
    %v860 = vld [vmem:[%s819 + $0x140] sm:$0xff]
    %v861 = vld [vmem:[%s819 + $0x148] sm:$0xff]
    %v862 = vld [vmem:[%s819 + $0x150] sm:$0xff]
    %v863 = vld [vmem:[%s819 + $0x158] sm:$0xff]
    %v864 = vld [vmem:[%s819 + $0x160] sm:$0xff]
    %v865 = vld [vmem:[%s819 + $0x168] sm:$0xff]
    %v866 = vld [vmem:[%s819 + $0x170] sm:$0xff]
    %v867 = vld [vmem:[%s819 + $0x178] sm:$0xff]
    %v868 = vld [vmem:[%s819 + $0x180] sm:$0xff]
    %v869 = vld [vmem:[%s819 + $0x188] sm:$0xff]
    %v870 = vld [vmem:[%s819 + $0x190] sm:$0xff]
    %v871 = vld [vmem:[%s819 + $0x198] sm:$0xff]
    %v872 = vld [vmem:[%s819 + $0x1a0] sm:$0xff]
    %v873 = vld [vmem:[%s819 + $0x1a8] sm:$0xff]
    %v874 = vld [vmem:[%s819 + $0x1b0] sm:$0xff]
    %v875 = vld [vmem:[%s819 + $0x1b8] sm:$0xff]
    %v876 = vld [vmem:[%s819 + $0x1c0] sm:$0xff]
    %v877 = vld [vmem:[%s819 + $0x1c8] sm:$0xff]
    %v878 = vld [vmem:[%s819 + $0x1d0] sm:$0xff]
    %v879 = vld [vmem:[%s819 + $0x1d8] sm:$0xff]
    %v880 = vld [vmem:[%s819 + $0x1e0] sm:$0xff]
    %v881 = vld [vmem:[%s819 + $0x1e8] sm:$0xff]
    %v882 = vld [vmem:[%s819 + $0x1f0] sm:$0xff]
    %v883 = vld [vmem:[%s819 + $0x1f8] sm:$0xff]
    %s884 = scalar_lea.vmem [#allocation7], 80
    %v885 = vld [vmem:[%s884] sm:$0xff]
    %v886 = vld [vmem:[%s884 + $0x8] sm:$0xff]
    %v887 = vlaneseq
    %v888 = vshrl.u32 %v887, 7
    %v889 = vsub.s32 0, %v888
    %v890 = vrot.slane %v885, %v889
    %v891 = vlaneseq
    %v892 = vshrl.u32 %v891, 7
    %v893 = vsub.s32 0, %v892
    %v894 = vrot.slane %v886, %v893
    %895 = vmatprep.subr.mxu0 %v821
    %896 = vmatpush1.msra.mxu0 %v820
    %897 = vmatprep.subr.mxu0 %v823
    %898 = vmatpush1.msra.mxu0 %v822
    %899 = vmatprep.subr.mxu0 %v825
    %900 = vmatpush1.msra.mxu0 %v824
    %901 = vmatprep.subr.mxu0 %v827
    %902 = vmatpush1.msra.mxu0 %v826
    %903 = vmatprep.subr.mxu0 %v829
    %904 = vmatpush1.msra.mxu0 %v828
    %905 = vmatprep.subr.mxu0 %v831
    %906 = vmatpush1.msra.mxu0 %v830
    %907 = vmatprep.subr.mxu0 %v833
    %908 = vmatpush1.msra.mxu0 %v832
    %909 = vmatprep.subr.mxu0 %v835
    %910 = vmatpush1.msra.mxu0 %v834
    %911 = vmatprep.subr.mxu0 %v837
    %912 = vmatpush1.msra.mxu0 %v836
    %913 = vmatprep.subr.mxu0 %v839
    %914 = vmatpush1.msra.mxu0 %v838
    %915 = vmatprep.subr.mxu0 %v841
    %916 = vmatpush1.msra.mxu0 %v840
    %917 = vmatprep.subr.mxu0 %v843
    %918 = vmatpush1.msra.mxu0 %v842
    %919 = vmatprep.subr.mxu0 %v845
    %920 = vmatpush1.msra.mxu0 %v844
    %921 = vmatprep.subr.mxu0 %v847
    %922 = vmatpush1.msra.mxu0 %v846
    %923 = vmatprep.subr.mxu0 %v849
    %924 = vmatpush1.msra.mxu0 %v848
    %925 = vmatprep.subr.mxu0 %v851
    %926 = vmatpush1.msra.mxu0 %v850
    %927 = vmatprep.subr.mxu0 %v853
    %928 = vmatpush1.msra.mxu0 %v852
    %929 = vmatprep.subr.mxu0 %v855
    %930 = vmatpush1.msra.mxu0 %v854
    %931 = vmatprep.subr.mxu0 %v857
    %932 = vmatpush1.msra.mxu0 %v856
    %933 = vmatprep.subr.mxu0 %v859
    %934 = vmatpush1.msra.mxu0 %v858
    %935 = vmatprep.subr.mxu0 %v861
    %936 = vmatpush1.msra.mxu0 %v860
    %937 = vmatprep.subr.mxu0 %v863
    %938 = vmatpush1.msra.mxu0 %v862
    %939 = vmatprep.subr.mxu0 %v865
    %940 = vmatpush1.msra.mxu0 %v864
    %941 = vmatprep.subr.mxu0 %v867
    %942 = vmatpush1.msra.mxu0 %v866
    %943 = vmatprep.subr.mxu0 %v869
    %944 = vmatpush1.msra.mxu0 %v868
    %945 = vmatprep.subr.mxu0 %v871
    %946 = vmatpush1.msra.mxu0 %v870
    %947 = vmatprep.subr.mxu0 %v873
    %948 = vmatpush1.msra.mxu0 %v872
    %949 = vmatprep.subr.mxu0 %v875
    %950 = vmatpush1.msra.mxu0 %v874
    %951 = vmatprep.subr.mxu0 %v877
    %952 = vmatpush1.msra.mxu0 %v876
    %953 = vmatprep.subr.mxu0 %v879
    %954 = vmatpush1.msra.mxu0 %v878
    %955 = vmatprep.subr.mxu0 %v881
    %956 = vmatpush1.msra.mxu0 %v880
    %957 = vmatprep.subr.mxu0 %v883
    %958 = vmatpush1.msra.mxu0 %v882
    %959 = vmatprep.mubr.f32.mxu0 %v818
    %960 = vmatmul.mubr.f32.gmra.mrb[0].mxu0 %v817
    %v961 = vpop.f32.mrb[0].mxu0
    %v962 = vadd.f32 %v890, %v961
    %v963 = vpop.f32.mrb[0].mxu0
    %v964 = vadd.f32 %v894, %v963
    %965 = vdwg.mxu0
    %vm966 = vcmp.gt.f32.partialorder %v962, 0.0
    %vm967 = vcmp.gt.f32.partialorder %v964, 0.0
    %v968 = vmul.f32 %v962, 0.2
    %v969 = vmul.f32 %v964, 0.2
    %v970 = vsel %vm966, %v962, %v968
    %v971 = vsel %vm967, %v964, %v969
    %s972 = scalar_lea.vmem [#allocation5], 3072
    %v973 = vld [vmem:[%s972] sm:$0xff]
    %v974 = vld [vmem:[%s972 + $0x8] sm:$0xff]
    %v975 = vld [vmem:[%s972 + $0x10] sm:$0xff]
    %v976 = vld [vmem:[%s972 + $0x18] sm:$0xff]
    %v977 = vld [vmem:[%s972 + $0x20] sm:$0xff]
    %v978 = vld [vmem:[%s972 + $0x28] sm:$0xff]
    %v979 = vld [vmem:[%s972 + $0x30] sm:$0xff]
    %v980 = vld [vmem:[%s972 + $0x38] sm:$0xff]
    %v981 = vld [vmem:[%s972 + $0x40] sm:$0xff]
    %v982 = vld [vmem:[%s972 + $0x48] sm:$0xff]
    %v983 = vld [vmem:[%s972 + $0x50] sm:$0xff]
    %v984 = vld [vmem:[%s972 + $0x58] sm:$0xff]
    %v985 = vld [vmem:[%s972 + $0x60] sm:$0xff]
    %v986 = vld [vmem:[%s972 + $0x68] sm:$0xff]
    %v987 = vld [vmem:[%s972 + $0x70] sm:$0xff]
    %v988 = vld [vmem:[%s972 + $0x78] sm:$0xff]
    %v989 = vld [vmem:[%s972 + $0x80] sm:$0xff]
    %v990 = vld [vmem:[%s972 + $0x88] sm:$0xff]
    %v991 = vld [vmem:[%s972 + $0x90] sm:$0xff]
    %v992 = vld [vmem:[%s972 + $0x98] sm:$0xff]
    %v993 = vld [vmem:[%s972 + $0xa0] sm:$0xff]
    %v994 = vld [vmem:[%s972 + $0xa8] sm:$0xff]
    %v995 = vld [vmem:[%s972 + $0xb0] sm:$0xff]
    %v996 = vld [vmem:[%s972 + $0xb8] sm:$0xff]
    %v997 = vld [vmem:[%s972 + $0xc0] sm:$0xff]
    %v998 = vld [vmem:[%s972 + $0xc8] sm:$0xff]
    %v999 = vld [vmem:[%s972 + $0xd0] sm:$0xff]
    %v1000 = vld [vmem:[%s972 + $0xd8] sm:$0xff]
    %v1001 = vld [vmem:[%s972 + $0xe0] sm:$0xff]
    %v1002 = vld [vmem:[%s972 + $0xe8] sm:$0xff]
    %v1003 = vld [vmem:[%s972 + $0xf0] sm:$0xff]
    %v1004 = vld [vmem:[%s972 + $0xf8] sm:$0xff]
    %v1005 = vld [vmem:[%s972 + $0x100] sm:$0xff]
    %v1006 = vld [vmem:[%s972 + $0x108] sm:$0xff]
    %v1007 = vld [vmem:[%s972 + $0x110] sm:$0xff]
    %v1008 = vld [vmem:[%s972 + $0x118] sm:$0xff]
    %v1009 = vld [vmem:[%s972 + $0x120] sm:$0xff]
    %v1010 = vld [vmem:[%s972 + $0x128] sm:$0xff]
    %v1011 = vld [vmem:[%s972 + $0x130] sm:$0xff]
    %v1012 = vld [vmem:[%s972 + $0x138] sm:$0xff]
    %v1013 = vld [vmem:[%s972 + $0x140] sm:$0xff]
    %v1014 = vld [vmem:[%s972 + $0x148] sm:$0xff]
    %v1015 = vld [vmem:[%s972 + $0x150] sm:$0xff]
    %v1016 = vld [vmem:[%s972 + $0x158] sm:$0xff]
    %v1017 = vld [vmem:[%s972 + $0x160] sm:$0xff]
    %v1018 = vld [vmem:[%s972 + $0x168] sm:$0xff]
    %v1019 = vld [vmem:[%s972 + $0x170] sm:$0xff]
    %v1020 = vld [vmem:[%s972 + $0x178] sm:$0xff]
    %v1021 = vld [vmem:[%s972 + $0x180] sm:$0xff]
    %v1022 = vld [vmem:[%s972 + $0x188] sm:$0xff]
    %v1023 = vld [vmem:[%s972 + $0x190] sm:$0xff]
    %v1024 = vld [vmem:[%s972 + $0x198] sm:$0xff]
    %v1025 = vld [vmem:[%s972 + $0x1a0] sm:$0xff]
    %v1026 = vld [vmem:[%s972 + $0x1a8] sm:$0xff]
    %v1027 = vld [vmem:[%s972 + $0x1b0] sm:$0xff]
    %v1028 = vld [vmem:[%s972 + $0x1b8] sm:$0xff]
    %v1029 = vld [vmem:[%s972 + $0x1c0] sm:$0xff]
    %v1030 = vld [vmem:[%s972 + $0x1c8] sm:$0xff]
    %v1031 = vld [vmem:[%s972 + $0x1d0] sm:$0xff]
    %v1032 = vld [vmem:[%s972 + $0x1d8] sm:$0xff]
    %v1033 = vld [vmem:[%s972 + $0x1e0] sm:$0xff]
    %v1034 = vld [vmem:[%s972 + $0x1e8] sm:$0xff]
    %v1035 = vld [vmem:[%s972 + $0x1f0] sm:$0xff]
    %v1036 = vld [vmem:[%s972 + $0x1f8] sm:$0xff]
    %s1037 = scalar_lea.vmem [#allocation7], 96
    %v1038 = vld [vmem:[%s1037] sm:$0xff]
    %v1039 = vld [vmem:[%s1037 + $0x8] sm:$0xff]
    %v1040 = vlaneseq
    %v1041 = vshrl.u32 %v1040, 7
    %v1042 = vsub.s32 0, %v1041
    %v1043 = vrot.slane %v1038, %v1042
    %v1044 = vlaneseq
    %v1045 = vshrl.u32 %v1044, 7
    %v1046 = vsub.s32 0, %v1045
    %v1047 = vrot.slane %v1039, %v1046
    %1048 = vmatprep.subr.mxu0 %v974
    %1049 = vmatpush1.msra.mxu0 %v973
    %1050 = vmatprep.subr.mxu0 %v976
    %1051 = vmatpush1.msra.mxu0 %v975
    %1052 = vmatprep.subr.mxu0 %v978
    %1053 = vmatpush1.msra.mxu0 %v977
    %1054 = vmatprep.subr.mxu0 %v980
    %1055 = vmatpush1.msra.mxu0 %v979
    %1056 = vmatprep.subr.mxu0 %v982
    %1057 = vmatpush1.msra.mxu0 %v981
    %1058 = vmatprep.subr.mxu0 %v984
    %1059 = vmatpush1.msra.mxu0 %v983
    %1060 = vmatprep.subr.mxu0 %v986
    %1061 = vmatpush1.msra.mxu0 %v985
    %1062 = vmatprep.subr.mxu0 %v988
    %1063 = vmatpush1.msra.mxu0 %v987
    %1064 = vmatprep.subr.mxu0 %v990
    %1065 = vmatpush1.msra.mxu0 %v989
    %1066 = vmatprep.subr.mxu0 %v992
    %1067 = vmatpush1.msra.mxu0 %v991
    %1068 = vmatprep.subr.mxu0 %v994
    %1069 = vmatpush1.msra.mxu0 %v993
    %1070 = vmatprep.subr.mxu0 %v996
    %1071 = vmatpush1.msra.mxu0 %v995
    %1072 = vmatprep.subr.mxu0 %v998
    %1073 = vmatpush1.msra.mxu0 %v997
    %1074 = vmatprep.subr.mxu0 %v1000
    %1075 = vmatpush1.msra.mxu0 %v999
    %1076 = vmatprep.subr.mxu0 %v1002
    %1077 = vmatpush1.msra.mxu0 %v1001
    %1078 = vmatprep.subr.mxu0 %v1004
    %1079 = vmatpush1.msra.mxu0 %v1003
    %1080 = vmatprep.subr.mxu0 %v1006
    %1081 = vmatpush1.msra.mxu0 %v1005
    %1082 = vmatprep.subr.mxu0 %v1008
    %1083 = vmatpush1.msra.mxu0 %v1007
    %1084 = vmatprep.subr.mxu0 %v1010
    %1085 = vmatpush1.msra.mxu0 %v1009
    %1086 = vmatprep.subr.mxu0 %v1012
    %1087 = vmatpush1.msra.mxu0 %v1011
    %1088 = vmatprep.subr.mxu0 %v1014
    %1089 = vmatpush1.msra.mxu0 %v1013
    %1090 = vmatprep.subr.mxu0 %v1016
    %1091 = vmatpush1.msra.mxu0 %v1015
    %1092 = vmatprep.subr.mxu0 %v1018
    %1093 = vmatpush1.msra.mxu0 %v1017
    %1094 = vmatprep.subr.mxu0 %v1020
    %1095 = vmatpush1.msra.mxu0 %v1019
    %1096 = vmatprep.subr.mxu0 %v1022
    %1097 = vmatpush1.msra.mxu0 %v1021
    %1098 = vmatprep.subr.mxu0 %v1024
    %1099 = vmatpush1.msra.mxu0 %v1023
    %1100 = vmatprep.subr.mxu0 %v1026
    %1101 = vmatpush1.msra.mxu0 %v1025
    %1102 = vmatprep.subr.mxu0 %v1028
    %1103 = vmatpush1.msra.mxu0 %v1027
    %1104 = vmatprep.subr.mxu0 %v1030
    %1105 = vmatpush1.msra.mxu0 %v1029
    %1106 = vmatprep.subr.mxu0 %v1032
    %1107 = vmatpush1.msra.mxu0 %v1031
    %1108 = vmatprep.subr.mxu0 %v1034
    %1109 = vmatpush1.msra.mxu0 %v1033
    %1110 = vmatprep.subr.mxu0 %v1036
    %1111 = vmatpush1.msra.mxu0 %v1035
    %1112 = vmatprep.mubr.f32.mxu0 %v971
    %1113 = vmatmul.mubr.f32.gmra.mrb[0].mxu0 %v970
    %v1114 = vpop.f32.mrb[0].mxu0
    %v1115 = vadd.f32 %v1043, %v1114
    %v1116 = vpop.f32.mrb[0].mxu0
    %v1117 = vadd.f32 %v1047, %v1116
    %1118 = vdwg.mxu0
    %vm1119 = vcmp.gt.f32.partialorder %v1115, 0.0
    %vm1120 = vcmp.gt.f32.partialorder %v1117, 0.0
    %v1121 = vmul.f32 %v1115, 0.2
    %v1122 = vmul.f32 %v1117, 0.2
    %v1123 = vsel %vm1119, %v1115, %v1121
    %v1124 = vsel %vm1120, %v1117, %v1122
    %s1125 = scalar_lea.vmem [#allocation5], 3584
    %v1126 = vld [vmem:[%s1125] sm:$0xff]
    %v1127 = vld [vmem:[%s1125 + $0x8] sm:$0xff]
    %v1128 = vld [vmem:[%s1125 + $0x10] sm:$0xff]
    %v1129 = vld [vmem:[%s1125 + $0x18] sm:$0xff]
    %v1130 = vld [vmem:[%s1125 + $0x20] sm:$0xff]
    %v1131 = vld [vmem:[%s1125 + $0x28] sm:$0xff]
    %v1132 = vld [vmem:[%s1125 + $0x30] sm:$0xff]
    %v1133 = vld [vmem:[%s1125 + $0x38] sm:$0xff]
    %v1134 = vld [vmem:[%s1125 + $0x40] sm:$0xff]
    %v1135 = vld [vmem:[%s1125 + $0x48] sm:$0xff]
    %v1136 = vld [vmem:[%s1125 + $0x50] sm:$0xff]
    %v1137 = vld [vmem:[%s1125 + $0x58] sm:$0xff]
    %v1138 = vld [vmem:[%s1125 + $0x60] sm:$0xff]
    %v1139 = vld [vmem:[%s1125 + $0x68] sm:$0xff]
    %v1140 = vld [vmem:[%s1125 + $0x70] sm:$0xff]
    %v1141 = vld [vmem:[%s1125 + $0x78] sm:$0xff]
    %v1142 = vld [vmem:[%s1125 + $0x80] sm:$0xff]
    %v1143 = vld [vmem:[%s1125 + $0x88] sm:$0xff]
    %v1144 = vld [vmem:[%s1125 + $0x90] sm:$0xff]
    %v1145 = vld [vmem:[%s1125 + $0x98] sm:$0xff]
    %v1146 = vld [vmem:[%s1125 + $0xa0] sm:$0xff]
    %v1147 = vld [vmem:[%s1125 + $0xa8] sm:$0xff]
    %v1148 = vld [vmem:[%s1125 + $0xb0] sm:$0xff]
    %v1149 = vld [vmem:[%s1125 + $0xb8] sm:$0xff]
    %v1150 = vld [vmem:[%s1125 + $0xc0] sm:$0xff]
    %v1151 = vld [vmem:[%s1125 + $0xc8] sm:$0xff]
    %v1152 = vld [vmem:[%s1125 + $0xd0] sm:$0xff]
    %v1153 = vld [vmem:[%s1125 + $0xd8] sm:$0xff]
    %v1154 = vld [vmem:[%s1125 + $0xe0] sm:$0xff]
    %v1155 = vld [vmem:[%s1125 + $0xe8] sm:$0xff]
    %v1156 = vld [vmem:[%s1125 + $0xf0] sm:$0xff]
    %v1157 = vld [vmem:[%s1125 + $0xf8] sm:$0xff]
    %v1158 = vld [vmem:[%s1125 + $0x100] sm:$0xff]
    %v1159 = vld [vmem:[%s1125 + $0x108] sm:$0xff]
    %v1160 = vld [vmem:[%s1125 + $0x110] sm:$0xff]
    %v1161 = vld [vmem:[%s1125 + $0x118] sm:$0xff]
    %v1162 = vld [vmem:[%s1125 + $0x120] sm:$0xff]
    %v1163 = vld [vmem:[%s1125 + $0x128] sm:$0xff]
    %v1164 = vld [vmem:[%s1125 + $0x130] sm:$0xff]
    %v1165 = vld [vmem:[%s1125 + $0x138] sm:$0xff]
    %v1166 = vld [vmem:[%s1125 + $0x140] sm:$0xff]
    %v1167 = vld [vmem:[%s1125 + $0x148] sm:$0xff]
    %v1168 = vld [vmem:[%s1125 + $0x150] sm:$0xff]
    %v1169 = vld [vmem:[%s1125 + $0x158] sm:$0xff]
    %v1170 = vld [vmem:[%s1125 + $0x160] sm:$0xff]
    %v1171 = vld [vmem:[%s1125 + $0x168] sm:$0xff]
    %v1172 = vld [vmem:[%s1125 + $0x170] sm:$0xff]
    %v1173 = vld [vmem:[%s1125 + $0x178] sm:$0xff]
    %v1174 = vld [vmem:[%s1125 + $0x180] sm:$0xff]
    %v1175 = vld [vmem:[%s1125 + $0x188] sm:$0xff]
    %v1176 = vld [vmem:[%s1125 + $0x190] sm:$0xff]
    %v1177 = vld [vmem:[%s1125 + $0x198] sm:$0xff]
    %v1178 = vld [vmem:[%s1125 + $0x1a0] sm:$0xff]
    %v1179 = vld [vmem:[%s1125 + $0x1a8] sm:$0xff]
    %v1180 = vld [vmem:[%s1125 + $0x1b0] sm:$0xff]
    %v1181 = vld [vmem:[%s1125 + $0x1b8] sm:$0xff]
    %v1182 = vld [vmem:[%s1125 + $0x1c0] sm:$0xff]
    %v1183 = vld [vmem:[%s1125 + $0x1c8] sm:$0xff]
    %v1184 = vld [vmem:[%s1125 + $0x1d0] sm:$0xff]
    %v1185 = vld [vmem:[%s1125 + $0x1d8] sm:$0xff]
    %v1186 = vld [vmem:[%s1125 + $0x1e0] sm:$0xff]
    %v1187 = vld [vmem:[%s1125 + $0x1e8] sm:$0xff]
    %v1188 = vld [vmem:[%s1125 + $0x1f0] sm:$0xff]
    %v1189 = vld [vmem:[%s1125 + $0x1f8] sm:$0xff]
    %s1190 = scalar_lea.vmem [#allocation7], 112
    %v1191 = vld [vmem:[%s1190] sm:$0xff]
    %v1192 = vld [vmem:[%s1190 + $0x8] sm:$0xff]
    %v1193 = vlaneseq
    %v1194 = vshrl.u32 %v1193, 7
    %v1195 = vsub.s32 0, %v1194
    %v1196 = vrot.slane %v1191, %v1195
    %v1197 = vlaneseq
    %v1198 = vshrl.u32 %v1197, 7
    %v1199 = vsub.s32 0, %v1198
    %v1200 = vrot.slane %v1192, %v1199
    %1201 = vmatprep.subr.mxu0 %v1127
    %1202 = vmatpush1.msra.mxu0 %v1126
    %1203 = vmatprep.subr.mxu0 %v1129
    %1204 = vmatpush1.msra.mxu0 %v1128
    %1205 = vmatprep.subr.mxu0 %v1131
    %1206 = vmatpush1.msra.mxu0 %v1130
    %1207 = vmatprep.subr.mxu0 %v1133
    %1208 = vmatpush1.msra.mxu0 %v1132
    %1209 = vmatprep.subr.mxu0 %v1135
    %1210 = vmatpush1.msra.mxu0 %v1134
    %1211 = vmatprep.subr.mxu0 %v1137
    %1212 = vmatpush1.msra.mxu0 %v1136
    %1213 = vmatprep.subr.mxu0 %v1139
    %1214 = vmatpush1.msra.mxu0 %v1138
    %1215 = vmatprep.subr.mxu0 %v1141
    %1216 = vmatpush1.msra.mxu0 %v1140
    %1217 = vmatprep.subr.mxu0 %v1143
    %1218 = vmatpush1.msra.mxu0 %v1142
    %1219 = vmatprep.subr.mxu0 %v1145
    %1220 = vmatpush1.msra.mxu0 %v1144
    %1221 = vmatprep.subr.mxu0 %v1147
    %1222 = vmatpush1.msra.mxu0 %v1146
    %1223 = vmatprep.subr.mxu0 %v1149
    %1224 = vmatpush1.msra.mxu0 %v1148
    %1225 = vmatprep.subr.mxu0 %v1151
    %1226 = vmatpush1.msra.mxu0 %v1150
    %1227 = vmatprep.subr.mxu0 %v1153
    %1228 = vmatpush1.msra.mxu0 %v1152
    %1229 = vmatprep.subr.mxu0 %v1155
    %1230 = vmatpush1.msra.mxu0 %v1154
    %1231 = vmatprep.subr.mxu0 %v1157
    %1232 = vmatpush1.msra.mxu0 %v1156
    %1233 = vmatprep.subr.mxu0 %v1159
    %1234 = vmatpush1.msra.mxu0 %v1158
    %1235 = vmatprep.subr.mxu0 %v1161
    %1236 = vmatpush1.msra.mxu0 %v1160
    %1237 = vmatprep.subr.mxu0 %v1163
    %1238 = vmatpush1.msra.mxu0 %v1162
    %1239 = vmatprep.subr.mxu0 %v1165
    %1240 = vmatpush1.msra.mxu0 %v1164
    %1241 = vmatprep.subr.mxu0 %v1167
    %1242 = vmatpush1.msra.mxu0 %v1166
    %1243 = vmatprep.subr.mxu0 %v1169
    %1244 = vmatpush1.msra.mxu0 %v1168
    %1245 = vmatprep.subr.mxu0 %v1171
    %1246 = vmatpush1.msra.mxu0 %v1170
    %1247 = vmatprep.subr.mxu0 %v1173
    %1248 = vmatpush1.msra.mxu0 %v1172
    %1249 = vmatprep.subr.mxu0 %v1175
    %1250 = vmatpush1.msra.mxu0 %v1174
    %1251 = vmatprep.subr.mxu0 %v1177
    %1252 = vmatpush1.msra.mxu0 %v1176
    %1253 = vmatprep.subr.mxu0 %v1179
    %1254 = vmatpush1.msra.mxu0 %v1178
    %1255 = vmatprep.subr.mxu0 %v1181
    %1256 = vmatpush1.msra.mxu0 %v1180
    %1257 = vmatprep.subr.mxu0 %v1183
    %1258 = vmatpush1.msra.mxu0 %v1182
    %1259 = vmatprep.subr.mxu0 %v1185
    %1260 = vmatpush1.msra.mxu0 %v1184
    %1261 = vmatprep.subr.mxu0 %v1187
    %1262 = vmatpush1.msra.mxu0 %v1186
    %1263 = vmatprep.subr.mxu0 %v1189
    %1264 = vmatpush1.msra.mxu0 %v1188
    %1265 = vmatprep.mubr.f32.mxu0 %v1124
    %1266 = vmatmul.mubr.f32.gmra.mrb[0].mxu0 %v1123
    %v1267 = vpop.f32.mrb[0].mxu0
    %v1268 = vadd.f32 %v1196, %v1267
    %v1269 = vpop.f32.mrb[0].mxu0
    %v1270 = vadd.f32 %v1200, %v1269
    %1271 = vdwg.mxu0
    %v1272 = vtanh.pop %v1268
    %v1273 = vtanh.pop %v1270
    %s1274 = scalar_lea.vmem [#allocation5], 4096
    %v1275 = vld [vmem:[%s1274] sm:$0xff]
    %v1276 = vld [vmem:[%s1274 + $0x8] sm:$0xff]
    %v1277 = vld [vmem:[%s1274 + $0x10] sm:$0xff]
    %v1278 = vld [vmem:[%s1274 + $0x18] sm:$0xff]
    %v1279 = vld [vmem:[%s1274 + $0x20] sm:$0xff]
    %v1280 = vld [vmem:[%s1274 + $0x28] sm:$0xff]
    %v1281 = vld [vmem:[%s1274 + $0x30] sm:$0xff]
    %v1282 = vld [vmem:[%s1274 + $0x38] sm:$0xff]
    %v1283 = vld [vmem:[%s1274 + $0x40] sm:$0xff]
    %v1284 = vld [vmem:[%s1274 + $0x48] sm:$0xff]
    %v1285 = vld [vmem:[%s1274 + $0x50] sm:$0xff]
    %v1286 = vld [vmem:[%s1274 + $0x58] sm:$0xff]
    %v1287 = vld [vmem:[%s1274 + $0x60] sm:$0xff]
    %v1288 = vld [vmem:[%s1274 + $0x68] sm:$0xff]
    %v1289 = vld [vmem:[%s1274 + $0x70] sm:$0xff]
    %v1290 = vld [vmem:[%s1274 + $0x78] sm:$0xff]
    %v1291 = vld [vmem:[%s1274 + $0x80] sm:$0xff]
    %v1292 = vld [vmem:[%s1274 + $0x88] sm:$0xff]
    %v1293 = vld [vmem:[%s1274 + $0x90] sm:$0xff]
    %v1294 = vld [vmem:[%s1274 + $0x98] sm:$0xff]
    %v1295 = vld [vmem:[%s1274 + $0xa0] sm:$0xff]
    %v1296 = vld [vmem:[%s1274 + $0xa8] sm:$0xff]
    %v1297 = vld [vmem:[%s1274 + $0xb0] sm:$0xff]
    %v1298 = vld [vmem:[%s1274 + $0xb8] sm:$0xff]
    %v1299 = vld [vmem:[%s1274 + $0xc0] sm:$0xff]
    %v1300 = vld [vmem:[%s1274 + $0xc8] sm:$0xff]
    %v1301 = vld [vmem:[%s1274 + $0xd0] sm:$0xff]
    %v1302 = vld [vmem:[%s1274 + $0xd8] sm:$0xff]
    %v1303 = vld [vmem:[%s1274 + $0xe0] sm:$0xff]
    %v1304 = vld [vmem:[%s1274 + $0xe8] sm:$0xff]
    %v1305 = vld [vmem:[%s1274 + $0xf0] sm:$0xff]
    %v1306 = vld [vmem:[%s1274 + $0xf8] sm:$0xff]
    %v1307 = vld [vmem:[%s1274 + $0x100] sm:$0xff]
    %v1308 = vld [vmem:[%s1274 + $0x108] sm:$0xff]
    %v1309 = vld [vmem:[%s1274 + $0x110] sm:$0xff]
    %v1310 = vld [vmem:[%s1274 + $0x118] sm:$0xff]
    %v1311 = vld [vmem:[%s1274 + $0x120] sm:$0xff]
    %v1312 = vld [vmem:[%s1274 + $0x128] sm:$0xff]
    %v1313 = vld [vmem:[%s1274 + $0x130] sm:$0xff]
    %v1314 = vld [vmem:[%s1274 + $0x138] sm:$0xff]
    %v1315 = vld [vmem:[%s1274 + $0x140] sm:$0xff]
    %v1316 = vld [vmem:[%s1274 + $0x148] sm:$0xff]
    %v1317 = vld [vmem:[%s1274 + $0x150] sm:$0xff]
    %v1318 = vld [vmem:[%s1274 + $0x158] sm:$0xff]
    %v1319 = vld [vmem:[%s1274 + $0x160] sm:$0xff]
    %v1320 = vld [vmem:[%s1274 + $0x168] sm:$0xff]
    %v1321 = vld [vmem:[%s1274 + $0x170] sm:$0xff]
    %v1322 = vld [vmem:[%s1274 + $0x178] sm:$0xff]
    %v1323 = vld [vmem:[%s1274 + $0x180] sm:$0xff]
    %v1324 = vld [vmem:[%s1274 + $0x188] sm:$0xff]
    %v1325 = vld [vmem:[%s1274 + $0x190] sm:$0xff]
    %v1326 = vld [vmem:[%s1274 + $0x198] sm:$0xff]
    %v1327 = vld [vmem:[%s1274 + $0x1a0] sm:$0xff]
    %v1328 = vld [vmem:[%s1274 + $0x1a8] sm:$0xff]
    %v1329 = vld [vmem:[%s1274 + $0x1b0] sm:$0xff]
    %v1330 = vld [vmem:[%s1274 + $0x1b8] sm:$0xff]
    %v1331 = vld [vmem:[%s1274 + $0x1c0] sm:$0xff]
    %v1332 = vld [vmem:[%s1274 + $0x1c8] sm:$0xff]
    %v1333 = vld [vmem:[%s1274 + $0x1d0] sm:$0xff]
    %v1334 = vld [vmem:[%s1274 + $0x1d8] sm:$0xff]
    %v1335 = vld [vmem:[%s1274 + $0x1e0] sm:$0xff]
    %v1336 = vld [vmem:[%s1274 + $0x1e8] sm:$0xff]
    %v1337 = vld [vmem:[%s1274 + $0x1f0] sm:$0xff]
    %v1338 = vld [vmem:[%s1274 + $0x1f8] sm:$0xff]
    %s1339 = scalar_lea.vmem [#allocation7], 128
    %v1340 = vld [vmem:[%s1339] sm:$0xff]
    %v1341 = vld [vmem:[%s1339 + $0x8] sm:$0xff]
    %v1342 = vlaneseq
    %v1343 = vshrl.u32 %v1342, 7
    %v1344 = vsub.s32 0, %v1343
    %v1345 = vrot.slane %v1340, %v1344
    %v1346 = vlaneseq
    %v1347 = vshrl.u32 %v1346, 7
    %v1348 = vsub.s32 0, %v1347
    %v1349 = vrot.slane %v1341, %v1348
    %1350 = vmatprep.subr.mxu0 %v1276
    %1351 = vmatpush1.msra.mxu0 %v1275
    %1352 = vmatprep.subr.mxu0 %v1278
    %1353 = vmatpush1.msra.mxu0 %v1277
    %1354 = vmatprep.subr.mxu0 %v1280
    %1355 = vmatpush1.msra.mxu0 %v1279
    %1356 = vmatprep.subr.mxu0 %v1282
    %1357 = vmatpush1.msra.mxu0 %v1281
    %1358 = vmatprep.subr.mxu0 %v1284
    %1359 = vmatpush1.msra.mxu0 %v1283
    %1360 = vmatprep.subr.mxu0 %v1286
    %1361 = vmatpush1.msra.mxu0 %v1285
    %1362 = vmatprep.subr.mxu0 %v1288
    %1363 = vmatpush1.msra.mxu0 %v1287
    %1364 = vmatprep.subr.mxu0 %v1290
    %1365 = vmatpush1.msra.mxu0 %v1289
    %1366 = vmatprep.subr.mxu0 %v1292
    %1367 = vmatpush1.msra.mxu0 %v1291
    %1368 = vmatprep.subr.mxu0 %v1294
    %1369 = vmatpush1.msra.mxu0 %v1293
    %1370 = vmatprep.subr.mxu0 %v1296
    %1371 = vmatpush1.msra.mxu0 %v1295
    %1372 = vmatprep.subr.mxu0 %v1298
    %1373 = vmatpush1.msra.mxu0 %v1297
    %1374 = vmatprep.subr.mxu0 %v1300
    %1375 = vmatpush1.msra.mxu0 %v1299
    %1376 = vmatprep.subr.mxu0 %v1302
    %1377 = vmatpush1.msra.mxu0 %v1301
    %1378 = vmatprep.subr.mxu0 %v1304
    %1379 = vmatpush1.msra.mxu0 %v1303
    %1380 = vmatprep.subr.mxu0 %v1306
    %1381 = vmatpush1.msra.mxu0 %v1305
    %1382 = vmatprep.subr.mxu0 %v1308
    %1383 = vmatpush1.msra.mxu0 %v1307
    %1384 = vmatprep.subr.mxu0 %v1310
    %1385 = vmatpush1.msra.mxu0 %v1309
    %1386 = vmatprep.subr.mxu0 %v1312
    %1387 = vmatpush1.msra.mxu0 %v1311
    %1388 = vmatprep.subr.mxu0 %v1314
    %1389 = vmatpush1.msra.mxu0 %v1313
    %1390 = vmatprep.subr.mxu0 %v1316
    %1391 = vmatpush1.msra.mxu0 %v1315
    %1392 = vmatprep.subr.mxu0 %v1318
    %1393 = vmatpush1.msra.mxu0 %v1317
    %1394 = vmatprep.subr.mxu0 %v1320
    %1395 = vmatpush1.msra.mxu0 %v1319
    %1396 = vmatprep.subr.mxu0 %v1322
    %1397 = vmatpush1.msra.mxu0 %v1321
    %1398 = vmatprep.subr.mxu0 %v1324
    %1399 = vmatpush1.msra.mxu0 %v1323
    %1400 = vmatprep.subr.mxu0 %v1326
    %1401 = vmatpush1.msra.mxu0 %v1325
    %1402 = vmatprep.subr.mxu0 %v1328
    %1403 = vmatpush1.msra.mxu0 %v1327
    %1404 = vmatprep.subr.mxu0 %v1330
    %1405 = vmatpush1.msra.mxu0 %v1329
    %1406 = vmatprep.subr.mxu0 %v1332
    %1407 = vmatpush1.msra.mxu0 %v1331
    %1408 = vmatprep.subr.mxu0 %v1334
    %1409 = vmatpush1.msra.mxu0 %v1333
    %1410 = vmatprep.subr.mxu0 %v1336
    %1411 = vmatpush1.msra.mxu0 %v1335
    %1412 = vmatprep.subr.mxu0 %v1338
    %1413 = vmatpush1.msra.mxu0 %v1337
    %1414 = vmatprep.mubr.f32.mxu0 %v1273
    %1415 = vmatmul.mubr.f32.gmra.mrb[0].mxu0 %v1272
    %v1416 = vpop.f32.mrb[0].mxu0
    %v1417 = vadd.f32 %v1345, %v1416
    %v1418 = vpop.f32.mrb[0].mxu0
    %v1419 = vadd.f32 %v1349, %v1418
    %1420 = vdwg.mxu0
    %vm1421 = vcmp.gt.f32.partialorder %v1417, 0.0
    %vm1422 = vcmp.gt.f32.partialorder %v1419, 0.0
    %v1423 = vmul.f32 %v1417, 0.2
    %v1424 = vmul.f32 %v1419, 0.2
    %v1425 = vsel %vm1421, %v1417, %v1423
    %v1426 = vsel %vm1422, %v1419, %v1424
    %s1427 = scalar_lea.vmem [#allocation5], 4608
    %v1428 = vld [vmem:[%s1427] sm:$0xff]
    %v1429 = vld [vmem:[%s1427 + $0x8] sm:$0xff]
    %v1430 = vld [vmem:[%s1427 + $0x10] sm:$0xff]
    %v1431 = vld [vmem:[%s1427 + $0x18] sm:$0xff]
    %v1432 = vld [vmem:[%s1427 + $0x20] sm:$0xff]
    %v1433 = vld [vmem:[%s1427 + $0x28] sm:$0xff]
    %v1434 = vld [vmem:[%s1427 + $0x30] sm:$0xff]
    %v1435 = vld [vmem:[%s1427 + $0x38] sm:$0xff]
    %v1436 = vld [vmem:[%s1427 + $0x40] sm:$0xff]
    %v1437 = vld [vmem:[%s1427 + $0x48] sm:$0xff]
    %v1438 = vld [vmem:[%s1427 + $0x50] sm:$0xff]
    %v1439 = vld [vmem:[%s1427 + $0x58] sm:$0xff]
    %v1440 = vld [vmem:[%s1427 + $0x60] sm:$0xff]
    %v1441 = vld [vmem:[%s1427 + $0x68] sm:$0xff]
    %v1442 = vld [vmem:[%s1427 + $0x70] sm:$0xff]
    %v1443 = vld [vmem:[%s1427 + $0x78] sm:$0xff]
    %v1444 = vld [vmem:[%s1427 + $0x80] sm:$0xff]
    %v1445 = vld [vmem:[%s1427 + $0x88] sm:$0xff]
    %v1446 = vld [vmem:[%s1427 + $0x90] sm:$0xff]
    %v1447 = vld [vmem:[%s1427 + $0x98] sm:$0xff]
    %v1448 = vld [vmem:[%s1427 + $0xa0] sm:$0xff]
    %v1449 = vld [vmem:[%s1427 + $0xa8] sm:$0xff]
    %v1450 = vld [vmem:[%s1427 + $0xb0] sm:$0xff]
    %v1451 = vld [vmem:[%s1427 + $0xb8] sm:$0xff]
    %v1452 = vld [vmem:[%s1427 + $0xc0] sm:$0xff]
    %v1453 = vld [vmem:[%s1427 + $0xc8] sm:$0xff]
    %v1454 = vld [vmem:[%s1427 + $0xd0] sm:$0xff]
    %v1455 = vld [vmem:[%s1427 + $0xd8] sm:$0xff]
    %v1456 = vld [vmem:[%s1427 + $0xe0] sm:$0xff]
    %v1457 = vld [vmem:[%s1427 + $0xe8] sm:$0xff]
    %v1458 = vld [vmem:[%s1427 + $0xf0] sm:$0xff]
    %v1459 = vld [vmem:[%s1427 + $0xf8] sm:$0xff]
    %v1460 = vld [vmem:[%s1427 + $0x100] sm:$0xff]
    %v1461 = vld [vmem:[%s1427 + $0x108] sm:$0xff]
    %v1462 = vld [vmem:[%s1427 + $0x110] sm:$0xff]
    %v1463 = vld [vmem:[%s1427 + $0x118] sm:$0xff]
    %v1464 = vld [vmem:[%s1427 + $0x120] sm:$0xff]
    %v1465 = vld [vmem:[%s1427 + $0x128] sm:$0xff]
    %v1466 = vld [vmem:[%s1427 + $0x130] sm:$0xff]
    %v1467 = vld [vmem:[%s1427 + $0x138] sm:$0xff]
    %v1468 = vld [vmem:[%s1427 + $0x140] sm:$0xff]
    %v1469 = vld [vmem:[%s1427 + $0x148] sm:$0xff]
    %v1470 = vld [vmem:[%s1427 + $0x150] sm:$0xff]
    %v1471 = vld [vmem:[%s1427 + $0x158] sm:$0xff]
    %v1472 = vld [vmem:[%s1427 + $0x160] sm:$0xff]
    %v1473 = vld [vmem:[%s1427 + $0x168] sm:$0xff]
    %v1474 = vld [vmem:[%s1427 + $0x170] sm:$0xff]
    %v1475 = vld [vmem:[%s1427 + $0x178] sm:$0xff]
    %v1476 = vld [vmem:[%s1427 + $0x180] sm:$0xff]
    %v1477 = vld [vmem:[%s1427 + $0x188] sm:$0xff]
    %v1478 = vld [vmem:[%s1427 + $0x190] sm:$0xff]
    %v1479 = vld [vmem:[%s1427 + $0x198] sm:$0xff]
    %v1480 = vld [vmem:[%s1427 + $0x1a0] sm:$0xff]
    %v1481 = vld [vmem:[%s1427 + $0x1a8] sm:$0xff]
    %v1482 = vld [vmem:[%s1427 + $0x1b0] sm:$0xff]
    %v1483 = vld [vmem:[%s1427 + $0x1b8] sm:$0xff]
    %v1484 = vld [vmem:[%s1427 + $0x1c0] sm:$0xff]
    %v1485 = vld [vmem:[%s1427 + $0x1c8] sm:$0xff]
    %v1486 = vld [vmem:[%s1427 + $0x1d0] sm:$0xff]
    %v1487 = vld [vmem:[%s1427 + $0x1d8] sm:$0xff]
    %v1488 = vld [vmem:[%s1427 + $0x1e0] sm:$0xff]
    %v1489 = vld [vmem:[%s1427 + $0x1e8] sm:$0xff]
    %v1490 = vld [vmem:[%s1427 + $0x1f0] sm:$0xff]
    %v1491 = vld [vmem:[%s1427 + $0x1f8] sm:$0xff]
    %s1492 = scalar_lea.vmem [#allocation7], 144
    %v1493 = vld [vmem:[%s1492] sm:$0xff]
    %v1494 = vld [vmem:[%s1492 + $0x8] sm:$0xff]
    %v1495 = vlaneseq
    %v1496 = vshrl.u32 %v1495, 7
    %v1497 = vsub.s32 0, %v1496
    %v1498 = vrot.slane %v1493, %v1497
    %v1499 = vlaneseq
    %v1500 = vshrl.u32 %v1499, 7
    %v1501 = vsub.s32 0, %v1500
    %v1502 = vrot.slane %v1494, %v1501
    %1503 = vmatprep.subr.mxu0 %v1429
    %1504 = vmatpush1.msra.mxu0 %v1428
    %1505 = vmatprep.subr.mxu0 %v1431
    %1506 = vmatpush1.msra.mxu0 %v1430
    %1507 = vmatprep.subr.mxu0 %v1433
    %1508 = vmatpush1.msra.mxu0 %v1432
    %1509 = vmatprep.subr.mxu0 %v1435
    %1510 = vmatpush1.msra.mxu0 %v1434
    %1511 = vmatprep.subr.mxu0 %v1437
    %1512 = vmatpush1.msra.mxu0 %v1436
    %1513 = vmatprep.subr.mxu0 %v1439
    %1514 = vmatpush1.msra.mxu0 %v1438
    %1515 = vmatprep.subr.mxu0 %v1441
    %1516 = vmatpush1.msra.mxu0 %v1440
    %1517 = vmatprep.subr.mxu0 %v1443
    %1518 = vmatpush1.msra.mxu0 %v1442
    %1519 = vmatprep.subr.mxu0 %v1445
    %1520 = vmatpush1.msra.mxu0 %v1444
    %1521 = vmatprep.subr.mxu0 %v1447
    %1522 = vmatpush1.msra.mxu0 %v1446
    %1523 = vmatprep.subr.mxu0 %v1449
    %1524 = vmatpush1.msra.mxu0 %v1448
    %1525 = vmatprep.subr.mxu0 %v1451
    %1526 = vmatpush1.msra.mxu0 %v1450
    %1527 = vmatprep.subr.mxu0 %v1453
    %1528 = vmatpush1.msra.mxu0 %v1452
    %1529 = vmatprep.subr.mxu0 %v1455
    %1530 = vmatpush1.msra.mxu0 %v1454
    %1531 = vmatprep.subr.mxu0 %v1457
    %1532 = vmatpush1.msra.mxu0 %v1456
    %1533 = vmatprep.subr.mxu0 %v1459
    %1534 = vmatpush1.msra.mxu0 %v1458
    %1535 = vmatprep.subr.mxu0 %v1461
    %1536 = vmatpush1.msra.mxu0 %v1460
    %1537 = vmatprep.subr.mxu0 %v1463
    %1538 = vmatpush1.msra.mxu0 %v1462
    %1539 = vmatprep.subr.mxu0 %v1465
    %1540 = vmatpush1.msra.mxu0 %v1464
    %1541 = vmatprep.subr.mxu0 %v1467
    %1542 = vmatpush1.msra.mxu0 %v1466
    %1543 = vmatprep.subr.mxu0 %v1469
    %1544 = vmatpush1.msra.mxu0 %v1468
    %1545 = vmatprep.subr.mxu0 %v1471
    %1546 = vmatpush1.msra.mxu0 %v1470
    %1547 = vmatprep.subr.mxu0 %v1473
    %1548 = vmatpush1.msra.mxu0 %v1472
    %1549 = vmatprep.subr.mxu0 %v1475
    %1550 = vmatpush1.msra.mxu0 %v1474
    %1551 = vmatprep.subr.mxu0 %v1477
    %1552 = vmatpush1.msra.mxu0 %v1476
    %1553 = vmatprep.subr.mxu0 %v1479
    %1554 = vmatpush1.msra.mxu0 %v1478
    %1555 = vmatprep.subr.mxu0 %v1481
    %1556 = vmatpush1.msra.mxu0 %v1480
    %1557 = vmatprep.subr.mxu0 %v1483
    %1558 = vmatpush1.msra.mxu0 %v1482
    %1559 = vmatprep.subr.mxu0 %v1485
    %1560 = vmatpush1.msra.mxu0 %v1484
    %1561 = vmatprep.subr.mxu0 %v1487
    %1562 = vmatpush1.msra.mxu0 %v1486
    %1563 = vmatprep.subr.mxu0 %v1489
    %1564 = vmatpush1.msra.mxu0 %v1488
    %1565 = vmatprep.subr.mxu0 %v1491
    %1566 = vmatpush1.msra.mxu0 %v1490
    %1567 = vmatprep.mubr.f32.mxu0 %v1426
    %1568 = vmatmul.mubr.f32.gmra.mrb[0].mxu0 %v1425
    %v1569 = vpop.f32.mrb[0].mxu0
    %v1570 = vadd.f32 %v1498, %v1569
    %v1571 = vpop.f32.mrb[0].mxu0
    %v1572 = vadd.f32 %v1502, %v1571
    %1573 = vdwg.mxu0
    %v1574 = vrot.slane %v1570, 4
    %v1575 = vadd.f32 %v1570, %v1574
    %v1576 = vrot.slane %v1575, 2
    %v1577 = vadd.f32 %v1575, %v1576
    %v1578 = vrot.slane %v1577, 1
    %v1579 = vadd.f32 %v1577, %v1578
    %v1580 = vrot.slane %v1572, 4
    %v1581 = vadd.f32 %v1572, %v1580
    %v1582 = vrot.slane %v1581, 2
    %v1583 = vadd.f32 %v1581, %v1582
    %v1584 = vrot.slane %v1583, 1
    %v1585 = vadd.f32 %v1583, %v1584
    %v1586 = vrcp.pop 8.0
    %v1587 = vmul.f32 %v1579, %v1586
    %v1588 = vmul.f32 %v1585, %v1586
    %v1589 = vmul.f32 %v1570, %v1570
    %v1590 = vmul.f32 %v1572, %v1572
    %v1591 = vrot.slane %v1589, 4
    %v1592 = vadd.f32 %v1589, %v1591
    %v1593 = vrot.slane %v1592, 2
    %v1594 = vadd.f32 %v1592, %v1593
    %v1595 = vrot.slane %v1594, 1
    %v1596 = vadd.f32 %v1594, %v1595
    %v1597 = vrot.slane %v1590, 4
    %v1598 = vadd.f32 %v1590, %v1597
    %v1599 = vrot.slane %v1598, 2
    %v1600 = vadd.f32 %v1598, %v1599
    %v1601 = vrot.slane %v1600, 1
    %v1602 = vadd.f32 %v1600, %v1601
    %v1603 = vmul.f32 %v1596, %v1586
    %v1604 = vmul.f32 %v1602, %v1586
    %v1605 = vmul.f32 %v1587, %v1587
    %v1606 = vmul.f32 %v1588, %v1588
    %v1607 = vsub.f32 %v1603, %v1605
    %v1608 = vsub.f32 %v1604, %v1606
    %v1609 = vadd.f32 %v1607, 0.8
    %v1610 = vadd.f32 %v1608, 0.8
    %v1611 = vrsqrt.pop %v1609
    %v1612 = vrsqrt.pop %v1610
    %v1613 = vmul.f32 %v1493, %v1611
    %v1614 = vmul.f32 %v1494, %v1612
    %v1615 = vmul.f32 %v1587, %v1613
    %v1616 = vmul.f32 %v1588, %v1614
    %v1619 = vrot.slane %v1615, 7
    %v1620 = vrot.slane %v1616, 7
    %v1623 = vsub.f32 %v1493, %v1619
    %v1624 = vsub.f32 %v1494, %v1620
    %v1625 = vlaneseq
    %v1626 = vshrl.u32 %v1625, 7
    %v1627 = vsub.s32 1, %v1626
    %v1628 = vrot.slane %v1613, %v1627
    %v1629 = vlaneseq
    %v1630 = vshrl.u32 %v1629, 7
    %v1631 = vsub.s32 1, %v1630
    %v1632 = vrot.slane %v1614, %v1631
    %v1633 = vmul.f32 %v1570, %v1628
    %v1634 = vmul.f32 %v1572, %v1632
    %v1635 = vlaneseq
    %v1636 = vshrl.u32 %v1635, 7
    %v1637 = vsub.s32 2, %v1636
    %v1638 = vrot.slane %v1623, %v1637
    %v1639 = vlaneseq
    %v1640 = vshrl.u32 %v1639, 7
    %v1641 = vsub.s32 2, %v1640
    %v1642 = vrot.slane %v1624, %v1641
    %v1643 = vadd.f32 %v1633, %v1638
    %v1644 = vadd.f32 %v1634, %v1642
    %vm1645 = vcmp.gt.f32.partialorder %v1643, 0.0
    %vm1646 = vcmp.gt.f32.partialorder %v1644, 0.0
    %v1647 = vmul.f32 %v1643, 0.2
    %v1648 = vmul.f32 %v1644, 0.2
    %v1649 = vsel %vm1645, %v1643, %v1647
    %v1650 = vsel %vm1646, %v1644, %v1648
    %s1651 = scalar_lea.vmem [#allocation5], 5120
    %v1652 = vld [vmem:[%s1651] sm:$0xff]
    %v1653 = vld [vmem:[%s1651 + $0x8] sm:$0xff]
    %v1654 = vld [vmem:[%s1651 + $0x10] sm:$0xff]
    %v1655 = vld [vmem:[%s1651 + $0x18] sm:$0xff]
    %v1656 = vld [vmem:[%s1651 + $0x20] sm:$0xff]
    %v1657 = vld [vmem:[%s1651 + $0x28] sm:$0xff]
    %v1658 = vld [vmem:[%s1651 + $0x30] sm:$0xff]
    %v1659 = vld [vmem:[%s1651 + $0x38] sm:$0xff]
    %v1660 = vld [vmem:[%s1651 + $0x40] sm:$0xff]
    %v1661 = vld [vmem:[%s1651 + $0x48] sm:$0xff]
    %v1662 = vld [vmem:[%s1651 + $0x50] sm:$0xff]
    %v1663 = vld [vmem:[%s1651 + $0x58] sm:$0xff]
    %v1664 = vld [vmem:[%s1651 + $0x60] sm:$0xff]
    %v1665 = vld [vmem:[%s1651 + $0x68] sm:$0xff]
    %v1666 = vld [vmem:[%s1651 + $0x70] sm:$0xff]
    %v1667 = vld [vmem:[%s1651 + $0x78] sm:$0xff]
    %v1668 = vld [vmem:[%s1651 + $0x80] sm:$0xff]
    %v1669 = vld [vmem:[%s1651 + $0x88] sm:$0xff]
    %v1670 = vld [vmem:[%s1651 + $0x90] sm:$0xff]
    %v1671 = vld [vmem:[%s1651 + $0x98] sm:$0xff]
    %v1672 = vld [vmem:[%s1651 + $0xa0] sm:$0xff]
    %v1673 = vld [vmem:[%s1651 + $0xa8] sm:$0xff]
    %v1674 = vld [vmem:[%s1651 + $0xb0] sm:$0xff]
    %v1675 = vld [vmem:[%s1651 + $0xb8] sm:$0xff]
    %v1676 = vld [vmem:[%s1651 + $0xc0] sm:$0xff]
    %v1677 = vld [vmem:[%s1651 + $0xc8] sm:$0xff]
    %v1678 = vld [vmem:[%s1651 + $0xd0] sm:$0xff]
    %v1679 = vld [vmem:[%s1651 + $0xd8] sm:$0xff]
    %v1680 = vld [vmem:[%s1651 + $0xe0] sm:$0xff]
    %v1681 = vld [vmem:[%s1651 + $0xe8] sm:$0xff]
    %v1682 = vld [vmem:[%s1651 + $0xf0] sm:$0xff]
    %v1683 = vld [vmem:[%s1651 + $0xf8] sm:$0xff]
    %v1684 = vld [vmem:[%s1651 + $0x100] sm:$0xff]
    %v1685 = vld [vmem:[%s1651 + $0x108] sm:$0xff]
    %v1686 = vld [vmem:[%s1651 + $0x110] sm:$0xff]
    %v1687 = vld [vmem:[%s1651 + $0x118] sm:$0xff]
    %v1688 = vld [vmem:[%s1651 + $0x120] sm:$0xff]
    %v1689 = vld [vmem:[%s1651 + $0x128] sm:$0xff]
    %v1690 = vld [vmem:[%s1651 + $0x130] sm:$0xff]
    %v1691 = vld [vmem:[%s1651 + $0x138] sm:$0xff]
    %v1692 = vld [vmem:[%s1651 + $0x140] sm:$0xff]
    %v1693 = vld [vmem:[%s1651 + $0x148] sm:$0xff]
    %v1694 = vld [vmem:[%s1651 + $0x150] sm:$0xff]
    %v1695 = vld [vmem:[%s1651 + $0x158] sm:$0xff]
    %v1696 = vld [vmem:[%s1651 + $0x160] sm:$0xff]
    %v1697 = vld [vmem:[%s1651 + $0x168] sm:$0xff]
    %v1698 = vld [vmem:[%s1651 + $0x170] sm:$0xff]
    %v1699 = vld [vmem:[%s1651 + $0x178] sm:$0xff]
    %v1700 = vld [vmem:[%s1651 + $0x180] sm:$0xff]
    %v1701 = vld [vmem:[%s1651 + $0x188] sm:$0xff]
    %v1702 = vld [vmem:[%s1651 + $0x190] sm:$0xff]
    %v1703 = vld [vmem:[%s1651 + $0x198] sm:$0xff]
    %v1704 = vld [vmem:[%s1651 + $0x1a0] sm:$0xff]
    %v1705 = vld [vmem:[%s1651 + $0x1a8] sm:$0xff]
    %v1706 = vld [vmem:[%s1651 + $0x1b0] sm:$0xff]
    %v1707 = vld [vmem:[%s1651 + $0x1b8] sm:$0xff]
    %v1708 = vld [vmem:[%s1651 + $0x1c0] sm:$0xff]
    %v1709 = vld [vmem:[%s1651 + $0x1c8] sm:$0xff]
    %v1710 = vld [vmem:[%s1651 + $0x1d0] sm:$0xff]
    %v1711 = vld [vmem:[%s1651 + $0x1d8] sm:$0xff]
    %v1712 = vld [vmem:[%s1651 + $0x1e0] sm:$0xff]
    %v1713 = vld [vmem:[%s1651 + $0x1e8] sm:$0xff]
    %v1714 = vld [vmem:[%s1651 + $0x1f0] sm:$0xff]
    %v1715 = vld [vmem:[%s1651 + $0x1f8] sm:$0xff]
    %s1716 = scalar_lea.vmem [#allocation7], 160
    %v1717 = vld [vmem:[%s1716] sm:$0xff]
    %v1718 = vld [vmem:[%s1716 + $0x8] sm:$0xff]
    %v1719 = vlaneseq
    %v1720 = vshrl.u32 %v1719, 7
    %v1721 = vsub.s32 0, %v1720
    %v1722 = vrot.slane %v1717, %v1721
    %v1723 = vlaneseq
    %v1724 = vshrl.u32 %v1723, 7
    %v1725 = vsub.s32 0, %v1724
    %v1726 = vrot.slane %v1718, %v1725
    %1727 = vmatprep.subr.mxu0 %v1653
    %1728 = vmatpush1.msra.mxu0 %v1652
    %1729 = vmatprep.subr.mxu0 %v1655
    %1730 = vmatpush1.msra.mxu0 %v1654
    %1731 = vmatprep.subr.mxu0 %v1657
    %1732 = vmatpush1.msra.mxu0 %v1656
    %1733 = vmatprep.subr.mxu0 %v1659
    %1734 = vmatpush1.msra.mxu0 %v1658
    %1735 = vmatprep.subr.mxu0 %v1661
    %1736 = vmatpush1.msra.mxu0 %v1660
    %1737 = vmatprep.subr.mxu0 %v1663
    %1738 = vmatpush1.msra.mxu0 %v1662
    %1739 = vmatprep.subr.mxu0 %v1665
    %1740 = vmatpush1.msra.mxu0 %v1664
    %1741 = vmatprep.subr.mxu0 %v1667
    %1742 = vmatpush1.msra.mxu0 %v1666
    %1743 = vmatprep.subr.mxu0 %v1669
    %1744 = vmatpush1.msra.mxu0 %v1668
    %1745 = vmatprep.subr.mxu0 %v1671
    %1746 = vmatpush1.msra.mxu0 %v1670
    %1747 = vmatprep.subr.mxu0 %v1673
    %1748 = vmatpush1.msra.mxu0 %v1672
    %1749 = vmatprep.subr.mxu0 %v1675
    %1750 = vmatpush1.msra.mxu0 %v1674
    %1751 = vmatprep.subr.mxu0 %v1677
    %1752 = vmatpush1.msra.mxu0 %v1676
    %1753 = vmatprep.subr.mxu0 %v1679
    %1754 = vmatpush1.msra.mxu0 %v1678
    %1755 = vmatprep.subr.mxu0 %v1681
    %1756 = vmatpush1.msra.mxu0 %v1680
    %1757 = vmatprep.subr.mxu0 %v1683
    %1758 = vmatpush1.msra.mxu0 %v1682
    %1759 = vmatprep.subr.mxu0 %v1685
    %1760 = vmatpush1.msra.mxu0 %v1684
    %1761 = vmatprep.subr.mxu0 %v1687
    %1762 = vmatpush1.msra.mxu0 %v1686
    %1763 = vmatprep.subr.mxu0 %v1689
    %1764 = vmatpush1.msra.mxu0 %v1688
    %1765 = vmatprep.subr.mxu0 %v1691
    %1766 = vmatpush1.msra.mxu0 %v1690
    %1767 = vmatprep.subr.mxu0 %v1693
    %1768 = vmatpush1.msra.mxu0 %v1692
    %1769 = vmatprep.subr.mxu0 %v1695
    %1770 = vmatpush1.msra.mxu0 %v1694
    %1771 = vmatprep.subr.mxu0 %v1697
    %1772 = vmatpush1.msra.mxu0 %v1696
    %1773 = vmatprep.subr.mxu0 %v1699
    %1774 = vmatpush1.msra.mxu0 %v1698
    %1775 = vmatprep.subr.mxu0 %v1701
    %1776 = vmatpush1.msra.mxu0 %v1700
    %1777 = vmatprep.subr.mxu0 %v1703
    %1778 = vmatpush1.msra.mxu0 %v1702
    %1779 = vmatprep.subr.mxu0 %v1705
    %1780 = vmatpush1.msra.mxu0 %v1704
    %1781 = vmatprep.subr.mxu0 %v1707
    %1782 = vmatpush1.msra.mxu0 %v1706
    %1783 = vmatprep.subr.mxu0 %v1709
    %1784 = vmatpush1.msra.mxu0 %v1708
    %1785 = vmatprep.subr.mxu0 %v1711
    %1786 = vmatpush1.msra.mxu0 %v1710
    %1787 = vmatprep.subr.mxu0 %v1713
    %1788 = vmatpush1.msra.mxu0 %v1712
    %1789 = vmatprep.subr.mxu0 %v1715
    %1790 = vmatpush1.msra.mxu0 %v1714
    %1791 = vmatprep.mubr.f32.mxu0 %v1650
    %1792 = vmatmul.mubr.f32.gmra.mrb[0].mxu0 %v1649
    %v1793 = vpop.f32.mrb[0].mxu0
    %v1794 = vadd.f32 %v1722, %v1793
    %v1795 = vpop.f32.mrb[0].mxu0
    %v1796 = vadd.f32 %v1726, %v1795
    %1797 = vdwg.mxu0
    %v1798 = vrot.slane %v1794, 4
    %v1799 = vadd.f32 %v1794, %v1798
    %v1800 = vrot.slane %v1799, 2
    %v1801 = vadd.f32 %v1799, %v1800
    %v1802 = vrot.slane %v1801, 1
    %v1803 = vadd.f32 %v1801, %v1802
    %v1804 = vrot.slane %v1796, 4
    %v1805 = vadd.f32 %v1796, %v1804
    %v1806 = vrot.slane %v1805, 2
    %v1807 = vadd.f32 %v1805, %v1806
    %v1808 = vrot.slane %v1807, 1
    %v1809 = vadd.f32 %v1807, %v1808
    %v1810 = vmul.f32 %v1803, %v1586
    %v1811 = vmul.f32 %v1809, %v1586
    %v1812 = vmul.f32 %v1794, %v1794
    %v1813 = vmul.f32 %v1796, %v1796
    %v1814 = vrot.slane %v1812, 4
    %v1815 = vadd.f32 %v1812, %v1814
    %v1816 = vrot.slane %v1815, 2
    %v1817 = vadd.f32 %v1815, %v1816
    %v1818 = vrot.slane %v1817, 1
    %v1819 = vadd.f32 %v1817, %v1818
    %v1820 = vrot.slane %v1813, 4
    %v1821 = vadd.f32 %v1813, %v1820
    %v1822 = vrot.slane %v1821, 2
    %v1823 = vadd.f32 %v1821, %v1822
    %v1824 = vrot.slane %v1823, 1
    %v1825 = vadd.f32 %v1823, %v1824
    %v1826 = vmul.f32 %v1819, %v1586
    %v1827 = vmul.f32 %v1825, %v1586
    %v1828 = vmul.f32 %v1810, %v1810
    %v1829 = vmul.f32 %v1811, %v1811
    %v1830 = vsub.f32 %v1826, %v1828
    %v1831 = vsub.f32 %v1827, %v1829
    %v1832 = vadd.f32 %v1830, 0.8
    %v1833 = vadd.f32 %v1831, 0.8
    %v1834 = vrsqrt.pop %v1832
    %v1835 = vrsqrt.pop %v1833
    %v1836 = vmul.f32 %v1717, %v1834
    %v1837 = vmul.f32 %v1718, %v1835
    %v1838 = vmul.f32 %v1810, %v1836
    %v1839 = vmul.f32 %v1811, %v1837
    %v1842 = vrot.slane %v1838, 7
    %v1843 = vrot.slane %v1839, 7
    %v1846 = vsub.f32 %v1717, %v1842
    %v1847 = vsub.f32 %v1718, %v1843
    %v1848 = vlaneseq
    %v1849 = vshrl.u32 %v1848, 7
    %v1850 = vsub.s32 1, %v1849
    %v1851 = vrot.slane %v1836, %v1850
    %v1852 = vlaneseq
    %v1853 = vshrl.u32 %v1852, 7
    %v1854 = vsub.s32 1, %v1853
    %v1855 = vrot.slane %v1837, %v1854
    %v1856 = vmul.f32 %v1794, %v1851
    %v1857 = vmul.f32 %v1796, %v1855
    %v1858 = vlaneseq
    %v1859 = vshrl.u32 %v1858, 7
    %v1860 = vsub.s32 2, %v1859
    %v1861 = vrot.slane %v1846, %v1860
    %v1862 = vlaneseq
    %v1863 = vshrl.u32 %v1862, 7
    %v1864 = vsub.s32 2, %v1863
    %v1865 = vrot.slane %v1847, %v1864
    %v1866 = vadd.f32 %v1856, %v1861
    %v1867 = vadd.f32 %v1857, %v1865
    %vm1868 = vcmp.gt.f32.partialorder %v1866, 0.0
    %vm1869 = vcmp.gt.f32.partialorder %v1867, 0.0
    %v1870 = vmul.f32 %v1866, 0.2
    %v1871 = vmul.f32 %v1867, 0.2
    %v1872 = vsel %vm1868, %v1866, %v1870
    %v1873 = vsel %vm1869, %v1867, %v1871
    %s1874 = scalar_lea.vmem [#allocation5], 5632
    %v1875 = vld [vmem:[%s1874] sm:$0xff]
    %v1876 = vld [vmem:[%s1874 + $0x8] sm:$0xff]
    %v1877 = vld [vmem:[%s1874 + $0x10] sm:$0xff]
    %v1878 = vld [vmem:[%s1874 + $0x18] sm:$0xff]
    %v1879 = vld [vmem:[%s1874 + $0x20] sm:$0xff]
    %v1880 = vld [vmem:[%s1874 + $0x28] sm:$0xff]
    %v1881 = vld [vmem:[%s1874 + $0x30] sm:$0xff]
    %v1882 = vld [vmem:[%s1874 + $0x38] sm:$0xff]
    %v1883 = vld [vmem:[%s1874 + $0x40] sm:$0xff]
    %v1884 = vld [vmem:[%s1874 + $0x48] sm:$0xff]
    %v1885 = vld [vmem:[%s1874 + $0x50] sm:$0xff]
    %v1886 = vld [vmem:[%s1874 + $0x58] sm:$0xff]
    %v1887 = vld [vmem:[%s1874 + $0x60] sm:$0xff]
    %v1888 = vld [vmem:[%s1874 + $0x68] sm:$0xff]
    %v1889 = vld [vmem:[%s1874 + $0x70] sm:$0xff]
    %v1890 = vld [vmem:[%s1874 + $0x78] sm:$0xff]
    %v1891 = vld [vmem:[%s1874 + $0x80] sm:$0xff]
    %v1892 = vld [vmem:[%s1874 + $0x88] sm:$0xff]
    %v1893 = vld [vmem:[%s1874 + $0x90] sm:$0xff]
    %v1894 = vld [vmem:[%s1874 + $0x98] sm:$0xff]
    %v1895 = vld [vmem:[%s1874 + $0xa0] sm:$0xff]
    %v1896 = vld [vmem:[%s1874 + $0xa8] sm:$0xff]
    %v1897 = vld [vmem:[%s1874 + $0xb0] sm:$0xff]
    %v1898 = vld [vmem:[%s1874 + $0xb8] sm:$0xff]
    %v1899 = vld [vmem:[%s1874 + $0xc0] sm:$0xff]
    %v1900 = vld [vmem:[%s1874 + $0xc8] sm:$0xff]
    %v1901 = vld [vmem:[%s1874 + $0xd0] sm:$0xff]
    %v1902 = vld [vmem:[%s1874 + $0xd8] sm:$0xff]
    %v1903 = vld [vmem:[%s1874 + $0xe0] sm:$0xff]
    %v1904 = vld [vmem:[%s1874 + $0xe8] sm:$0xff]
    %v1905 = vld [vmem:[%s1874 + $0xf0] sm:$0xff]
    %v1906 = vld [vmem:[%s1874 + $0xf8] sm:$0xff]
    %v1907 = vld [vmem:[%s1874 + $0x100] sm:$0xff]
    %v1908 = vld [vmem:[%s1874 + $0x108] sm:$0xff]
    %v1909 = vld [vmem:[%s1874 + $0x110] sm:$0xff]
    %v1910 = vld [vmem:[%s1874 + $0x118] sm:$0xff]
    %v1911 = vld [vmem:[%s1874 + $0x120] sm:$0xff]
    %v1912 = vld [vmem:[%s1874 + $0x128] sm:$0xff]
    %v1913 = vld [vmem:[%s1874 + $0x130] sm:$0xff]
    %v1914 = vld [vmem:[%s1874 + $0x138] sm:$0xff]
    %v1915 = vld [vmem:[%s1874 + $0x140] sm:$0xff]
    %v1916 = vld [vmem:[%s1874 + $0x148] sm:$0xff]
    %v1917 = vld [vmem:[%s1874 + $0x150] sm:$0xff]
    %v1918 = vld [vmem:[%s1874 + $0x158] sm:$0xff]
    %v1919 = vld [vmem:[%s1874 + $0x160] sm:$0xff]
    %v1920 = vld [vmem:[%s1874 + $0x168] sm:$0xff]
    %v1921 = vld [vmem:[%s1874 + $0x170] sm:$0xff]
    %v1922 = vld [vmem:[%s1874 + $0x178] sm:$0xff]
    %v1923 = vld [vmem:[%s1874 + $0x180] sm:$0xff]
    %v1924 = vld [vmem:[%s1874 + $0x188] sm:$0xff]
    %v1925 = vld [vmem:[%s1874 + $0x190] sm:$0xff]
    %v1926 = vld [vmem:[%s1874 + $0x198] sm:$0xff]
    %v1927 = vld [vmem:[%s1874 + $0x1a0] sm:$0xff]
    %v1928 = vld [vmem:[%s1874 + $0x1a8] sm:$0xff]
    %v1929 = vld [vmem:[%s1874 + $0x1b0] sm:$0xff]
    %v1930 = vld [vmem:[%s1874 + $0x1b8] sm:$0xff]
    %v1931 = vld [vmem:[%s1874 + $0x1c0] sm:$0xff]
    %v1932 = vld [vmem:[%s1874 + $0x1c8] sm:$0xff]
    %v1933 = vld [vmem:[%s1874 + $0x1d0] sm:$0xff]
    %v1934 = vld [vmem:[%s1874 + $0x1d8] sm:$0xff]
    %v1935 = vld [vmem:[%s1874 + $0x1e0] sm:$0xff]
    %v1936 = vld [vmem:[%s1874 + $0x1e8] sm:$0xff]
    %v1937 = vld [vmem:[%s1874 + $0x1f0] sm:$0xff]
    %v1938 = vld [vmem:[%s1874 + $0x1f8] sm:$0xff]
    %s1939 = scalar_lea.vmem [#allocation7], 176
    %v1940 = vld [vmem:[%s1939] sm:$0xff]
    %v1941 = vld [vmem:[%s1939 + $0x8] sm:$0xff]
    %v1942 = vlaneseq
    %v1943 = vshrl.u32 %v1942, 7
    %v1944 = vsub.s32 0, %v1943
    %v1945 = vrot.slane %v1940, %v1944
    %v1946 = vlaneseq
    %v1947 = vshrl.u32 %v1946, 7
    %v1948 = vsub.s32 0, %v1947
    %v1949 = vrot.slane %v1941, %v1948
    %1950 = vmatprep.subr.mxu0 %v1876
    %1951 = vmatpush1.msra.mxu0 %v1875
    %1952 = vmatprep.subr.mxu0 %v1878
    %1953 = vmatpush1.msra.mxu0 %v1877
    %1954 = vmatprep.subr.mxu0 %v1880
    %1955 = vmatpush1.msra.mxu0 %v1879
    %1956 = vmatprep.subr.mxu0 %v1882
    %1957 = vmatpush1.msra.mxu0 %v1881
    %1958 = vmatprep.subr.mxu0 %v1884
    %1959 = vmatpush1.msra.mxu0 %v1883
    %1960 = vmatprep.subr.mxu0 %v1886
    %1961 = vmatpush1.msra.mxu0 %v1885
    %1962 = vmatprep.subr.mxu0 %v1888
    %1963 = vmatpush1.msra.mxu0 %v1887
    %1964 = vmatprep.subr.mxu0 %v1890
    %1965 = vmatpush1.msra.mxu0 %v1889
    %1966 = vmatprep.subr.mxu0 %v1892
    %1967 = vmatpush1.msra.mxu0 %v1891
    %1968 = vmatprep.subr.mxu0 %v1894
    %1969 = vmatpush1.msra.mxu0 %v1893
    %1970 = vmatprep.subr.mxu0 %v1896
    %1971 = vmatpush1.msra.mxu0 %v1895
    %1972 = vmatprep.subr.mxu0 %v1898
    %1973 = vmatpush1.msra.mxu0 %v1897
    %1974 = vmatprep.subr.mxu0 %v1900
    %1975 = vmatpush1.msra.mxu0 %v1899
    %1976 = vmatprep.subr.mxu0 %v1902
    %1977 = vmatpush1.msra.mxu0 %v1901
    %1978 = vmatprep.subr.mxu0 %v1904
    %1979 = vmatpush1.msra.mxu0 %v1903
    %1980 = vmatprep.subr.mxu0 %v1906
    %1981 = vmatpush1.msra.mxu0 %v1905
    %1982 = vmatprep.subr.mxu0 %v1908
    %1983 = vmatpush1.msra.mxu0 %v1907
    %1984 = vmatprep.subr.mxu0 %v1910
    %1985 = vmatpush1.msra.mxu0 %v1909
    %1986 = vmatprep.subr.mxu0 %v1912
    %1987 = vmatpush1.msra.mxu0 %v1911
    %1988 = vmatprep.subr.mxu0 %v1914
    %1989 = vmatpush1.msra.mxu0 %v1913
    %1990 = vmatprep.subr.mxu0 %v1916
    %1991 = vmatpush1.msra.mxu0 %v1915
    %1992 = vmatprep.subr.mxu0 %v1918
    %1993 = vmatpush1.msra.mxu0 %v1917
    %1994 = vmatprep.subr.mxu0 %v1920
    %1995 = vmatpush1.msra.mxu0 %v1919
    %1996 = vmatprep.subr.mxu0 %v1922
    %1997 = vmatpush1.msra.mxu0 %v1921
    %1998 = vmatprep.subr.mxu0 %v1924
    %1999 = vmatpush1.msra.mxu0 %v1923
    %2000 = vmatprep.subr.mxu0 %v1926
    %2001 = vmatpush1.msra.mxu0 %v1925
    %2002 = vmatprep.subr.mxu0 %v1928
    %2003 = vmatpush1.msra.mxu0 %v1927
    %2004 = vmatprep.subr.mxu0 %v1930
    %2005 = vmatpush1.msra.mxu0 %v1929
    %2006 = vmatprep.subr.mxu0 %v1932
    %2007 = vmatpush1.msra.mxu0 %v1931
    %2008 = vmatprep.subr.mxu0 %v1934
    %2009 = vmatpush1.msra.mxu0 %v1933
    %2010 = vmatprep.subr.mxu0 %v1936
    %2011 = vmatpush1.msra.mxu0 %v1935
    %2012 = vmatprep.subr.mxu0 %v1938
    %2013 = vmatpush1.msra.mxu0 %v1937
    %2014 = vmatprep.mubr.f32.mxu0 %v1873
    %2015 = vmatmul.mubr.f32.gmra.mrb[0].mxu0 %v1872
    %v2016 = vpop.f32.mrb[0].mxu0
    %v2017 = vadd.f32 %v1945, %v2016
    %v2018 = vpop.f32.mrb[0].mxu0
    %v2019 = vadd.f32 %v1949, %v2018
    %2020 = vdwg.mxu0
    %v2021 = vrot.slane %v2017, 4
    %v2022 = vadd.f32 %v2017, %v2021
    %v2023 = vrot.slane %v2022, 2
    %v2024 = vadd.f32 %v2022, %v2023
    %v2025 = vrot.slane %v2024, 1
    %v2026 = vadd.f32 %v2024, %v2025
    %v2027 = vrot.slane %v2019, 4
    %v2028 = vadd.f32 %v2019, %v2027
    %v2029 = vrot.slane %v2028, 2
    %v2030 = vadd.f32 %v2028, %v2029
    %v2031 = vrot.slane %v2030, 1
    %v2032 = vadd.f32 %v2030, %v2031
    %v2033 = vmul.f32 %v2026, %v1586
    %v2034 = vmul.f32 %v2032, %v1586
    %v2035 = vmul.f32 %v2017, %v2017
    %v2036 = vmul.f32 %v2019, %v2019
    %v2037 = vrot.slane %v2035, 4
    %v2038 = vadd.f32 %v2035, %v2037
    %v2039 = vrot.slane %v2038, 2
    %v2040 = vadd.f32 %v2038, %v2039
    %v2041 = vrot.slane %v2040, 1
    %v2042 = vadd.f32 %v2040, %v2041
    %v2043 = vrot.slane %v2036, 4
    %v2044 = vadd.f32 %v2036, %v2043
    %v2045 = vrot.slane %v2044, 2
    %v2046 = vadd.f32 %v2044, %v2045
    %v2047 = vrot.slane %v2046, 1
    %v2048 = vadd.f32 %v2046, %v2047
    %v2049 = vmul.f32 %v2042, %v1586
    %v2050 = vmul.f32 %v2048, %v1586
    %v2051 = vmul.f32 %v2033, %v2033
    %v2052 = vmul.f32 %v2034, %v2034
    %v2053 = vsub.f32 %v2049, %v2051
    %v2054 = vsub.f32 %v2050, %v2052
    %v2055 = vadd.f32 %v2053, 0.8
    %v2056 = vadd.f32 %v2054, 0.8
    %v2057 = vrsqrt.pop %v2055
    %v2058 = vrsqrt.pop %v2056
    %v2059 = vmul.f32 %v1940, %v2057
    %v2060 = vmul.f32 %v1941, %v2058
    %v2061 = vmul.f32 %v2033, %v2059
    %v2062 = vmul.f32 %v2034, %v2060
    %v2065 = vrot.slane %v2061, 7
    %v2066 = vrot.slane %v2062, 7
    %v2069 = vsub.f32 %v1940, %v2065
    %v2070 = vsub.f32 %v1941, %v2066
    %v2071 = vlaneseq
    %v2072 = vshrl.u32 %v2071, 7
    %v2073 = vsub.s32 1, %v2072
    %v2074 = vrot.slane %v2059, %v2073
    %v2075 = vlaneseq
    %v2076 = vshrl.u32 %v2075, 7
    %v2077 = vsub.s32 1, %v2076
    %v2078 = vrot.slane %v2060, %v2077
    %v2079 = vmul.f32 %v2017, %v2074
    %v2080 = vmul.f32 %v2019, %v2078
    %v2081 = vlaneseq
    %v2082 = vshrl.u32 %v2081, 7
    %v2083 = vsub.s32 2, %v2082
    %v2084 = vrot.slane %v2069, %v2083
    %v2085 = vlaneseq
    %v2086 = vshrl.u32 %v2085, 7
    %v2087 = vsub.s32 2, %v2086
    %v2088 = vrot.slane %v2070, %v2087
    %v2089 = vadd.f32 %v2079, %v2084
    %v2090 = vadd.f32 %v2080, %v2088
    %vm2091 = vcmp.gt.f32.partialorder %v2089, 0.0
    %vm2092 = vcmp.gt.f32.partialorder %v2090, 0.0
    %v2093 = vmul.f32 %v2089, 0.2
    %v2094 = vmul.f32 %v2090, 0.2
    %v2095 = vsel %vm2091, %v2089, %v2093
    %v2096 = vsel %vm2092, %v2090, %v2094
    %s2097 = scalar_lea.vmem [#allocation5], 6144
    %v2098 = vld [vmem:[%s2097] sm:$0xff]
    %v2099 = vld [vmem:[%s2097 + $0x8] sm:$0xff]
    %v2100 = vld [vmem:[%s2097 + $0x10] sm:$0xff]
    %v2101 = vld [vmem:[%s2097 + $0x18] sm:$0xff]
    %v2102 = vld [vmem:[%s2097 + $0x20] sm:$0xff]
    %v2103 = vld [vmem:[%s2097 + $0x28] sm:$0xff]
    %v2104 = vld [vmem:[%s2097 + $0x30] sm:$0xff]
    %v2105 = vld [vmem:[%s2097 + $0x38] sm:$0xff]
    %v2106 = vld [vmem:[%s2097 + $0x40] sm:$0xff]
    %v2107 = vld [vmem:[%s2097 + $0x48] sm:$0xff]
    %v2108 = vld [vmem:[%s2097 + $0x50] sm:$0xff]
    %v2109 = vld [vmem:[%s2097 + $0x58] sm:$0xff]
    %v2110 = vld [vmem:[%s2097 + $0x60] sm:$0xff]
    %v2111 = vld [vmem:[%s2097 + $0x68] sm:$0xff]
    %v2112 = vld [vmem:[%s2097 + $0x70] sm:$0xff]
    %v2113 = vld [vmem:[%s2097 + $0x78] sm:$0xff]
    %v2114 = vld [vmem:[%s2097 + $0x80] sm:$0xff]
    %v2115 = vld [vmem:[%s2097 + $0x88] sm:$0xff]
    %v2116 = vld [vmem:[%s2097 + $0x90] sm:$0xff]
    %v2117 = vld [vmem:[%s2097 + $0x98] sm:$0xff]
    %v2118 = vld [vmem:[%s2097 + $0xa0] sm:$0xff]
    %v2119 = vld [vmem:[%s2097 + $0xa8] sm:$0xff]
    %v2120 = vld [vmem:[%s2097 + $0xb0] sm:$0xff]
    %v2121 = vld [vmem:[%s2097 + $0xb8] sm:$0xff]
    %v2122 = vld [vmem:[%s2097 + $0xc0] sm:$0xff]
    %v2123 = vld [vmem:[%s2097 + $0xc8] sm:$0xff]
    %v2124 = vld [vmem:[%s2097 + $0xd0] sm:$0xff]
    %v2125 = vld [vmem:[%s2097 + $0xd8] sm:$0xff]
    %v2126 = vld [vmem:[%s2097 + $0xe0] sm:$0xff]
    %v2127 = vld [vmem:[%s2097 + $0xe8] sm:$0xff]
    %v2128 = vld [vmem:[%s2097 + $0xf0] sm:$0xff]
    %v2129 = vld [vmem:[%s2097 + $0xf8] sm:$0xff]
    %v2130 = vld [vmem:[%s2097 + $0x100] sm:$0xff]
    %v2131 = vld [vmem:[%s2097 + $0x108] sm:$0xff]
    %v2132 = vld [vmem:[%s2097 + $0x110] sm:$0xff]
    %v2133 = vld [vmem:[%s2097 + $0x118] sm:$0xff]
    %v2134 = vld [vmem:[%s2097 + $0x120] sm:$0xff]
    %v2135 = vld [vmem:[%s2097 + $0x128] sm:$0xff]
    %v2136 = vld [vmem:[%s2097 + $0x130] sm:$0xff]
    %v2137 = vld [vmem:[%s2097 + $0x138] sm:$0xff]
    %v2138 = vld [vmem:[%s2097 + $0x140] sm:$0xff]
    %v2139 = vld [vmem:[%s2097 + $0x148] sm:$0xff]
    %v2140 = vld [vmem:[%s2097 + $0x150] sm:$0xff]
    %v2141 = vld [vmem:[%s2097 + $0x158] sm:$0xff]
    %v2142 = vld [vmem:[%s2097 + $0x160] sm:$0xff]
    %v2143 = vld [vmem:[%s2097 + $0x168] sm:$0xff]
    %v2144 = vld [vmem:[%s2097 + $0x170] sm:$0xff]
    %v2145 = vld [vmem:[%s2097 + $0x178] sm:$0xff]
    %v2146 = vld [vmem:[%s2097 + $0x180] sm:$0xff]
    %v2147 = vld [vmem:[%s2097 + $0x188] sm:$0xff]
    %v2148 = vld [vmem:[%s2097 + $0x190] sm:$0xff]
    %v2149 = vld [vmem:[%s2097 + $0x198] sm:$0xff]
    %v2150 = vld [vmem:[%s2097 + $0x1a0] sm:$0xff]
    %v2151 = vld [vmem:[%s2097 + $0x1a8] sm:$0xff]
    %v2152 = vld [vmem:[%s2097 + $0x1b0] sm:$0xff]
    %v2153 = vld [vmem:[%s2097 + $0x1b8] sm:$0xff]
    %v2154 = vld [vmem:[%s2097 + $0x1c0] sm:$0xff]
    %v2155 = vld [vmem:[%s2097 + $0x1c8] sm:$0xff]
    %v2156 = vld [vmem:[%s2097 + $0x1d0] sm:$0xff]
    %v2157 = vld [vmem:[%s2097 + $0x1d8] sm:$0xff]
    %v2158 = vld [vmem:[%s2097 + $0x1e0] sm:$0xff]
    %v2159 = vld [vmem:[%s2097 + $0x1e8] sm:$0xff]
    %v2160 = vld [vmem:[%s2097 + $0x1f0] sm:$0xff]
    %v2161 = vld [vmem:[%s2097 + $0x1f8] sm:$0xff]
    %s2162 = scalar_lea.vmem [#allocation7], 192
    %v2163 = vld [vmem:[%s2162] sm:$0xff]
    %v2164 = vld [vmem:[%s2162 + $0x8] sm:$0xff]
    %v2165 = vlaneseq
    %v2166 = vshrl.u32 %v2165, 7
    %v2167 = vsub.s32 0, %v2166
    %v2168 = vrot.slane %v2163, %v2167
    %v2169 = vlaneseq
    %v2170 = vshrl.u32 %v2169, 7
    %v2171 = vsub.s32 0, %v2170
    %v2172 = vrot.slane %v2164, %v2171
    %2173 = vmatprep.subr.mxu0 %v2099
    %2174 = vmatpush1.msra.mxu0 %v2098
    %2175 = vmatprep.subr.mxu0 %v2101
    %2176 = vmatpush1.msra.mxu0 %v2100
    %2177 = vmatprep.subr.mxu0 %v2103
    %2178 = vmatpush1.msra.mxu0 %v2102
    %2179 = vmatprep.subr.mxu0 %v2105
    %2180 = vmatpush1.msra.mxu0 %v2104
    %2181 = vmatprep.subr.mxu0 %v2107
    %2182 = vmatpush1.msra.mxu0 %v2106
    %2183 = vmatprep.subr.mxu0 %v2109
    %2184 = vmatpush1.msra.mxu0 %v2108
    %2185 = vmatprep.subr.mxu0 %v2111
    %2186 = vmatpush1.msra.mxu0 %v2110
    %2187 = vmatprep.subr.mxu0 %v2113
    %2188 = vmatpush1.msra.mxu0 %v2112
    %2189 = vmatprep.subr.mxu0 %v2115
    %2190 = vmatpush1.msra.mxu0 %v2114
    %2191 = vmatprep.subr.mxu0 %v2117
    %2192 = vmatpush1.msra.mxu0 %v2116
    %2193 = vmatprep.subr.mxu0 %v2119
    %2194 = vmatpush1.msra.mxu0 %v2118
    %2195 = vmatprep.subr.mxu0 %v2121
    %2196 = vmatpush1.msra.mxu0 %v2120
    %2197 = vmatprep.subr.mxu0 %v2123
    %2198 = vmatpush1.msra.mxu0 %v2122
    %2199 = vmatprep.subr.mxu0 %v2125
    %2200 = vmatpush1.msra.mxu0 %v2124
    %2201 = vmatprep.subr.mxu0 %v2127
    %2202 = vmatpush1.msra.mxu0 %v2126
    %2203 = vmatprep.subr.mxu0 %v2129
    %2204 = vmatpush1.msra.mxu0 %v2128
    %2205 = vmatprep.subr.mxu0 %v2131
    %2206 = vmatpush1.msra.mxu0 %v2130
    %2207 = vmatprep.subr.mxu0 %v2133
    %2208 = vmatpush1.msra.mxu0 %v2132
    %2209 = vmatprep.subr.mxu0 %v2135
    %2210 = vmatpush1.msra.mxu0 %v2134
    %2211 = vmatprep.subr.mxu0 %v2137
    %2212 = vmatpush1.msra.mxu0 %v2136
    %2213 = vmatprep.subr.mxu0 %v2139
    %2214 = vmatpush1.msra.mxu0 %v2138
    %2215 = vmatprep.subr.mxu0 %v2141
    %2216 = vmatpush1.msra.mxu0 %v2140
    %2217 = vmatprep.subr.mxu0 %v2143
    %2218 = vmatpush1.msra.mxu0 %v2142
    %2219 = vmatprep.subr.mxu0 %v2145
    %2220 = vmatpush1.msra.mxu0 %v2144
    %2221 = vmatprep.subr.mxu0 %v2147
    %2222 = vmatpush1.msra.mxu0 %v2146
    %2223 = vmatprep.subr.mxu0 %v2149
    %2224 = vmatpush1.msra.mxu0 %v2148
    %2225 = vmatprep.subr.mxu0 %v2151
    %2226 = vmatpush1.msra.mxu0 %v2150
    %2227 = vmatprep.subr.mxu0 %v2153
    %2228 = vmatpush1.msra.mxu0 %v2152
    %2229 = vmatprep.subr.mxu0 %v2155
    %2230 = vmatpush1.msra.mxu0 %v2154
    %2231 = vmatprep.subr.mxu0 %v2157
    %2232 = vmatpush1.msra.mxu0 %v2156
    %2233 = vmatprep.subr.mxu0 %v2159
    %2234 = vmatpush1.msra.mxu0 %v2158
    %2235 = vmatprep.subr.mxu0 %v2161
    %2236 = vmatpush1.msra.mxu0 %v2160
    %2237 = vmatprep.mubr.f32.mxu0 %v2096
    %2238 = vmatmul.mubr.f32.gmra.mrb[0].mxu0 %v2095
    %v2239 = vpop.f32.mrb[0].mxu0
    %v2240 = vadd.f32 %v2168, %v2239
    %v2241 = vpop.f32.mrb[0].mxu0
    %v2242 = vadd.f32 %v2172, %v2241
    %2243 = vdwg.mxu0
    %v2244 = vrot.slane %v2240, 4
    %v2245 = vadd.f32 %v2240, %v2244
    %v2246 = vrot.slane %v2245, 2
    %v2247 = vadd.f32 %v2245, %v2246
    %v2248 = vrot.slane %v2247, 1
    %v2249 = vadd.f32 %v2247, %v2248
    %v2250 = vrot.slane %v2242, 4
    %v2251 = vadd.f32 %v2242, %v2250
    %v2252 = vrot.slane %v2251, 2
    %v2253 = vadd.f32 %v2251, %v2252
    %v2254 = vrot.slane %v2253, 1
    %v2255 = vadd.f32 %v2253, %v2254
    %v2256 = vmul.f32 %v2249, %v1586
    %v2257 = vmul.f32 %v2255, %v1586
    %v2258 = vmul.f32 %v2240, %v2240
    %v2259 = vmul.f32 %v2242, %v2242
    %v2260 = vrot.slane %v2258, 4
    %v2261 = vadd.f32 %v2258, %v2260
    %v2262 = vrot.slane %v2261, 2
    %v2263 = vadd.f32 %v2261, %v2262
    %v2264 = vrot.slane %v2263, 1
    %v2265 = vadd.f32 %v2263, %v2264
    %v2266 = vrot.slane %v2259, 4
    %v2267 = vadd.f32 %v2259, %v2266
    %v2268 = vrot.slane %v2267, 2
    %v2269 = vadd.f32 %v2267, %v2268
    %v2270 = vrot.slane %v2269, 1
    %v2271 = vadd.f32 %v2269, %v2270
    %v2272 = vmul.f32 %v2265, %v1586
    %v2273 = vmul.f32 %v2271, %v1586
    %v2274 = vmul.f32 %v2256, %v2256
    %v2275 = vmul.f32 %v2257, %v2257
    %v2276 = vsub.f32 %v2272, %v2274
    %v2277 = vsub.f32 %v2273, %v2275
    %v2278 = vadd.f32 %v2276, 0.8
    %v2279 = vadd.f32 %v2277, 0.8
    %v2280 = vrsqrt.pop %v2278
    %v2281 = vrsqrt.pop %v2279
    %v2282 = vmul.f32 %v2163, %v2280
    %v2283 = vmul.f32 %v2164, %v2281
    %v2284 = vmul.f32 %v2256, %v2282
    %v2285 = vmul.f32 %v2257, %v2283
    %v2288 = vrot.slane %v2284, 7
    %v2289 = vrot.slane %v2285, 7
    %v2292 = vsub.f32 %v2163, %v2288
    %v2293 = vsub.f32 %v2164, %v2289
    %v2294 = vlaneseq
    %v2295 = vshrl.u32 %v2294, 7
    %v2296 = vsub.s32 1, %v2295
    %v2297 = vrot.slane %v2282, %v2296
    %v2298 = vlaneseq
    %v2299 = vshrl.u32 %v2298, 7
    %v2300 = vsub.s32 1, %v2299
    %v2301 = vrot.slane %v2283, %v2300
    %v2302 = vmul.f32 %v2240, %v2297
    %v2303 = vmul.f32 %v2242, %v2301
    %v2304 = vlaneseq
    %v2305 = vshrl.u32 %v2304, 7
    %v2306 = vsub.s32 2, %v2305
    %v2307 = vrot.slane %v2292, %v2306
    %v2308 = vlaneseq
    %v2309 = vshrl.u32 %v2308, 7
    %v2310 = vsub.s32 2, %v2309
    %v2311 = vrot.slane %v2293, %v2310
    %v2312 = vadd.f32 %v2302, %v2307
    %v2313 = vadd.f32 %v2303, %v2311
    %vm2314 = vcmp.gt.f32.partialorder %v2312, 0.0
    %vm2315 = vcmp.gt.f32.partialorder %v2313, 0.0
    %v2316 = vmul.f32 %v2312, 0.2
    %v2317 = vmul.f32 %v2313, 0.2
    %v2318 = vsel %vm2314, %v2312, %v2316
    %v2319 = vsel %vm2315, %v2313, %v2317
    %s2320 = scalar_lea.vmem [#allocation5], 6656
    %v2321 = vld [vmem:[%s2320] sm:$0xff]
    %v2322 = vld [vmem:[%s2320 + $0x8] sm:$0xff]
    %v2323 = vld [vmem:[%s2320 + $0x10] sm:$0xff]
    %v2324 = vld [vmem:[%s2320 + $0x18] sm:$0xff]
    %v2325 = vld [vmem:[%s2320 + $0x20] sm:$0xff]
    %v2326 = vld [vmem:[%s2320 + $0x28] sm:$0xff]
    %v2327 = vld [vmem:[%s2320 + $0x30] sm:$0xff]
    %v2328 = vld [vmem:[%s2320 + $0x38] sm:$0xff]
    %v2329 = vld [vmem:[%s2320 + $0x40] sm:$0xff]
    %v2330 = vld [vmem:[%s2320 + $0x48] sm:$0xff]
    %v2331 = vld [vmem:[%s2320 + $0x50] sm:$0xff]
    %v2332 = vld [vmem:[%s2320 + $0x58] sm:$0xff]
    %v2333 = vld [vmem:[%s2320 + $0x60] sm:$0xff]
    %v2334 = vld [vmem:[%s2320 + $0x68] sm:$0xff]
    %v2335 = vld [vmem:[%s2320 + $0x70] sm:$0xff]
    %v2336 = vld [vmem:[%s2320 + $0x78] sm:$0xff]
    %v2337 = vld [vmem:[%s2320 + $0x80] sm:$0xff]
    %v2338 = vld [vmem:[%s2320 + $0x88] sm:$0xff]
    %v2339 = vld [vmem:[%s2320 + $0x90] sm:$0xff]
    %v2340 = vld [vmem:[%s2320 + $0x98] sm:$0xff]
    %v2341 = vld [vmem:[%s2320 + $0xa0] sm:$0xff]
    %v2342 = vld [vmem:[%s2320 + $0xa8] sm:$0xff]
    %v2343 = vld [vmem:[%s2320 + $0xb0] sm:$0xff]
    %v2344 = vld [vmem:[%s2320 + $0xb8] sm:$0xff]
    %v2345 = vld [vmem:[%s2320 + $0xc0] sm:$0xff]
    %v2346 = vld [vmem:[%s2320 + $0xc8] sm:$0xff]
    %v2347 = vld [vmem:[%s2320 + $0xd0] sm:$0xff]
    %v2348 = vld [vmem:[%s2320 + $0xd8] sm:$0xff]
    %v2349 = vld [vmem:[%s2320 + $0xe0] sm:$0xff]
    %v2350 = vld [vmem:[%s2320 + $0xe8] sm:$0xff]
    %v2351 = vld [vmem:[%s2320 + $0xf0] sm:$0xff]
    %v2352 = vld [vmem:[%s2320 + $0xf8] sm:$0xff]
    %v2353 = vld [vmem:[%s2320 + $0x100] sm:$0xff]
    %v2354 = vld [vmem:[%s2320 + $0x108] sm:$0xff]
    %v2355 = vld [vmem:[%s2320 + $0x110] sm:$0xff]
    %v2356 = vld [vmem:[%s2320 + $0x118] sm:$0xff]
    %v2357 = vld [vmem:[%s2320 + $0x120] sm:$0xff]
    %v2358 = vld [vmem:[%s2320 + $0x128] sm:$0xff]
    %v2359 = vld [vmem:[%s2320 + $0x130] sm:$0xff]
    %v2360 = vld [vmem:[%s2320 + $0x138] sm:$0xff]
    %v2361 = vld [vmem:[%s2320 + $0x140] sm:$0xff]
    %v2362 = vld [vmem:[%s2320 + $0x148] sm:$0xff]
    %v2363 = vld [vmem:[%s2320 + $0x150] sm:$0xff]
    %v2364 = vld [vmem:[%s2320 + $0x158] sm:$0xff]
    %v2365 = vld [vmem:[%s2320 + $0x160] sm:$0xff]
    %v2366 = vld [vmem:[%s2320 + $0x168] sm:$0xff]
    %v2367 = vld [vmem:[%s2320 + $0x170] sm:$0xff]
    %v2368 = vld [vmem:[%s2320 + $0x178] sm:$0xff]
    %v2369 = vld [vmem:[%s2320 + $0x180] sm:$0xff]
    %v2370 = vld [vmem:[%s2320 + $0x188] sm:$0xff]
    %v2371 = vld [vmem:[%s2320 + $0x190] sm:$0xff]
    %v2372 = vld [vmem:[%s2320 + $0x198] sm:$0xff]
    %v2373 = vld [vmem:[%s2320 + $0x1a0] sm:$0xff]
    %v2374 = vld [vmem:[%s2320 + $0x1a8] sm:$0xff]
    %v2375 = vld [vmem:[%s2320 + $0x1b0] sm:$0xff]
    %v2376 = vld [vmem:[%s2320 + $0x1b8] sm:$0xff]
    %v2377 = vld [vmem:[%s2320 + $0x1c0] sm:$0xff]
    %v2378 = vld [vmem:[%s2320 + $0x1c8] sm:$0xff]
    %v2379 = vld [vmem:[%s2320 + $0x1d0] sm:$0xff]
    %v2380 = vld [vmem:[%s2320 + $0x1d8] sm:$0xff]
    %v2381 = vld [vmem:[%s2320 + $0x1e0] sm:$0xff]
    %v2382 = vld [vmem:[%s2320 + $0x1e8] sm:$0xff]
    %v2383 = vld [vmem:[%s2320 + $0x1f0] sm:$0xff]
    %v2384 = vld [vmem:[%s2320 + $0x1f8] sm:$0xff]
    %s2385 = scalar_lea.vmem [#allocation7], 208
    %v2386 = vld [vmem:[%s2385] sm:$0xff]
    %v2387 = vld [vmem:[%s2385 + $0x8] sm:$0xff]
    %v2388 = vlaneseq
    %v2389 = vshrl.u32 %v2388, 7
    %v2390 = vsub.s32 0, %v2389
    %v2391 = vrot.slane %v2386, %v2390
    %v2392 = vlaneseq
    %v2393 = vshrl.u32 %v2392, 7
    %v2394 = vsub.s32 0, %v2393
    %v2395 = vrot.slane %v2387, %v2394
    %2396 = vmatprep.subr.mxu0 %v2322
    %2397 = vmatpush1.msra.mxu0 %v2321
    %2398 = vmatprep.subr.mxu0 %v2324
    %2399 = vmatpush1.msra.mxu0 %v2323
    %2400 = vmatprep.subr.mxu0 %v2326
    %2401 = vmatpush1.msra.mxu0 %v2325
    %2402 = vmatprep.subr.mxu0 %v2328
    %2403 = vmatpush1.msra.mxu0 %v2327
    %2404 = vmatprep.subr.mxu0 %v2330
    %2405 = vmatpush1.msra.mxu0 %v2329
    %2406 = vmatprep.subr.mxu0 %v2332
    %2407 = vmatpush1.msra.mxu0 %v2331
    %2408 = vmatprep.subr.mxu0 %v2334
    %2409 = vmatpush1.msra.mxu0 %v2333
    %2410 = vmatprep.subr.mxu0 %v2336
    %2411 = vmatpush1.msra.mxu0 %v2335
    %2412 = vmatprep.subr.mxu0 %v2338
    %2413 = vmatpush1.msra.mxu0 %v2337
    %2414 = vmatprep.subr.mxu0 %v2340
    %2415 = vmatpush1.msra.mxu0 %v2339
    %2416 = vmatprep.subr.mxu0 %v2342
    %2417 = vmatpush1.msra.mxu0 %v2341
    %2418 = vmatprep.subr.mxu0 %v2344
    %2419 = vmatpush1.msra.mxu0 %v2343
    %2420 = vmatprep.subr.mxu0 %v2346
    %2421 = vmatpush1.msra.mxu0 %v2345
    %2422 = vmatprep.subr.mxu0 %v2348
    %2423 = vmatpush1.msra.mxu0 %v2347
    %2424 = vmatprep.subr.mxu0 %v2350
    %2425 = vmatpush1.msra.mxu0 %v2349
    %2426 = vmatprep.subr.mxu0 %v2352
    %2427 = vmatpush1.msra.mxu0 %v2351
    %2428 = vmatprep.subr.mxu0 %v2354
    %2429 = vmatpush1.msra.mxu0 %v2353
    %2430 = vmatprep.subr.mxu0 %v2356
    %2431 = vmatpush1.msra.mxu0 %v2355
    %2432 = vmatprep.subr.mxu0 %v2358
    %2433 = vmatpush1.msra.mxu0 %v2357
    %2434 = vmatprep.subr.mxu0 %v2360
    %2435 = vmatpush1.msra.mxu0 %v2359
    %2436 = vmatprep.subr.mxu0 %v2362
    %2437 = vmatpush1.msra.mxu0 %v2361
    %2438 = vmatprep.subr.mxu0 %v2364
    %2439 = vmatpush1.msra.mxu0 %v2363
    %2440 = vmatprep.subr.mxu0 %v2366
    %2441 = vmatpush1.msra.mxu0 %v2365
    %2442 = vmatprep.subr.mxu0 %v2368
    %2443 = vmatpush1.msra.mxu0 %v2367
    %2444 = vmatprep.subr.mxu0 %v2370
    %2445 = vmatpush1.msra.mxu0 %v2369
    %2446 = vmatprep.subr.mxu0 %v2372
    %2447 = vmatpush1.msra.mxu0 %v2371
    %2448 = vmatprep.subr.mxu0 %v2374
    %2449 = vmatpush1.msra.mxu0 %v2373
    %2450 = vmatprep.subr.mxu0 %v2376
    %2451 = vmatpush1.msra.mxu0 %v2375
    %2452 = vmatprep.subr.mxu0 %v2378
    %2453 = vmatpush1.msra.mxu0 %v2377
    %2454 = vmatprep.subr.mxu0 %v2380
    %2455 = vmatpush1.msra.mxu0 %v2379
    %2456 = vmatprep.subr.mxu0 %v2382
    %2457 = vmatpush1.msra.mxu0 %v2381
    %2458 = vmatprep.subr.mxu0 %v2384
    %2459 = vmatpush1.msra.mxu0 %v2383
    %2460 = vmatprep.mubr.f32.mxu0 %v2319
    %2461 = vmatmul.mubr.f32.gmra.mrb[0].mxu0 %v2318
    %v2462 = vpop.f32.mrb[0].mxu0
    %v2463 = vadd.f32 %v2391, %v2462
    %v2464 = vpop.f32.mrb[0].mxu0
    %v2465 = vadd.f32 %v2395, %v2464
    %2466 = vdwg.mxu0
    %v2467 = vrot.slane %v2463, 4
    %v2468 = vadd.f32 %v2463, %v2467
    %v2469 = vrot.slane %v2468, 2
    %v2470 = vadd.f32 %v2468, %v2469
    %v2471 = vrot.slane %v2470, 1
    %v2472 = vadd.f32 %v2470, %v2471
    %v2473 = vrot.slane %v2465, 4
    %v2474 = vadd.f32 %v2465, %v2473
    %v2475 = vrot.slane %v2474, 2
    %v2476 = vadd.f32 %v2474, %v2475
    %v2477 = vrot.slane %v2476, 1
    %v2478 = vadd.f32 %v2476, %v2477
    %v2479 = vmul.f32 %v2472, %v1586
    %v2480 = vmul.f32 %v2478, %v1586
    %v2481 = vmul.f32 %v2463, %v2463
    %v2482 = vmul.f32 %v2465, %v2465
    %v2483 = vrot.slane %v2481, 4
    %v2484 = vadd.f32 %v2481, %v2483
    %v2485 = vrot.slane %v2484, 2
    %v2486 = vadd.f32 %v2484, %v2485
    %v2487 = vrot.slane %v2486, 1
    %v2488 = vadd.f32 %v2486, %v2487
    %v2489 = vrot.slane %v2482, 4
    %v2490 = vadd.f32 %v2482, %v2489
    %v2491 = vrot.slane %v2490, 2
    %v2492 = vadd.f32 %v2490, %v2491
    %v2493 = vrot.slane %v2492, 1
    %v2494 = vadd.f32 %v2492, %v2493
    %v2495 = vmul.f32 %v2488, %v1586
    %v2496 = vmul.f32 %v2494, %v1586
    %v2497 = vmul.f32 %v2479, %v2479
    %v2498 = vmul.f32 %v2480, %v2480
    %v2499 = vsub.f32 %v2495, %v2497
    %v2500 = vsub.f32 %v2496, %v2498
    %v2501 = vadd.f32 %v2499, 0.8
    %v2502 = vadd.f32 %v2500, 0.8
    %v2503 = vrsqrt.pop %v2501
    %v2504 = vrsqrt.pop %v2502
    %v2505 = vmul.f32 %v2386, %v2503
    %v2506 = vmul.f32 %v2387, %v2504
    %v2507 = vmul.f32 %v2479, %v2505
    %v2508 = vmul.f32 %v2480, %v2506
    %v2511 = vrot.slane %v2507, 7
    %v2512 = vrot.slane %v2508, 7
    %v2515 = vsub.f32 %v2386, %v2511
    %v2516 = vsub.f32 %v2387, %v2512
    %v2517 = vlaneseq
    %v2518 = vshrl.u32 %v2517, 7
    %v2519 = vsub.s32 1, %v2518
    %v2520 = vrot.slane %v2505, %v2519
    %v2521 = vlaneseq
    %v2522 = vshrl.u32 %v2521, 7
    %v2523 = vsub.s32 1, %v2522
    %v2524 = vrot.slane %v2506, %v2523
    %v2525 = vmul.f32 %v2463, %v2520
    %v2526 = vmul.f32 %v2465, %v2524
    %v2527 = vlaneseq
    %v2528 = vshrl.u32 %v2527, 7
    %v2529 = vsub.s32 2, %v2528
    %v2530 = vrot.slane %v2515, %v2529
    %v2531 = vlaneseq
    %v2532 = vshrl.u32 %v2531, 7
    %v2533 = vsub.s32 2, %v2532
    %v2534 = vrot.slane %v2516, %v2533
    %v2535 = vadd.f32 %v2525, %v2530
    %v2536 = vadd.f32 %v2526, %v2534
    %vm2537 = vcmp.gt.f32.partialorder %v2535, 0.0
    %vm2538 = vcmp.gt.f32.partialorder %v2536, 0.0
    %v2539 = vmul.f32 %v2535, 0.2
    %v2540 = vmul.f32 %v2536, 0.2
    %v2541 = vsel %vm2537, %v2535, %v2539
    %v2542 = vsel %vm2538, %v2536, %v2540
    %s2543 = scalar_lea.vmem [#allocation5], 7168
    %v2544 = vld [vmem:[%s2543] sm:$0xff]
    %v2545 = vld [vmem:[%s2543 + $0x8] sm:$0xff]
    %v2546 = vld [vmem:[%s2543 + $0x10] sm:$0xff]
    %v2547 = vld [vmem:[%s2543 + $0x18] sm:$0xff]
    %v2548 = vld [vmem:[%s2543 + $0x20] sm:$0xff]
    %v2549 = vld [vmem:[%s2543 + $0x28] sm:$0xff]
    %v2550 = vld [vmem:[%s2543 + $0x30] sm:$0xff]
    %v2551 = vld [vmem:[%s2543 + $0x38] sm:$0xff]
    %v2552 = vld [vmem:[%s2543 + $0x40] sm:$0xff]
    %v2553 = vld [vmem:[%s2543 + $0x48] sm:$0xff]
    %v2554 = vld [vmem:[%s2543 + $0x50] sm:$0xff]
    %v2555 = vld [vmem:[%s2543 + $0x58] sm:$0xff]
    %v2556 = vld [vmem:[%s2543 + $0x60] sm:$0xff]
    %v2557 = vld [vmem:[%s2543 + $0x68] sm:$0xff]
    %v2558 = vld [vmem:[%s2543 + $0x70] sm:$0xff]
    %v2559 = vld [vmem:[%s2543 + $0x78] sm:$0xff]
    %v2560 = vld [vmem:[%s2543 + $0x80] sm:$0xff]
    %v2561 = vld [vmem:[%s2543 + $0x88] sm:$0xff]
    %v2562 = vld [vmem:[%s2543 + $0x90] sm:$0xff]
    %v2563 = vld [vmem:[%s2543 + $0x98] sm:$0xff]
    %v2564 = vld [vmem:[%s2543 + $0xa0] sm:$0xff]
    %v2565 = vld [vmem:[%s2543 + $0xa8] sm:$0xff]
    %v2566 = vld [vmem:[%s2543 + $0xb0] sm:$0xff]
    %v2567 = vld [vmem:[%s2543 + $0xb8] sm:$0xff]
    %v2568 = vld [vmem:[%s2543 + $0xc0] sm:$0xff]
    %v2569 = vld [vmem:[%s2543 + $0xc8] sm:$0xff]
    %v2570 = vld [vmem:[%s2543 + $0xd0] sm:$0xff]
    %v2571 = vld [vmem:[%s2543 + $0xd8] sm:$0xff]
    %v2572 = vld [vmem:[%s2543 + $0xe0] sm:$0xff]
    %v2573 = vld [vmem:[%s2543 + $0xe8] sm:$0xff]
    %v2574 = vld [vmem:[%s2543 + $0xf0] sm:$0xff]
    %v2575 = vld [vmem:[%s2543 + $0xf8] sm:$0xff]
    %v2576 = vld [vmem:[%s2543 + $0x100] sm:$0xff]
    %v2577 = vld [vmem:[%s2543 + $0x108] sm:$0xff]
    %v2578 = vld [vmem:[%s2543 + $0x110] sm:$0xff]
    %v2579 = vld [vmem:[%s2543 + $0x118] sm:$0xff]
    %v2580 = vld [vmem:[%s2543 + $0x120] sm:$0xff]
    %v2581 = vld [vmem:[%s2543 + $0x128] sm:$0xff]
    %v2582 = vld [vmem:[%s2543 + $0x130] sm:$0xff]
    %v2583 = vld [vmem:[%s2543 + $0x138] sm:$0xff]
    %v2584 = vld [vmem:[%s2543 + $0x140] sm:$0xff]
    %v2585 = vld [vmem:[%s2543 + $0x148] sm:$0xff]
    %v2586 = vld [vmem:[%s2543 + $0x150] sm:$0xff]
    %v2587 = vld [vmem:[%s2543 + $0x158] sm:$0xff]
    %v2588 = vld [vmem:[%s2543 + $0x160] sm:$0xff]
    %v2589 = vld [vmem:[%s2543 + $0x168] sm:$0xff]
    %v2590 = vld [vmem:[%s2543 + $0x170] sm:$0xff]
    %v2591 = vld [vmem:[%s2543 + $0x178] sm:$0xff]
    %v2592 = vld [vmem:[%s2543 + $0x180] sm:$0xff]
    %v2593 = vld [vmem:[%s2543 + $0x188] sm:$0xff]
    %v2594 = vld [vmem:[%s2543 + $0x190] sm:$0xff]
    %v2595 = vld [vmem:[%s2543 + $0x198] sm:$0xff]
    %v2596 = vld [vmem:[%s2543 + $0x1a0] sm:$0xff]
    %v2597 = vld [vmem:[%s2543 + $0x1a8] sm:$0xff]
    %v2598 = vld [vmem:[%s2543 + $0x1b0] sm:$0xff]
    %v2599 = vld [vmem:[%s2543 + $0x1b8] sm:$0xff]
    %v2600 = vld [vmem:[%s2543 + $0x1c0] sm:$0xff]
    %v2601 = vld [vmem:[%s2543 + $0x1c8] sm:$0xff]
    %v2602 = vld [vmem:[%s2543 + $0x1d0] sm:$0xff]
    %v2603 = vld [vmem:[%s2543 + $0x1d8] sm:$0xff]
    %v2604 = vld [vmem:[%s2543 + $0x1e0] sm:$0xff]
    %v2605 = vld [vmem:[%s2543 + $0x1e8] sm:$0xff]
    %v2606 = vld [vmem:[%s2543 + $0x1f0] sm:$0xff]
    %v2607 = vld [vmem:[%s2543 + $0x1f8] sm:$0xff]
    %s2608 = scalar_lea.vmem [#allocation7], 224
    %v2609 = vld [vmem:[%s2608] sm:$0xff]
    %v2610 = vld [vmem:[%s2608 + $0x8] sm:$0xff]
    %v2611 = vlaneseq
    %v2612 = vshrl.u32 %v2611, 7
    %v2613 = vsub.s32 0, %v2612
    %v2614 = vrot.slane %v2609, %v2613
    %v2615 = vlaneseq
    %v2616 = vshrl.u32 %v2615, 7
    %v2617 = vsub.s32 0, %v2616
    %v2618 = vrot.slane %v2610, %v2617
    %2619 = vmatprep.subr.mxu0 %v2545
    %2620 = vmatpush1.msra.mxu0 %v2544
    %2621 = vmatprep.subr.mxu0 %v2547
    %2622 = vmatpush1.msra.mxu0 %v2546
    %2623 = vmatprep.subr.mxu0 %v2549
    %2624 = vmatpush1.msra.mxu0 %v2548
    %2625 = vmatprep.subr.mxu0 %v2551
    %2626 = vmatpush1.msra.mxu0 %v2550
    %2627 = vmatprep.subr.mxu0 %v2553
    %2628 = vmatpush1.msra.mxu0 %v2552
    %2629 = vmatprep.subr.mxu0 %v2555
    %2630 = vmatpush1.msra.mxu0 %v2554
    %2631 = vmatprep.subr.mxu0 %v2557
    %2632 = vmatpush1.msra.mxu0 %v2556
    %2633 = vmatprep.subr.mxu0 %v2559
    %2634 = vmatpush1.msra.mxu0 %v2558
    %2635 = vmatprep.subr.mxu0 %v2561
    %2636 = vmatpush1.msra.mxu0 %v2560
    %2637 = vmatprep.subr.mxu0 %v2563
    %2638 = vmatpush1.msra.mxu0 %v2562
    %2639 = vmatprep.subr.mxu0 %v2565
    %2640 = vmatpush1.msra.mxu0 %v2564
    %2641 = vmatprep.subr.mxu0 %v2567
    %2642 = vmatpush1.msra.mxu0 %v2566
    %2643 = vmatprep.subr.mxu0 %v2569
    %2644 = vmatpush1.msra.mxu0 %v2568
    %2645 = vmatprep.subr.mxu0 %v2571
    %2646 = vmatpush1.msra.mxu0 %v2570
    %2647 = vmatprep.subr.mxu0 %v2573
    %2648 = vmatpush1.msra.mxu0 %v2572
    %2649 = vmatprep.subr.mxu0 %v2575
    %2650 = vmatpush1.msra.mxu0 %v2574
    %2651 = vmatprep.subr.mxu0 %v2577
    %2652 = vmatpush1.msra.mxu0 %v2576
    %2653 = vmatprep.subr.mxu0 %v2579
    %2654 = vmatpush1.msra.mxu0 %v2578
    %2655 = vmatprep.subr.mxu0 %v2581
    %2656 = vmatpush1.msra.mxu0 %v2580
    %2657 = vmatprep.subr.mxu0 %v2583
    %2658 = vmatpush1.msra.mxu0 %v2582
    %2659 = vmatprep.subr.mxu0 %v2585
    %2660 = vmatpush1.msra.mxu0 %v2584
    %2661 = vmatprep.subr.mxu0 %v2587
    %2662 = vmatpush1.msra.mxu0 %v2586
    %2663 = vmatprep.subr.mxu0 %v2589
    %2664 = vmatpush1.msra.mxu0 %v2588
    %2665 = vmatprep.subr.mxu0 %v2591
    %2666 = vmatpush1.msra.mxu0 %v2590
    %2667 = vmatprep.subr.mxu0 %v2593
    %2668 = vmatpush1.msra.mxu0 %v2592
    %2669 = vmatprep.subr.mxu0 %v2595
    %2670 = vmatpush1.msra.mxu0 %v2594
    %2671 = vmatprep.subr.mxu0 %v2597
    %2672 = vmatpush1.msra.mxu0 %v2596
    %2673 = vmatprep.subr.mxu0 %v2599
    %2674 = vmatpush1.msra.mxu0 %v2598
    %2675 = vmatprep.subr.mxu0 %v2601
    %2676 = vmatpush1.msra.mxu0 %v2600
    %2677 = vmatprep.subr.mxu0 %v2603
    %2678 = vmatpush1.msra.mxu0 %v2602
    %2679 = vmatprep.subr.mxu0 %v2605
    %2680 = vmatpush1.msra.mxu0 %v2604
    %2681 = vmatprep.subr.mxu0 %v2607
    %2682 = vmatpush1.msra.mxu0 %v2606
    %2683 = vmatprep.mubr.f32.mxu0 %v2542
    %2684 = vmatmul.mubr.f32.gmra.mrb[0].mxu0 %v2541
    %v2685 = vpop.f32.mrb[0].mxu0
    %v2686 = vadd.f32 %v2614, %v2685
    %v2687 = vpop.f32.mrb[0].mxu0
    %v2688 = vadd.f32 %v2618, %v2687
    %2689 = vdwg.mxu0
    %v2690 = vrot.slane %v2686, 4
    %v2691 = vadd.f32 %v2686, %v2690
    %v2692 = vrot.slane %v2691, 2
    %v2693 = vadd.f32 %v2691, %v2692
    %v2694 = vrot.slane %v2693, 1
    %v2695 = vadd.f32 %v2693, %v2694
    %v2696 = vrot.slane %v2688, 4
    %v2697 = vadd.f32 %v2688, %v2696
    %v2698 = vrot.slane %v2697, 2
    %v2699 = vadd.f32 %v2697, %v2698
    %v2700 = vrot.slane %v2699, 1
    %v2701 = vadd.f32 %v2699, %v2700
    %v2702 = vmul.f32 %v2695, %v1586
    %v2703 = vmul.f32 %v2701, %v1586
    %v2704 = vmul.f32 %v2686, %v2686
    %v2705 = vmul.f32 %v2688, %v2688
    %v2706 = vrot.slane %v2704, 4
    %v2707 = vadd.f32 %v2704, %v2706
    %v2708 = vrot.slane %v2707, 2
    %v2709 = vadd.f32 %v2707, %v2708
    %v2710 = vrot.slane %v2709, 1
    %v2711 = vadd.f32 %v2709, %v2710
    %v2712 = vrot.slane %v2705, 4
    %v2713 = vadd.f32 %v2705, %v2712
    %v2714 = vrot.slane %v2713, 2
    %v2715 = vadd.f32 %v2713, %v2714
    %v2716 = vrot.slane %v2715, 1
    %v2717 = vadd.f32 %v2715, %v2716
    %v2718 = vmul.f32 %v2711, %v1586
    %v2719 = vmul.f32 %v2717, %v1586
    %v2720 = vmul.f32 %v2702, %v2702
    %v2721 = vmul.f32 %v2703, %v2703
    %v2722 = vsub.f32 %v2718, %v2720
    %v2723 = vsub.f32 %v2719, %v2721
    %v2724 = vadd.f32 %v2722, 0.8
    %v2725 = vadd.f32 %v2723, 0.8
    %v2726 = vrsqrt.pop %v2724
    %v2727 = vrsqrt.pop %v2725
    %v2728 = vmul.f32 %v2609, %v2726
    %v2729 = vmul.f32 %v2610, %v2727
    %v2730 = vmul.f32 %v2702, %v2728
    %v2731 = vmul.f32 %v2703, %v2729
    %v2734 = vrot.slane %v2730, 7
    %v2735 = vrot.slane %v2731, 7
    %v2738 = vsub.f32 %v2609, %v2734
    %v2739 = vsub.f32 %v2610, %v2735
    %v2740 = vlaneseq
    %v2741 = vshrl.u32 %v2740, 7
    %v2742 = vsub.s32 1, %v2741
    %v2743 = vrot.slane %v2728, %v2742
    %v2744 = vlaneseq
    %v2745 = vshrl.u32 %v2744, 7
    %v2746 = vsub.s32 1, %v2745
    %v2747 = vrot.slane %v2729, %v2746
    %v2748 = vmul.f32 %v2686, %v2743
    %v2749 = vmul.f32 %v2688, %v2747
    %v2750 = vlaneseq
    %v2751 = vshrl.u32 %v2750, 7
    %v2752 = vsub.s32 2, %v2751
    %v2753 = vrot.slane %v2738, %v2752
    %v2754 = vlaneseq
    %v2755 = vshrl.u32 %v2754, 7
    %v2756 = vsub.s32 2, %v2755
    %v2757 = vrot.slane %v2739, %v2756
    %v2758 = vadd.f32 %v2748, %v2753
    %v2759 = vadd.f32 %v2749, %v2757
    %vm2760 = vcmp.gt.f32.partialorder %v2758, 0.0
    %vm2761 = vcmp.gt.f32.partialorder %v2759, 0.0
    %v2762 = vmul.f32 %v2758, 0.2
    %v2763 = vmul.f32 %v2759, 0.2
    %v2764 = vsel %vm2760, %v2758, %v2762
    %v2765 = vsel %vm2761, %v2759, %v2763
    %s2766 = scalar_lea.vmem [#allocation5], 7680
    %v2767 = vld [vmem:[%s2766] sm:$0xff]
    %v2768 = vld [vmem:[%s2766 + $0x8] sm:$0xff]
    %v2769 = vld [vmem:[%s2766 + $0x10] sm:$0xff]
    %v2770 = vld [vmem:[%s2766 + $0x18] sm:$0xff]
    %v2771 = vld [vmem:[%s2766 + $0x20] sm:$0xff]
    %v2772 = vld [vmem:[%s2766 + $0x28] sm:$0xff]
    %v2773 = vld [vmem:[%s2766 + $0x30] sm:$0xff]
    %v2774 = vld [vmem:[%s2766 + $0x38] sm:$0xff]
    %v2775 = vld [vmem:[%s2766 + $0x40] sm:$0xff]
    %v2776 = vld [vmem:[%s2766 + $0x48] sm:$0xff]
    %v2777 = vld [vmem:[%s2766 + $0x50] sm:$0xff]
    %v2778 = vld [vmem:[%s2766 + $0x58] sm:$0xff]
    %v2779 = vld [vmem:[%s2766 + $0x60] sm:$0xff]
    %v2780 = vld [vmem:[%s2766 + $0x68] sm:$0xff]
    %v2781 = vld [vmem:[%s2766 + $0x70] sm:$0xff]
    %v2782 = vld [vmem:[%s2766 + $0x78] sm:$0xff]
    %v2783 = vld [vmem:[%s2766 + $0x80] sm:$0xff]
    %v2784 = vld [vmem:[%s2766 + $0x88] sm:$0xff]
    %v2785 = vld [vmem:[%s2766 + $0x90] sm:$0xff]
    %v2786 = vld [vmem:[%s2766 + $0x98] sm:$0xff]
    %v2787 = vld [vmem:[%s2766 + $0xa0] sm:$0xff]
    %v2788 = vld [vmem:[%s2766 + $0xa8] sm:$0xff]
    %v2789 = vld [vmem:[%s2766 + $0xb0] sm:$0xff]
    %v2790 = vld [vmem:[%s2766 + $0xb8] sm:$0xff]
    %v2791 = vld [vmem:[%s2766 + $0xc0] sm:$0xff]
    %v2792 = vld [vmem:[%s2766 + $0xc8] sm:$0xff]
    %v2793 = vld [vmem:[%s2766 + $0xd0] sm:$0xff]
    %v2794 = vld [vmem:[%s2766 + $0xd8] sm:$0xff]
    %v2795 = vld [vmem:[%s2766 + $0xe0] sm:$0xff]
    %v2796 = vld [vmem:[%s2766 + $0xe8] sm:$0xff]
    %v2797 = vld [vmem:[%s2766 + $0xf0] sm:$0xff]
    %v2798 = vld [vmem:[%s2766 + $0xf8] sm:$0xff]
    %v2799 = vld [vmem:[%s2766 + $0x100] sm:$0xff]
    %v2800 = vld [vmem:[%s2766 + $0x108] sm:$0xff]
    %v2801 = vld [vmem:[%s2766 + $0x110] sm:$0xff]
    %v2802 = vld [vmem:[%s2766 + $0x118] sm:$0xff]
    %v2803 = vld [vmem:[%s2766 + $0x120] sm:$0xff]
    %v2804 = vld [vmem:[%s2766 + $0x128] sm:$0xff]
    %v2805 = vld [vmem:[%s2766 + $0x130] sm:$0xff]
    %v2806 = vld [vmem:[%s2766 + $0x138] sm:$0xff]
    %v2807 = vld [vmem:[%s2766 + $0x140] sm:$0xff]
    %v2808 = vld [vmem:[%s2766 + $0x148] sm:$0xff]
    %v2809 = vld [vmem:[%s2766 + $0x150] sm:$0xff]
    %v2810 = vld [vmem:[%s2766 + $0x158] sm:$0xff]
    %v2811 = vld [vmem:[%s2766 + $0x160] sm:$0xff]
    %v2812 = vld [vmem:[%s2766 + $0x168] sm:$0xff]
    %v2813 = vld [vmem:[%s2766 + $0x170] sm:$0xff]
    %v2814 = vld [vmem:[%s2766 + $0x178] sm:$0xff]
    %v2815 = vld [vmem:[%s2766 + $0x180] sm:$0xff]
    %v2816 = vld [vmem:[%s2766 + $0x188] sm:$0xff]
    %v2817 = vld [vmem:[%s2766 + $0x190] sm:$0xff]
    %v2818 = vld [vmem:[%s2766 + $0x198] sm:$0xff]
    %v2819 = vld [vmem:[%s2766 + $0x1a0] sm:$0xff]
    %v2820 = vld [vmem:[%s2766 + $0x1a8] sm:$0xff]
    %v2821 = vld [vmem:[%s2766 + $0x1b0] sm:$0xff]
    %v2822 = vld [vmem:[%s2766 + $0x1b8] sm:$0xff]
    %v2823 = vld [vmem:[%s2766 + $0x1c0] sm:$0xff]
    %v2824 = vld [vmem:[%s2766 + $0x1c8] sm:$0xff]
    %v2825 = vld [vmem:[%s2766 + $0x1d0] sm:$0xff]
    %v2826 = vld [vmem:[%s2766 + $0x1d8] sm:$0xff]
    %v2827 = vld [vmem:[%s2766 + $0x1e0] sm:$0xff]
    %v2828 = vld [vmem:[%s2766 + $0x1e8] sm:$0xff]
    %v2829 = vld [vmem:[%s2766 + $0x1f0] sm:$0xff]
    %v2830 = vld [vmem:[%s2766 + $0x1f8] sm:$0xff]
    %s2831 = scalar_lea.vmem [#allocation7], 240
    %v2832 = vld [vmem:[%s2831] sm:$0xff]
    %v2833 = vld [vmem:[%s2831 + $0x8] sm:$0xff]
    %v2834 = vlaneseq
    %v2835 = vshrl.u32 %v2834, 7
    %v2836 = vsub.s32 0, %v2835
    %v2837 = vrot.slane %v2832, %v2836
    %v2838 = vlaneseq
    %v2839 = vshrl.u32 %v2838, 7
    %v2840 = vsub.s32 0, %v2839
    %v2841 = vrot.slane %v2833, %v2840
    %2842 = vmatprep.subr.mxu0 %v2768
    %2843 = vmatpush1.msra.mxu0 %v2767
    %2844 = vmatprep.subr.mxu0 %v2770
    %2845 = vmatpush1.msra.mxu0 %v2769
    %2846 = vmatprep.subr.mxu0 %v2772
    %2847 = vmatpush1.msra.mxu0 %v2771
    %2848 = vmatprep.subr.mxu0 %v2774
    %2849 = vmatpush1.msra.mxu0 %v2773
    %2850 = vmatprep.subr.mxu0 %v2776
    %2851 = vmatpush1.msra.mxu0 %v2775
    %2852 = vmatprep.subr.mxu0 %v2778
    %2853 = vmatpush1.msra.mxu0 %v2777
    %2854 = vmatprep.subr.mxu0 %v2780
    %2855 = vmatpush1.msra.mxu0 %v2779
    %2856 = vmatprep.subr.mxu0 %v2782
    %2857 = vmatpush1.msra.mxu0 %v2781
    %2858 = vmatprep.subr.mxu0 %v2784
    %2859 = vmatpush1.msra.mxu0 %v2783
    %2860 = vmatprep.subr.mxu0 %v2786
    %2861 = vmatpush1.msra.mxu0 %v2785
    %2862 = vmatprep.subr.mxu0 %v2788
    %2863 = vmatpush1.msra.mxu0 %v2787
    %2864 = vmatprep.subr.mxu0 %v2790
    %2865 = vmatpush1.msra.mxu0 %v2789
    %2866 = vmatprep.subr.mxu0 %v2792
    %2867 = vmatpush1.msra.mxu0 %v2791
    %2868 = vmatprep.subr.mxu0 %v2794
    %2869 = vmatpush1.msra.mxu0 %v2793
    %2870 = vmatprep.subr.mxu0 %v2796
    %2871 = vmatpush1.msra.mxu0 %v2795
    %2872 = vmatprep.subr.mxu0 %v2798
    %2873 = vmatpush1.msra.mxu0 %v2797
    %2874 = vmatprep.subr.mxu0 %v2800
    %2875 = vmatpush1.msra.mxu0 %v2799
    %2876 = vmatprep.subr.mxu0 %v2802
    %2877 = vmatpush1.msra.mxu0 %v2801
    %2878 = vmatprep.subr.mxu0 %v2804
    %2879 = vmatpush1.msra.mxu0 %v2803
    %2880 = vmatprep.subr.mxu0 %v2806
    %2881 = vmatpush1.msra.mxu0 %v2805
    %2882 = vmatprep.subr.mxu0 %v2808
    %2883 = vmatpush1.msra.mxu0 %v2807
    %2884 = vmatprep.subr.mxu0 %v2810
    %2885 = vmatpush1.msra.mxu0 %v2809
    %2886 = vmatprep.subr.mxu0 %v2812
    %2887 = vmatpush1.msra.mxu0 %v2811
    %2888 = vmatprep.subr.mxu0 %v2814
    %2889 = vmatpush1.msra.mxu0 %v2813
    %2890 = vmatprep.subr.mxu0 %v2816
    %2891 = vmatpush1.msra.mxu0 %v2815
    %2892 = vmatprep.subr.mxu0 %v2818
    %2893 = vmatpush1.msra.mxu0 %v2817
    %2894 = vmatprep.subr.mxu0 %v2820
    %2895 = vmatpush1.msra.mxu0 %v2819
    %2896 = vmatprep.subr.mxu0 %v2822
    %2897 = vmatpush1.msra.mxu0 %v2821
    %2898 = vmatprep.subr.mxu0 %v2824
    %2899 = vmatpush1.msra.mxu0 %v2823
    %2900 = vmatprep.subr.mxu0 %v2826
    %2901 = vmatpush1.msra.mxu0 %v2825
    %2902 = vmatprep.subr.mxu0 %v2828
    %2903 = vmatpush1.msra.mxu0 %v2827
    %2904 = vmatprep.subr.mxu0 %v2830
    %2905 = vmatpush1.msra.mxu0 %v2829
    %2906 = vmatprep.mubr.f32.mxu0 %v2765
    %2907 = vmatmul.mubr.f32.gmra.mrb[0].mxu0 %v2764
    %v2908 = vpop.f32.mrb[0].mxu0
    %v2909 = vadd.f32 %v2837, %v2908
    %v2910 = vpop.f32.mrb[0].mxu0
    %v2911 = vadd.f32 %v2841, %v2910
    %2912 = vdwg.mxu0
    %v2913 = vtanh.pop %v2909
    %v2914 = vtanh.pop %v2911
    %2915 = vst [vmem:[#allocation8] sm:$0xff] %v2913
    %2916 = vst [vmem:[#allocation8 + $0x8] sm:$0xff] %v2914
    // Predicated region
    $region26: #{tpu_custom_call.1} parent=1 // pred_check
      _
    $region27: #{tpu_custom_call.1} parent=1 // pred_check_branch
      %2918 = sbr.rel (0) target = $region29
    $region28: #{tpu_custom_call.1} parent=1 // pred_region
      %s2920 = ssub.s32 256, 256
      %2921 = vsyncadd [#allocation4], %s2920
      %s2923 = sshll.u32 [#allocation8], 4
      %s2924 = int_to_ptr.vmem [resolvable:$true] %s2923
      %2926 = dma.vmem_to_hbm [thread:$0]  %s2924, 256, %s3, [#allocation4]
    $region29: #{tpu_custom_call.1} parent=1 // pred_fallthru
      _
    // Predicated region
    $region30: #{tpu_custom_call.1} parent=1 // pred_check
      _
    $region31: #{tpu_custom_call.1} parent=1 // pred_check_branch
      %2928 = sbr.rel (0) target = $region33
    $region32: #{tpu_custom_call.1} parent=1 // pred_region
      %2929 = dma.done [#allocation4], 256
    $region33: #{tpu_custom_call.1} parent=1 // pred_fallthru
      _
    %2930 = vsyncpa [#allocation3], 1
    %2931 = vsyncpa [#allocation6], 1
    %2932 = vsyncpa [#allocation4], 1

</llo_original>
